<compile_context>
chip_gen: v6e
topology: v6e:2x2x1
jax: 0.10.0
libtpu: 0.0.40
codegen_flags: <defaults>
</compile_context>

<pallas_src>
import functools

import jax
import jax.numpy as jnp
from jax.experimental import pallas as pl
from jax.experimental.pallas import tpu as pltpu


def _decoder_kernel(
    # per-step data
    g1pre_ref,                                   # (1, B, 4D) bf16: emb/glob/bias part of LSTM1 gates
    # time-invariant data
    enc_ref,                                     # (B, P, E)  bf16
    att1p_ref, att1cp_ref, imgf_ref,             # precomputed encoder projections (bf16)
    dl_ref, h0_ref, c0_ref,
    # fused h-dependent weight [w_dec_att | w_dec_att_c | w_hh1]  (D, A+AC+4D)
    w_h_ref, b_da_ref,
    # spatial attention full_att weight (1,1,A); att_div
    w_fa_ref, w_ad_ref, b_ad_ref,
    # channel attention
    b_dac_ref, w_fac_ref,                        # w_fac pre-broadcast to (1, P, AC)
    # fused h2-dependent weight [w_ih1[h2 rows] | w_hh2]  (D, 8D)
    w_h2_ref,
    # lstm2 input-side split weights + bias
    w_i2awce_ref, w_i2awe_ref, w_i2h_ref, b2_ref,
    # output: fused lane-dense slab [h2 | alpha | alpha_c | pad]
    out_ref,
    # scratch (persists across grid steps)
    h_ref, c_ref, h2_ref, c2_ref,
    *, B, P, E, A, AC, D, PAD,
):
    t = pl.program_id(0)

    @pl.when(t == 0)
    def _():
        h_ref[...] = h0_ref[...]
        c_ref[...] = c0_ref[...]
        h2_ref[...] = h0_ref[...]
        c2_ref[...] = c0_ref[...]

    tt = t.astype(jnp.float32)
    maskf = (dl_ref[...] > tt).astype(jnp.float32)          # (B, 1) rows < batch_size_t
    bt = jnp.sum(maskf)                                     # scalar batch_size_t

    h = h_ref[...]                                          # (B, D) f32
    h2 = h2_ref[...]                                        # (B, D) f32
    h_b = h.astype(jnp.bfloat16)
    h2_b = h2.astype(jnp.bfloat16)

    # ---- fused state-dependent matmuls (one per state vector) ----
    hproj = jnp.dot(h_b, w_h_ref[...], preferred_element_type=jnp.float32)    # (B, A+AC+4D)
    h2proj = jnp.dot(h2_b, w_h2_ref[...], preferred_element_type=jnp.float32)  # (B, 8D)
    att2 = hproj[:, :A] + b_da_ref[...]                      # (B, A)
    att2c = hproj[:, A:A + AC] + b_dac_ref[...]              # (B, AC)
    g1_hh1 = hproj[:, A + AC:]                               # (B, 4D)
    g1_h2 = h2proj[:, :4 * D]
    g2_hh2 = h2proj[:, 4 * D:]

    # ---------------- spatial attention (Attention) ----------------
    # TODO(synk): dropout layers are treated as identity (inference mode).
    act = jnp.maximum(att1p_ref[...] + att2[:, None, :], 0.0)          # (B, P, A) f32
    # full_att bias is a constant shift of the logits -> cancels in softmax.
    att = jnp.sum(act * w_fa_ref[...], axis=2)                         # (B, P)
    att = att - jnp.max(att, axis=1, keepdims=True)
    ea = jnp.exp(att)
    alpha = ea * pl.reciprocal(jnp.sum(ea, axis=1, keepdims=True), approx=True)
    awe_e = jnp.sum(enc_ref[...] * alpha[:, :, None], axis=1)          # (B, E)
    awe = (jnp.dot(awe_e.astype(jnp.bfloat16), w_ad_ref[...],
                   preferred_element_type=jnp.float32) + b_ad_ref[...])  # (B, A)

    # unbiased std over the first bt rows (torch default)
    n1 = bt * A
    mean1 = jnp.sum(awe * maskf) / n1
    var1 = jnp.sum(maskf * (awe - mean1) ** 2) / (n1 - 1.0)
    region_std = jnp.sqrt(var1)

    # ---------------- channel attention (AttentionChannel) ----------------
    actc = jnp.maximum(att1cp_ref[...] + att2c[:, None, :], 0.0)       # (B, P, AC)
    attc = jnp.sum(actc * w_fac_ref[...], axis=1)                      # (B, AC)
    attc = attc - jnp.max(attc, axis=1, keepdims=True)
    ec = jnp.exp(attc)
    alpha_c = ec * pl.reciprocal(jnp.sum(ec, axis=1, keepdims=True), approx=True)
    awce = jnp.sum(imgf_ref[...] * alpha_c[:, None, :], axis=2)        # (B, P)

    n2 = bt * P
    mean2 = jnp.sum(awce * maskf) / n2
    var2 = jnp.sum(maskf * (awce - mean2) ** 2) / (n2 - 1.0)
    chan_std = jnp.sqrt(var2)
    rc = region_std / (region_std + chan_std)               # region_coff (scalar)

    # ---------------- LSTM cell 1 (decode_step) ----------------
    g1 = g1pre_ref[0] + g1_h2 + g1_hh1
    i1 = jax.nn.sigmoid(g1[:, 0:D])
    f1 = jax.nn.sigmoid(g1[:, D:2 * D])
    gg1 = jnp.tanh(g1[:, 2 * D:3 * D])
    o1 = jax.nn.sigmoid(g1[:, 3 * D:4 * D])
    c_new = f1 * c_ref[...] + i1 * gg1
    h_new = o1 * jnp.tanh(c_new)
    h_ref[...] = h_new
    c_ref[...] = c_new

    # ---------------- LSTM cell 2 (decode_step2) ----------------
    # Scale the small (B,P)/(B,A) activations by region_coff BEFORE the matmuls.
    awce_s = ((1.0 - rc) * awce).astype(jnp.bfloat16)
    awe_s = (rc * awe).astype(jnp.bfloat16)
    g2 = (jnp.dot(awce_s, w_i2awce_ref[...], preferred_element_type=jnp.float32)
          + jnp.dot(awe_s, w_i2awe_ref[...], preferred_element_type=jnp.float32)
          + jnp.dot(h_new.astype(jnp.bfloat16), w_i2h_ref[...],
                    preferred_element_type=jnp.float32)
          + g2_hh2 + b2_ref[...])
    i2 = jax.nn.sigmoid(g2[:, 0:D])
    f2 = jax.nn.sigmoid(g2[:, D:2 * D])
    gg2 = jnp.tanh(g2[:, 2 * D:3 * D])
    o2 = jax.nn.sigmoid(g2[:, 3 * D:4 * D])
    c2_new = f2 * c2_ref[...] + i2 * gg2
    h2_new = o2 * jnp.tanh(c2_new)
    h2_ref[...] = h2_new
    c2_ref[...] = c2_new

    # fused lane-dense writeback slab: [h2 | alpha | alpha_c | pad]
    # (vocab projection is deferred to a batched matmul outside the recurrence)
    out_ref[0, :, 0:D] = h_new * 0.0 + h2_new                # store h2
    out_ref[0, :, D:D + P] = alpha * maskf                   # rows >= batch_size_t stay zero
    out_ref[0, :, D + P:D + P + AC] = alpha_c * maskf
    if PAD > 0:
        out_ref[0, :, D + P + AC:] = jnp.zeros((B, PAD), jnp.float32)


def _invariant_spec(arr, mode):
    nd = arr.ndim
    idx = lambda t, _nd=nd: (0,) * _nd
    if mode is None:
        return pl.BlockSpec(arr.shape, idx)
    return pl.BlockSpec(arr.shape, idx, pipeline_mode=mode)


def decoder_forward(params, encoder_out, encoded_captions, caption_lengths):
    """Mirrors DecoderWithAttention.forward (eval-mode dropout)."""
    bf = jnp.bfloat16
    B = encoder_out.shape[0]
    E = encoder_out.shape[-1]
    enc = encoder_out.reshape(B, -1, E).astype(jnp.float32)  # (B, P, E)
    P = enc.shape[1]
    A = params["w_att_div"].shape[1]
    AC = params["w_enc_att_c"].shape[1]
    D = params["w_init_h"].shape[1]
    Em = params["embedding"].shape[1]
    V = params["w_fc"].shape[1]

    # feature_div(mean over pixels)
    glob = jnp.mean(enc, axis=1) @ params["w_feature_div"] + params["b_feature_div"]  # (B, A)

    # sort by caption length, descending
    cap_len = caption_lengths.squeeze(1)
    sort_ind = jnp.argsort(-cap_len)
    cap_len = cap_len[sort_ind]
    enc = enc[sort_ind]
    encoded_captions = encoded_captions[sort_ind]
    glob = glob[sort_ind]

    # embedding lookup (glue)
    emb = params["embedding"][encoded_captions]              # (B, L, Em)

    # init_hidden_state (used for both (h,c) and (h2,c2))
    mean_enc = jnp.mean(enc, axis=1)
    h0 = mean_enc @ params["w_init_h"] + params["b_init_h"]
    c0 = mean_enc @ params["w_init_c"] + params["b_init_c"]

    decode_lengths = cap_len - 1
    # TODO(synk): static grid extent forces host concretization of caption lengths.
    T = int(jnp.max(decode_lengths))

    # -------- hoisted, time-invariant encoder projections (one fused bf16 matmul) --------
    enc2 = enc.reshape(B * P, E).astype(bf)
    w_enc_all = jnp.concatenate(
        [params["w_enc_att"], params["w_enc_att_c"], params["w_out_att_c"]], axis=1).astype(bf)
    b_enc_all = jnp.concatenate(
        [params["b_enc_att"], params["b_enc_att_c"], params["b_out_att_c"]], axis=1)
    proj = jnp.dot(enc2, w_enc_all, preferred_element_type=jnp.float32) + b_enc_all
    # NOTE(v5e): keep these four resident tensors f32 there (no bf16 VALU);
    # bf16 residency targets v6e/v7x VMEM + bf16 VPU.
    att1p = proj[:, :A].reshape(B, P, A).astype(bf)
    att1cp = proj[:, A:A + AC].reshape(B, P, AC).astype(bf)
    imgfp = proj[:, A + AC:].reshape(B, P, AC).astype(bf)
    enc_res = enc.astype(bf)

    # -------- hoisted LSTM1 input-side projections (emb over all T, glob once) --------
    emb_t = jnp.transpose(emb[:, :T, :], (1, 0, 2))                       # (T, B, Em)
    w_ih1 = params["w_ih1"]
    w_ih1_e = w_ih1[:Em]
    w_ih1_h2 = w_ih1[Em:Em + D]
    w_ih1_g = w_ih1[Em + D:]
    g1_pre = (jnp.dot(emb_t.reshape(T * B, Em).astype(bf), w_ih1_e.astype(bf),
                      preferred_element_type=jnp.float32).reshape(T, B, 4 * D)
              + (jnp.dot(glob.astype(bf), w_ih1_g.astype(bf),
                         preferred_element_type=jnp.float32)
                 + params["b_1"])[None, :, :]).astype(bf)                 # streamed as bf16

    # -------- pre-fused / pre-split state-dependent weights --------
    w_h_fused = jnp.concatenate(
        [params["w_dec_att"], params["w_dec_att_c"], params["w_hh1"]], axis=1).astype(bf)
    w_h2_fused = jnp.concatenate([w_ih1_h2, params["w_hh2"]], axis=1).astype(bf)
    w_ih2 = params["w_ih2"]
    w_ih2_awce = w_ih2[:P].astype(bf)
    w_ih2_awe = w_ih2[P:P + A].astype(bf)
    w_ih2_h = w_ih2[P + A:].astype(bf)

    # full_att_c weight pre-broadcast to lane-dense (1, P, AC); the full_att /
    # full_att_c biases cancel in the softmax and are dropped.
    w_fac_b = jnp.broadcast_to(params["w_full_att_c"].reshape(1, P, 1), (1, P, AC))
    w_fac_b = jnp.asarray(w_fac_b, jnp.float32)

    dl = decode_lengths.astype(jnp.float32).reshape(B, 1)

    Wtot = D + P + AC
    Wp = ((Wtot + 127) // 128) * 128
    PAD = Wp - Wtot

    inputs = [
        g1_pre,                                              # (T, B, 4D) per-step slab
        enc_res, att1p, att1cp, imgfp,
        dl, h0.astype(jnp.float32), c0.astype(jnp.float32),
        w_h_fused, params["b_dec_att"],
        params["w_full_att"].reshape(1, 1, A).astype(jnp.float32),
        params["w_att_div"].astype(bf), params["b_att_div"],
        params["b_dec_att_c"], w_fac_b,
        w_h2_fused,
        w_ih2_awce, w_ih2_awe, w_ih2_h, params["b_2"],
    ]

    kernel = functools.partial(_decoder_kernel, B=B, P=P, E=E, A=A, AC=AC, D=D, PAD=PAD)

    # VMEM budget: derive from hardware minus headroom (v7x: ~48 MiB, v6e: ~96 MiB).
    try:
        cap = pltpu.get_tpu_info().vmem_capacity_bytes
        vmem_limit = min(int(cap * 3 // 4), 96 * 1024 * 1024)
    except Exception:
        vmem_limit = 64 * 1024 * 1024

    def _run(use_buffered):
        single = pl.Buffered(1) if use_buffered else None        # invariant blocks: 1 buffer
        stream = pl.Buffered(3) if use_buffered else None        # streamed g1_pre: deeper
        if stream is None:
            g1_spec = pl.BlockSpec((1, B, 4 * D), lambda t: (t, 0, 0))
        else:
            g1_spec = pl.BlockSpec((1, B, 4 * D), lambda t: (t, 0, 0), pipeline_mode=stream)
        in_specs = [g1_spec] + [_invariant_spec(a, single) for a in inputs[1:]]
        out_specs = pl.BlockSpec((1, B, Wp), lambda t: (t, 0, 0))
        return pl.pallas_call(
            kernel,
            out_shape=jax.ShapeDtypeStruct((T, B, Wp), jnp.float32),
            grid_spec=pltpu.PrefetchScalarGridSpec(
                num_scalar_prefetch=0,
                grid=(T,),
                in_specs=in_specs,
                out_specs=out_specs,
                scratch_shapes=[pltpu.VMEM((B, D), jnp.float32)] * 4,
            ),
            compiler_params=pltpu.CompilerParams(
                dimension_semantics=("arbitrary",),
                vmem_limit_bytes=vmem_limit),
        )(*inputs)

    try:
        slab = _run(True)
    except Exception:
        # TODO(synk): pl.Buffered pipeline_mode unavailable on this jax build;
        # fall back to default double-buffered BlockSpecs.
        slab = _run(False)

    # -------- split the fused output slab --------
    h2_tbd = slab[:, :, :D]                                   # (T, B, D)
    alphas = jnp.transpose(slab[:, :, D:D + P], (1, 0, 2))    # (B, T, P)
    alphas_chan = jnp.transpose(slab[:, :, D + P:D + P + AC], (1, 0, 2))  # (B, T, AC)

    # -------- deferred vocab projection: transpose D-wide h2 first, then one bf16 matmul --------
    h2_btd = jnp.transpose(h2_tbd, (1, 0, 2))                 # (B, T, D)
    preds = (jnp.dot(h2_btd.reshape(B * T, D).astype(bf), params["w_fc"].astype(bf),
                     preferred_element_type=jnp.float32)
             + params["b_fc"]).reshape(B, T, V)
    step_mask = (decode_lengths[:, None] >
                 jnp.arange(T, dtype=decode_lengths.dtype)[None, :]).astype(jnp.float32)
    predictions = preds * step_mask[:, :, None]               # rows >= batch_size_t are zero

    return predictions, encoded_captions, decode_lengths, alphas, alphas_chan, sort_ind


def init_params(key, *, E, A, AC, P, Em, D, V):
    ks = iter(jax.random.split(key, 64))

    def lin(fan_in, fan_out, w_shape=None, b_shape=None):
        bound = 1.0 / float(fan_in) ** 0.5
        w = jax.random.uniform(next(ks), w_shape or (fan_in, fan_out),
                               jnp.float32, -bound, bound)
        b = jax.random.uniform(next(ks), b_shape or (1, fan_out),
                               jnp.float32, -bound, bound)
        return w, b

    p = {}
    # Attention
    p["w_enc_att"], p["b_enc_att"] = lin(E, A)
    p["w_dec_att"], p["b_dec_att"] = lin(D, A)
    p["w_full_att"], p["b_full_att"] = lin(A, 1, w_shape=(1, A), b_shape=(1, 1))
    # AttentionChannel
    p["w_enc_att_c"], p["b_enc_att_c"] = lin(E, AC)
    p["w_dec_att_c"], p["b_dec_att_c"] = lin(D, AC)
    p["w_out_att_c"], p["b_out_att_c"] = lin(E, AC)
    p["w_full_att_c"], p["b_full_att_c"] = lin(P, 1, w_shape=(P, 1), b_shape=(1, 1))
    # decoder linears
    p["w_init_h"], p["b_init_h"] = lin(E, D)
    p["w_init_c"], p["b_init_c"] = lin(E, D)
    p["w_att_div"], p["b_att_div"] = lin(E, A)
    p["w_feature_div"], p["b_feature_div"] = lin(E, A)
    # embedding / fc (module's init_weights)
    p["embedding"] = jax.random.uniform(next(ks), (V, Em), jnp.float32, -0.1, 0.1)
    p["w_fc"] = jax.random.uniform(next(ks), (D, V), jnp.float32, -0.1, 0.1)
    p["b_fc"] = jnp.zeros((1, V), jnp.float32)
    # LSTMCell 1: input = embed + (h2: decoder_dim==embed_dim) + attention
    in1 = Em + D + A
    bnd = 1.0 / float(D) ** 0.5
    p["w_ih1"] = jax.random.uniform(next(ks), (in1, 4 * D), jnp.float32, -bnd, bnd)
    p["w_hh1"] = jax.random.uniform(next(ks), (D, 4 * D), jnp.float32, -bnd, bnd)
    p["b_1"] = (jax.random.uniform(next(ks), (1, 4 * D), jnp.float32, -bnd, bnd)
                + jax.random.uniform(next(ks), (1, 4 * D), jnp.float32, -bnd, bnd))
    # LSTMCell 2: input = pixels + attention + decoder (concat order used in forward)
    in2 = P + A + D
    p["w_ih2"] = jax.random.uniform(next(ks), (in2, 4 * D), jnp.float32, -bnd, bnd)
    p["w_hh2"] = jax.random.uniform(next(ks), (D, 4 * D), jnp.float32, -bnd, bnd)
    p["b_2"] = (jax.random.uniform(next(ks), (1, 4 * D), jnp.float32, -bnd, bnd)
                + jax.random.uniform(next(ks), (1, 4 * D), jnp.float32, -bnd, bnd))
    return p


if __name__ == "__main__":
    # Small, self-consistent shapes (attention_chan_dim == attention_dim, as the
    # reference's alphas_chan buffer implicitly requires; embed_dim == decoder_dim,
    # as the reference's decode_step input size implicitly requires).
    B, enc_size, E = 4, 4, 32
    A = AC = 32
    P = enc_size * enc_size        # pixels_dim = 16
    Em = D = 32
    V = 64

    key = jax.random.PRNGKey(0)
    kp, k1, k2 = jax.random.split(key, 3)
    params = init_params(kp, E=E, A=A, AC=AC, P=P, Em=Em, D=D, V=V)

    encoder_out = jax.random.normal(k1, (B, enc_size, enc_size, E), jnp.float32)
    caption_lengths = jnp.array([[5], [7], [4], [6]], dtype=jnp.int32)   # (B, 1)
    L = 7
    encoded_captions = jax.random.randint(k2, (B, L), 0, V, dtype=jnp.int32)

    outs = decoder_forward(params, encoder_out, encoded_captions, caption_lengths)
    jax.block_until_ready(outs)
    preds, caps_sorted, dec_lens, alphas, alphas_chan, sort_ind = outs
    T = int(jnp.max(dec_lens))
    assert preds.shape == (B, T, V)
    assert alphas.shape == (B, T, P)
    assert alphas_chan.shape == (B, T, AC)
    assert bool(jnp.all(jnp.isfinite(preds)))
    assert bool(jnp.all(jnp.isfinite(alphas)))
    print("KERNEL_OK")
</pallas_src>

<mosaic_0001>
module attributes {stable_mosaic.version = 11 : i64} {
  func.func @_decoder_kernel(%arg0: i32, %arg1: memref<1x4x128xbf16, #tpu.memory_space<vmem>>, %arg2: memref<4x16x32xbf16, #tpu.memory_space<vmem>>, %arg3: memref<4x16x32xbf16, #tpu.memory_space<vmem>>, %arg4: memref<4x16x32xbf16, #tpu.memory_space<vmem>>, %arg5: memref<4x16x32xbf16, #tpu.memory_space<vmem>>, %arg6: memref<4x1xf32, #tpu.memory_space<vmem>>, %arg7: memref<4x32xf32, #tpu.memory_space<vmem>>, %arg8: memref<4x32xf32, #tpu.memory_space<vmem>>, %arg9: memref<32x192xbf16, #tpu.memory_space<vmem>>, %arg10: memref<1x32xf32, #tpu.memory_space<vmem>>, %arg11: memref<1x1x32xf32, #tpu.memory_space<vmem>>, %arg12: memref<32x32xbf16, #tpu.memory_space<vmem>>, %arg13: memref<1x32xf32, #tpu.memory_space<vmem>>, %arg14: memref<1x32xf32, #tpu.memory_space<vmem>>, %arg15: memref<1x16x32xf32, #tpu.memory_space<vmem>>, %arg16: memref<32x256xbf16, #tpu.memory_space<vmem>>, %arg17: memref<16x128xbf16, #tpu.memory_space<vmem>>, %arg18: memref<32x128xbf16, #tpu.memory_space<vmem>>, %arg19: memref<32x128xbf16, #tpu.memory_space<vmem>>, %arg20: memref<1x128xf32, #tpu.memory_space<vmem>>, %arg21: memref<1x4x128xf32, #tpu.memory_space<vmem>>, %arg22: memref<4x32xf32, #tpu.memory_space<vmem>>, %arg23: memref<4x32xf32, #tpu.memory_space<vmem>>, %arg24: memref<4x32xf32, #tpu.memory_space<vmem>>, %arg25: memref<4x32xf32, #tpu.memory_space<vmem>>) attributes {dimension_semantics = [#tpu.dimension_semantics<arbitrary>], iteration_bounds = array<i64: 6>, scalar_prefetch = 0 : i64, scratch_operands = 4 : i64, tpu.core_type = #tpu.core_type<tc>, window_params = [{transform_indices = @transform_0, window_bounds = array<i64: 1, 4, 128>}, {pipeline_mode = #tpu.pipeline_mode<synchronous>, transform_indices = @transform_1, window_bounds = array<i64: 4, 16, 32>}, {pipeline_mode = #tpu.pipeline_mode<synchronous>, transform_indices = @transform_2, window_bounds = array<i64: 4, 16, 32>}, {pipeline_mode = #tpu.pipeline_mode<synchronous>, transform_indices = @transform_3, window_bounds = array<i64: 4, 16, 32>}, {pipeline_mode = #tpu.pipeline_mode<synchronous>, transform_indices = @transform_4, window_bounds = array<i64: 4, 16, 32>}, {pipeline_mode = #tpu.pipeline_mode<synchronous>, transform_indices = @transform_5, window_bounds = array<i64: 4, 1>}, {pipeline_mode = #tpu.pipeline_mode<synchronous>, transform_indices = @transform_6, window_bounds = array<i64: 4, 32>}, {pipeline_mode = #tpu.pipeline_mode<synchronous>, transform_indices = @transform_7, window_bounds = array<i64: 4, 32>}, {pipeline_mode = #tpu.pipeline_mode<synchronous>, transform_indices = @transform_8, window_bounds = array<i64: 32, 192>}, {pipeline_mode = #tpu.pipeline_mode<synchronous>, transform_indices = @transform_9, window_bounds = array<i64: 1, 32>}, {pipeline_mode = #tpu.pipeline_mode<synchronous>, transform_indices = @transform_10, window_bounds = array<i64: 1, 1, 32>}, {pipeline_mode = #tpu.pipeline_mode<synchronous>, transform_indices = @transform_11, window_bounds = array<i64: 32, 32>}, {pipeline_mode = #tpu.pipeline_mode<synchronous>, transform_indices = @transform_12, window_bounds = array<i64: 1, 32>}, {pipeline_mode = #tpu.pipeline_mode<synchronous>, transform_indices = @transform_13, window_bounds = array<i64: 1, 32>}, {pipeline_mode = #tpu.pipeline_mode<synchronous>, transform_indices = @transform_14, window_bounds = array<i64: 1, 16, 32>}, {pipeline_mode = #tpu.pipeline_mode<synchronous>, transform_indices = @transform_15, window_bounds = array<i64: 32, 256>}, {pipeline_mode = #tpu.pipeline_mode<synchronous>, transform_indices = @transform_16, window_bounds = array<i64: 16, 128>}, {pipeline_mode = #tpu.pipeline_mode<synchronous>, transform_indices = @transform_17, window_bounds = array<i64: 32, 128>}, {pipeline_mode = #tpu.pipeline_mode<synchronous>, transform_indices = @transform_18, window_bounds = array<i64: 32, 128>}, {pipeline_mode = #tpu.pipeline_mode<synchronous>, transform_indices = @transform_19, window_bounds = array<i64: 1, 128>}, {transform_indices = @transform_20, window_bounds = array<i64: 1, 4, 128>}]} {
    %c0_i32 = arith.constant 0 : i32
    %0 = arith.cmpi eq, %arg0, %c0_i32 : i32
    %1 = arith.extui %0 : i1 to i32
    %c0_i32_0 = arith.constant 0 : i32
    %2 = arith.cmpi ne, %1, %c0_i32_0 : i32
    scf.if %2 {
      %c0_101 = arith.constant 0 : index
      %c0_102 = arith.constant 0 : index
      %235 = vector.load %arg7[%c0_101, %c0_102] : memref<4x32xf32, #tpu.memory_space<vmem>>, vector<4x32xf32>
      %c0_103 = arith.constant 0 : index
      %c0_104 = arith.constant 0 : index
      %236 = vector.load %arg22[%c0_103, %c0_104] : memref<4x32xf32, #tpu.memory_space<vmem>>, vector<4x32xf32>
      tpu.vector_store %arg22[%c0_103, %c0_104], %235 {strides = array<i32>} : memref<4x32xf32, #tpu.memory_space<vmem>>, vector<4x32xf32>,
      %c0_105 = arith.constant 0 : index
      %c0_106 = arith.constant 0 : index
      %237 = vector.load %arg8[%c0_105, %c0_106] : memref<4x32xf32, #tpu.memory_space<vmem>>, vector<4x32xf32>
      %c0_107 = arith.constant 0 : index
      %c0_108 = arith.constant 0 : index
      %238 = vector.load %arg23[%c0_107, %c0_108] : memref<4x32xf32, #tpu.memory_space<vmem>>, vector<4x32xf32>
      tpu.vector_store %arg23[%c0_107, %c0_108], %237 {strides = array<i32>} : memref<4x32xf32, #tpu.memory_space<vmem>>, vector<4x32xf32>,
      %c0_109 = arith.constant 0 : index
      %c0_110 = arith.constant 0 : index
      %239 = vector.load %arg7[%c0_109, %c0_110] : memref<4x32xf32, #tpu.memory_space<vmem>>, vector<4x32xf32>
      %c0_111 = arith.constant 0 : index
      %c0_112 = arith.constant 0 : index
      %240 = vector.load %arg24[%c0_111, %c0_112] : memref<4x32xf32, #tpu.memory_space<vmem>>, vector<4x32xf32>
      tpu.vector_store %arg24[%c0_111, %c0_112], %239 {strides = array<i32>} : memref<4x32xf32, #tpu.memory_space<vmem>>, vector<4x32xf32>,
      %c0_113 = arith.constant 0 : index
      %c0_114 = arith.constant 0 : index
      %241 = vector.load %arg8[%c0_113, %c0_114] : memref<4x32xf32, #tpu.memory_space<vmem>>, vector<4x32xf32>
      %c0_115 = arith.constant 0 : index
      %c0_116 = arith.constant 0 : index
      %242 = vector.load %arg25[%c0_115, %c0_116] : memref<4x32xf32, #tpu.memory_space<vmem>>, vector<4x32xf32>
      tpu.vector_store %arg25[%c0_115, %c0_116], %241 {strides = array<i32>} : memref<4x32xf32, #tpu.memory_space<vmem>>, vector<4x32xf32>,
    } else {
    }
    %3 = arith.sitofp %arg0 : i32 to f32
    %c0 = arith.constant 0 : index
    %c0_1 = arith.constant 0 : index
    %4 = vector.load %arg6[%c0, %c0_1] : memref<4x1xf32, #tpu.memory_space<vmem>>, vector<4x1xf32>
    %5 = vector.broadcast %3 : f32 to vector<4x1xf32>
    %6 = arith.cmpf ogt, %4, %5 : vector<4x1xf32>
    %7 = arith.extui %6 : vector<4x1xi1> to vector<4x1xi32>
    %8 = arith.sitofp %7 : vector<4x1xi32> to vector<4x1xf32>
    %9 = vector.shape_cast %8 : vector<4x1xf32> to vector<1x4x1xf32>
    %cst = arith.constant dense<0.000000e+00> : vector<1xf32>
    %10 = vector.multi_reduction <add>, %9, %cst [1, 2] : vector<1x4x1xf32> to vector<1xf32>
    %11 = vector.shape_cast %10 : vector<1xf32> to vector<1x1x1xf32>
    %12 = vector.extract %11[0, 0, 0] : f32 from vector<1x1x1xf32>
    %c0_2 = arith.constant 0 : index
    %c0_3 = arith.constant 0 : index
    %13 = vector.load %arg22[%c0_2, %c0_3] : memref<4x32xf32, #tpu.memory_space<vmem>>, vector<4x32xf32>
    %c0_4 = arith.constant 0 : index
    %c0_5 = arith.constant 0 : index
    %14 = vector.load %arg24[%c0_4, %c0_5] : memref<4x32xf32, #tpu.memory_space<vmem>>, vector<4x32xf32>
    %15 = arith.truncf %13 : vector<4x32xf32> to vector<4x32xbf16>
    %16 = arith.truncf %14 : vector<4x32xf32> to vector<4x32xbf16>
    %c0_6 = arith.constant 0 : index
    %c0_7 = arith.constant 0 : index
    %17 = vector.load %arg9[%c0_6, %c0_7] : memref<32x192xbf16, #tpu.memory_space<vmem>>, vector<32x192xbf16>
    %cst_8 = arith.constant dense<0.000000e+00> : vector<4x192xf32>
    %18 = tpu.matmul %15, %17, %cst_8 {dimension_numbers = #tpu.dot_dimension_numbers<[1], [0], [0], [1], [0, 0, 1, 1], [], []>} : vector<4x32xbf16>, vector<32x192xbf16>, vector<4x192xf32> -> vector<4x192xf32>
    %c0_9 = arith.constant 0 : index
    %c0_10 = arith.constant 0 : index
    %19 = vector.load %arg16[%c0_9, %c0_10] : memref<32x256xbf16, #tpu.memory_space<vmem>>, vector<32x256xbf16>
    %cst_11 = arith.constant dense<0.000000e+00> : vector<4x256xf32>
    %20 = tpu.matmul %16, %19, %cst_11 {dimension_numbers = #tpu.dot_dimension_numbers<[1], [0], [0], [1], [0, 0, 1, 1], [], []>} : vector<4x32xbf16>, vector<32x256xbf16>, vector<4x256xf32> -> vector<4x256xf32>
    %21 = vector.extract_strided_slice %18 {offsets = [0, 0], sizes = [4, 32], strides = [1, 1]} : vector<4x192xf32> to vector<4x32xf32>
    %c0_12 = arith.constant 0 : index
    %c0_13 = arith.constant 0 : index
    %22 = vector.load %arg10[%c0_12, %c0_13] : memref<1x32xf32, #tpu.memory_space<vmem>>, vector<1x32xf32>
    %23 = vector.broadcast %22 : vector<1x32xf32> to vector<4x32xf32>
    %24 = arith.addf %21, %23 : vector<4x32xf32>
    %25 = vector.extract_strided_slice %18 {offsets = [0, 32], sizes = [4, 32], strides = [1, 1]} : vector<4x192xf32> to vector<4x32xf32>
    %c0_14 = arith.constant 0 : index
    %c0_15 = arith.constant 0 : index
    %26 = vector.load %arg14[%c0_14, %c0_15] : memref<1x32xf32, #tpu.memory_space<vmem>>, vector<1x32xf32>
    %27 = vector.broadcast %26 : vector<1x32xf32> to vector<4x32xf32>
    %28 = arith.addf %25, %27 : vector<4x32xf32>
    %29 = vector.extract_strided_slice %18 {offsets = [0, 64], sizes = [4, 128], strides = [1, 1]} : vector<4x192xf32> to vector<4x128xf32>
    %30 = vector.extract_strided_slice %20 {offsets = [0, 0], sizes = [4, 128], strides = [1, 1]} : vector<4x256xf32> to vector<4x128xf32>
    %31 = vector.extract_strided_slice %20 {offsets = [0, 128], sizes = [4, 128], strides = [1, 1]} : vector<4x256xf32> to vector<4x128xf32>
    %c0_16 = arith.constant 0 : index
    %c0_17 = arith.constant 0 : index
    %c0_18 = arith.constant 0 : index
    %32 = vector.load %arg3[%c0_16, %c0_17, %c0_18] : memref<4x16x32xbf16, #tpu.memory_space<vmem>>, vector<4x16x32xbf16>
    %33 = vector.shape_cast %24 : vector<4x32xf32> to vector<4x1x32xf32>
    %34 = arith.extf %32 : vector<4x16x32xbf16> to vector<4x16x32xf32>
    %35 = vector.broadcast %33 : vector<4x1x32xf32> to vector<4x16x32xf32>
    %36 = arith.addf %34, %35 : vector<4x16x32xf32>
    %cst_19 = arith.constant 0.000000e+00 : f32
    %37 = vector.broadcast %cst_19 : f32 to vector<4x16x32xf32>
    %38 = arith.maximumf %36, %37 : vector<4x16x32xf32>
    %c0_20 = arith.constant 0 : index
    %c0_21 = arith.constant 0 : index
    %c0_22 = arith.constant 0 : index
    %39 = vector.load %arg11[%c0_20, %c0_21, %c0_22] : memref<1x1x32xf32, #tpu.memory_space<vmem>>, vector<1x1x32xf32>
    %40 = vector.broadcast %39 : vector<1x1x32xf32> to vector<4x16x32xf32>
    %41 = arith.mulf %38, %40 : vector<4x16x32xf32>
    %cst_23 = arith.constant dense<0.000000e+00> : vector<4x16xf32>
    %42 = vector.multi_reduction <add>, %41, %cst_23 [2] : vector<4x16x32xf32> to vector<4x16xf32>
    %cst_24 = arith.constant dense<0xFF800000> : vector<4xf32>
    %43 = vector.multi_reduction <maximumf>, %42, %cst_24 [1] : vector<4x16xf32> to vector<4xf32>
    %44 = vector.shape_cast %43 : vector<4xf32> to vector<4x1xf32>
    %45 = vector.broadcast %44 : vector<4x1xf32> to vector<4x16xf32>
    %46 = arith.subf %42, %45 : vector<4x16xf32>
    %47 = math.exp %46 : vector<4x16xf32>
    %cst_25 = arith.constant dense<0.000000e+00> : vector<4xf32>
    %48 = vector.multi_reduction <add>, %47, %cst_25 [1] : vector<4x16xf32> to vector<4xf32>
    %49 = vector.shape_cast %48 : vector<4xf32> to vector<4x1xf32>
    %50 = tpu.reciprocal %49 {approx = true} : vector<4x1xf32> -> vector<4x1xf32>
    %51 = vector.broadcast %50 : vector<4x1xf32> to vector<4x16xf32>
    %52 = arith.mulf %47, %51 : vector<4x16xf32>
    %c0_26 = arith.constant 0 : index
    %c0_27 = arith.constant 0 : index
    %c0_28 = arith.constant 0 : index
    %53 = vector.load %arg2[%c0_26, %c0_27, %c0_28] : memref<4x16x32xbf16, #tpu.memory_space<vmem>>, vector<4x16x32xbf16>
    %54 = vector.shape_cast %52 : vector<4x16xf32> to vector<4x16x1xf32>
    %55 = arith.extf %53 : vector<4x16x32xbf16> to vector<4x16x32xf32>
    %56 = vector.broadcast %54 : vector<4x16x1xf32> to vector<4x16x32xf32>
    %57 = arith.mulf %55, %56 : vector<4x16x32xf32>
    %cst_29 = arith.constant dense<0.000000e+00> : vector<4x32xf32>
    %58 = vector.multi_reduction <add>, %57, %cst_29 [1] : vector<4x16x32xf32> to vector<4x32xf32>
    %59 = arith.truncf %58 : vector<4x32xf32> to vector<4x32xbf16>
    %c0_30 = arith.constant 0 : index
    %c0_31 = arith.constant 0 : index
    %60 = vector.load %arg12[%c0_30, %c0_31] : memref<32x32xbf16, #tpu.memory_space<vmem>>, vector<32x32xbf16>
    %cst_32 = arith.constant dense<0.000000e+00> : vector<4x32xf32>
    %61 = tpu.matmul %59, %60, %cst_32 {dimension_numbers = #tpu.dot_dimension_numbers<[1], [0], [0], [1], [0, 0, 1, 1], [], []>} : vector<4x32xbf16>, vector<32x32xbf16>, vector<4x32xf32> -> vector<4x32xf32>
    %c0_33 = arith.constant 0 : index
    %c0_34 = arith.constant 0 : index
    %62 = vector.load %arg13[%c0_33, %c0_34] : memref<1x32xf32, #tpu.memory_space<vmem>>, vector<1x32xf32>
    %63 = vector.broadcast %62 : vector<1x32xf32> to vector<4x32xf32>
    %64 = arith.addf %61, %63 : vector<4x32xf32>
    %cst_35 = arith.constant 3.200000e+01 : f32
    %65 = arith.mulf %12, %cst_35 : f32
    %66 = vector.broadcast %8 : vector<4x1xf32> to vector<4x32xf32>
    %67 = arith.mulf %64, %66 : vector<4x32xf32>
    %68 = vector.shape_cast %67 : vector<4x32xf32> to vector<1x4x32xf32>
    %cst_36 = arith.constant dense<0.000000e+00> : vector<1xf32>
    %69 = vector.multi_reduction <add>, %68, %cst_36 [1, 2] : vector<1x4x32xf32> to vector<1xf32>
    %70 = vector.shape_cast %69 : vector<1xf32> to vector<1x1x1xf32>
    %71 = vector.extract %70[0, 0, 0] : f32 from vector<1x1x1xf32>
    %72 = arith.divf %71, %65 : f32
    %73 = vector.broadcast %72 : f32 to vector<4x32xf32>
    %74 = arith.subf %64, %73 : vector<4x32xf32>
    %75 = arith.mulf %74, %74 : vector<4x32xf32>
    %76 = vector.broadcast %8 : vector<4x1xf32> to vector<4x32xf32>
    %77 = arith.mulf %76, %75 : vector<4x32xf32>
    %78 = vector.shape_cast %77 : vector<4x32xf32> to vector<1x4x32xf32>
    %cst_37 = arith.constant dense<0.000000e+00> : vector<1xf32>
    %79 = vector.multi_reduction <add>, %78, %cst_37 [1, 2] : vector<1x4x32xf32> to vector<1xf32>
    %80 = vector.shape_cast %79 : vector<1xf32> to vector<1x1x1xf32>
    %81 = vector.extract %80[0, 0, 0] : f32 from vector<1x1x1xf32>
    %cst_38 = arith.constant 1.000000e+00 : f32
    %82 = arith.subf %65, %cst_38 : f32
    %83 = arith.divf %81, %82 : f32
    %84 = math.sqrt %83 : f32
    %c0_39 = arith.constant 0 : index
    %c0_40 = arith.constant 0 : index
    %c0_41 = arith.constant 0 : index
    %85 = vector.load %arg4[%c0_39, %c0_40, %c0_41] : memref<4x16x32xbf16, #tpu.memory_space<vmem>>, vector<4x16x32xbf16>
    %86 = vector.shape_cast %28 : vector<4x32xf32> to vector<4x1x32xf32>
    %87 = arith.extf %85 : vector<4x16x32xbf16> to vector<4x16x32xf32>
    %88 = vector.broadcast %86 : vector<4x1x32xf32> to vector<4x16x32xf32>
    %89 = arith.addf %87, %88 : vector<4x16x32xf32>
    %cst_42 = arith.constant 0.000000e+00 : f32
    %90 = vector.broadcast %cst_42 : f32 to vector<4x16x32xf32>
    %91 = arith.maximumf %89, %90 : vector<4x16x32xf32>
    %c0_43 = arith.constant 0 : index
    %c0_44 = arith.constant 0 : index
    %c0_45 = arith.constant 0 : index
    %92 = vector.load %arg15[%c0_43, %c0_44, %c0_45] : memref<1x16x32xf32, #tpu.memory_space<vmem>>, vector<1x16x32xf32>
    %93 = vector.broadcast %92 : vector<1x16x32xf32> to vector<4x16x32xf32>
    %94 = arith.mulf %91, %93 : vector<4x16x32xf32>
    %cst_46 = arith.constant dense<0.000000e+00> : vector<4x32xf32>
    %95 = vector.multi_reduction <add>, %94, %cst_46 [1] : vector<4x16x32xf32> to vector<4x32xf32>
    %cst_47 = arith.constant dense<0xFF800000> : vector<4xf32>
    %96 = vector.multi_reduction <maximumf>, %95, %cst_47 [1] : vector<4x32xf32> to vector<4xf32>
    %97 = vector.shape_cast %96 : vector<4xf32> to vector<4x1xf32>
    %98 = vector.broadcast %97 : vector<4x1xf32> to vector<4x32xf32>
    %99 = arith.subf %95, %98 : vector<4x32xf32>
    %100 = math.exp %99 : vector<4x32xf32>
    %cst_48 = arith.constant dense<0.000000e+00> : vector<4xf32>
    %101 = vector.multi_reduction <add>, %100, %cst_48 [1] : vector<4x32xf32> to vector<4xf32>
    %102 = vector.shape_cast %101 : vector<4xf32> to vector<4x1xf32>
    %103 = tpu.reciprocal %102 {approx = true} : vector<4x1xf32> -> vector<4x1xf32>
    %104 = vector.broadcast %103 : vector<4x1xf32> to vector<4x32xf32>
    %105 = arith.mulf %100, %104 : vector<4x32xf32>
    %c0_49 = arith.constant 0 : index
    %c0_50 = arith.constant 0 : index
    %c0_51 = arith.constant 0 : index
    %106 = vector.load %arg5[%c0_49, %c0_50, %c0_51] : memref<4x16x32xbf16, #tpu.memory_space<vmem>>, vector<4x16x32xbf16>
    %107 = vector.shape_cast %105 : vector<4x32xf32> to vector<4x1x32xf32>
    %108 = arith.extf %106 : vector<4x16x32xbf16> to vector<4x16x32xf32>
    %109 = vector.broadcast %107 : vector<4x1x32xf32> to vector<4x16x32xf32>
    %110 = arith.mulf %108, %109 : vector<4x16x32xf32>
    %cst_52 = arith.constant dense<0.000000e+00> : vector<4x16xf32>
    %111 = vector.multi_reduction <add>, %110, %cst_52 [2] : vector<4x16x32xf32> to vector<4x16xf32>
    %cst_53 = arith.constant 1.600000e+01 : f32
    %112 = arith.mulf %12, %cst_53 : f32
    %113 = vector.broadcast %8 : vector<4x1xf32> to vector<4x16xf32>
    %114 = arith.mulf %111, %113 : vector<4x16xf32>
    %115 = vector.shape_cast %114 : vector<4x16xf32> to vector<1x4x16xf32>
    %cst_54 = arith.constant dense<0.000000e+00> : vector<1xf32>
    %116 = vector.multi_reduction <add>, %115, %cst_54 [1, 2] : vector<1x4x16xf32> to vector<1xf32>
    %117 = vector.shape_cast %116 : vector<1xf32> to vector<1x1x1xf32>
    %118 = vector.extract %117[0, 0, 0] : f32 from vector<1x1x1xf32>
    %119 = arith.divf %118, %112 : f32
    %120 = vector.broadcast %119 : f32 to vector<4x16xf32>
    %121 = arith.subf %111, %120 : vector<4x16xf32>
    %122 = arith.mulf %121, %121 : vector<4x16xf32>
    %123 = vector.broadcast %8 : vector<4x1xf32> to vector<4x16xf32>
    %124 = arith.mulf %123, %122 : vector<4x16xf32>
    %125 = vector.shape_cast %124 : vector<4x16xf32> to vector<1x4x16xf32>
    %cst_55 = arith.constant dense<0.000000e+00> : vector<1xf32>
    %126 = vector.multi_reduction <add>, %125, %cst_55 [1, 2] : vector<1x4x16xf32> to vector<1xf32>
    %127 = vector.shape_cast %126 : vector<1xf32> to vector<1x1x1xf32>
    %128 = vector.extract %127[0, 0, 0] : f32 from vector<1x1x1xf32>
    %cst_56 = arith.constant 1.000000e+00 : f32
    %129 = arith.subf %112, %cst_56 : f32
    %130 = arith.divf %128, %129 : f32
    %131 = math.sqrt %130 : f32
    %132 = arith.addf %84, %131 : f32
    %133 = arith.divf %84, %132 : f32
    %c0_57 = arith.constant 0 : index
    %c0_58 = arith.constant 0 : index
    %c0_59 = arith.constant 0 : index
    %134 = vector.load %arg1[%c0_57, %c0_58, %c0_59] : memref<1x4x128xbf16, #tpu.memory_space<vmem>>, vector<1x4x128xbf16>
    %135 = vector.shape_cast %134 : vector<1x4x128xbf16> to vector<4x128xbf16>
    %136 = arith.extf %135 : vector<4x128xbf16> to vector<4x128xf32>
    %137 = arith.addf %136, %30 : vector<4x128xf32>
    %138 = arith.addf %137, %29 : vector<4x128xf32>
    %139 = vector.extract_strided_slice %138 {offsets = [0, 0], sizes = [4, 32], strides = [1, 1]} : vector<4x128xf32> to vector<4x32xf32>
    %140 = arith.negf %139 : vector<4x32xf32>
    %141 = math.exp %140 : vector<4x32xf32>
    %cst_60 = arith.constant 1.000000e+00 : f32
    %142 = vector.broadcast %cst_60 : f32 to vector<4x32xf32>
    %143 = arith.addf %142, %141 : vector<4x32xf32>
    %144 = arith.divf %142, %143 : vector<4x32xf32>
    %145 = vector.extract_strided_slice %138 {offsets = [0, 32], sizes = [4, 32], strides = [1, 1]} : vector<4x128xf32> to vector<4x32xf32>
    %146 = arith.negf %145 : vector<4x32xf32>
    %147 = math.exp %146 : vector<4x32xf32>
    %cst_61 = arith.constant 1.000000e+00 : f32
    %148 = vector.broadcast %cst_61 : f32 to vector<4x32xf32>
    %149 = arith.addf %148, %147 : vector<4x32xf32>
    %150 = arith.divf %148, %149 : vector<4x32xf32>
    %151 = vector.extract_strided_slice %138 {offsets = [0, 64], sizes = [4, 32], strides = [1, 1]} : vector<4x128xf32> to vector<4x32xf32>
    %152 = math.tanh %151 : vector<4x32xf32>
    %153 = vector.extract_strided_slice %138 {offsets = [0, 96], sizes = [4, 32], strides = [1, 1]} : vector<4x128xf32> to vector<4x32xf32>
    %154 = arith.negf %153 : vector<4x32xf32>
    %155 = math.exp %154 : vector<4x32xf32>
    %cst_62 = arith.constant 1.000000e+00 : f32
    %156 = vector.broadcast %cst_62 : f32 to vector<4x32xf32>
    %157 = arith.addf %156, %155 : vector<4x32xf32>
    %158 = arith.divf %156, %157 : vector<4x32xf32>
    %c0_63 = arith.constant 0 : index
    %c0_64 = arith.constant 0 : index
    %159 = vector.load %arg23[%c0_63, %c0_64] : memref<4x32xf32, #tpu.memory_space<vmem>>, vector<4x32xf32>
    %160 = arith.mulf %150, %159 : vector<4x32xf32>
    %161 = arith.mulf %144, %152 : vector<4x32xf32>
    %162 = arith.addf %160, %161 : vector<4x32xf32>
    %163 = math.tanh %162 : vector<4x32xf32>
    %164 = arith.mulf %158, %163 : vector<4x32xf32>
    %c0_65 = arith.constant 0 : index
    %c0_66 = arith.constant 0 : index
    %165 = vector.load %arg22[%c0_65, %c0_66] : memref<4x32xf32, #tpu.memory_space<vmem>>, vector<4x32xf32>
    tpu.vector_store %arg22[%c0_65, %c0_66], %164 {strides = array<i32>} : memref<4x32xf32, #tpu.memory_space<vmem>>, vector<4x32xf32>,
    %c0_67 = arith.constant 0 : index
    %c0_68 = arith.constant 0 : index
    %166 = vector.load %arg23[%c0_67, %c0_68] : memref<4x32xf32, #tpu.memory_space<vmem>>, vector<4x32xf32>
    tpu.vector_store %arg23[%c0_67, %c0_68], %162 {strides = array<i32>} : memref<4x32xf32, #tpu.memory_space<vmem>>, vector<4x32xf32>,
    %cst_69 = arith.constant 1.000000e+00 : f32
    %167 = arith.subf %cst_69, %133 : f32
    %168 = vector.broadcast %167 : f32 to vector<4x16xf32>
    %169 = arith.mulf %168, %111 : vector<4x16xf32>
    %170 = arith.truncf %169 : vector<4x16xf32> to vector<4x16xbf16>
    %171 = vector.broadcast %133 : f32 to vector<4x32xf32>
    %172 = arith.mulf %171, %64 : vector<4x32xf32>
    %173 = arith.truncf %172 : vector<4x32xf32> to vector<4x32xbf16>
    %c0_70 = arith.constant 0 : index
    %c0_71 = arith.constant 0 : index
    %174 = vector.load %arg17[%c0_70, %c0_71] : memref<16x128xbf16, #tpu.memory_space<vmem>>, vector<16x128xbf16>
    %cst_72 = arith.constant dense<0.000000e+00> : vector<4x128xf32>
    %175 = tpu.matmul %170, %174, %cst_72 {dimension_numbers = #tpu.dot_dimension_numbers<[1], [0], [0], [1], [0, 0, 1, 1], [], []>} : vector<4x16xbf16>, vector<16x128xbf16>, vector<4x128xf32> -> vector<4x128xf32>
    %c0_73 = arith.constant 0 : index
    %c0_74 = arith.constant 0 : index
    %176 = vector.load %arg18[%c0_73, %c0_74] : memref<32x128xbf16, #tpu.memory_space<vmem>>, vector<32x128xbf16>
    %cst_75 = arith.constant dense<0.000000e+00> : vector<4x128xf32>
    %177 = tpu.matmul %173, %176, %cst_75 {dimension_numbers = #tpu.dot_dimension_numbers<[1], [0], [0], [1], [0, 0, 1, 1], [], []>} : vector<4x32xbf16>, vector<32x128xbf16>, vector<4x128xf32> -> vector<4x128xf32>
    %178 = arith.addf %175, %177 : vector<4x128xf32>
    %179 = arith.truncf %164 : vector<4x32xf32> to vector<4x32xbf16>
    %c0_76 = arith.constant 0 : index
    %c0_77 = arith.constant 0 : index
    %180 = vector.load %arg19[%c0_76, %c0_77] : memref<32x128xbf16, #tpu.memory_space<vmem>>, vector<32x128xbf16>
    %cst_78 = arith.constant dense<0.000000e+00> : vector<4x128xf32>
    %181 = tpu.matmul %179, %180, %cst_78 {dimension_numbers = #tpu.dot_dimension_numbers<[1], [0], [0], [1], [0, 0, 1, 1], [], []>} : vector<4x32xbf16>, vector<32x128xbf16>, vector<4x128xf32> -> vector<4x128xf32>
    %182 = arith.addf %178, %181 : vector<4x128xf32>
    %183 = arith.addf %182, %31 : vector<4x128xf32>
    %c0_79 = arith.constant 0 : index
    %c0_80 = arith.constant 0 : index
    %184 = vector.load %arg20[%c0_79, %c0_80] : memref<1x128xf32, #tpu.memory_space<vmem>>, vector<1x128xf32>
    %185 = vector.broadcast %184 : vector<1x128xf32> to vector<4x128xf32>
    %186 = arith.addf %183, %185 : vector<4x128xf32>
    %187 = vector.extract_strided_slice %186 {offsets = [0, 0], sizes = [4, 32], strides = [1, 1]} : vector<4x128xf32> to vector<4x32xf32>
    %188 = arith.negf %187 : vector<4x32xf32>
    %189 = math.exp %188 : vector<4x32xf32>
    %cst_81 = arith.constant 1.000000e+00 : f32
    %190 = vector.broadcast %cst_81 : f32 to vector<4x32xf32>
    %191 = arith.addf %190, %189 : vector<4x32xf32>
    %192 = arith.divf %190, %191 : vector<4x32xf32>
    %193 = vector.extract_strided_slice %186 {offsets = [0, 32], sizes = [4, 32], strides = [1, 1]} : vector<4x128xf32> to vector<4x32xf32>
    %194 = arith.negf %193 : vector<4x32xf32>
    %195 = math.exp %194 : vector<4x32xf32>
    %cst_82 = arith.constant 1.000000e+00 : f32
    %196 = vector.broadcast %cst_82 : f32 to vector<4x32xf32>
    %197 = arith.addf %196, %195 : vector<4x32xf32>
    %198 = arith.divf %196, %197 : vector<4x32xf32>
    %199 = vector.extract_strided_slice %186 {offsets = [0, 64], sizes = [4, 32], strides = [1, 1]} : vector<4x128xf32> to vector<4x32xf32>
    %200 = math.tanh %199 : vector<4x32xf32>
    %201 = vector.extract_strided_slice %186 {offsets = [0, 96], sizes = [4, 32], strides = [1, 1]} : vector<4x128xf32> to vector<4x32xf32>
    %202 = arith.negf %201 : vector<4x32xf32>
    %203 = math.exp %202 : vector<4x32xf32>
    %cst_83 = arith.constant 1.000000e+00 : f32
    %204 = vector.broadcast %cst_83 : f32 to vector<4x32xf32>
    %205 = arith.addf %204, %203 : vector<4x32xf32>
    %206 = arith.divf %204, %205 : vector<4x32xf32>
    %c0_84 = arith.constant 0 : index
    %c0_85 = arith.constant 0 : index
    %207 = vector.load %arg25[%c0_84, %c0_85] : memref<4x32xf32, #tpu.memory_space<vmem>>, vector<4x32xf32>
    %208 = arith.mulf %198, %207 : vector<4x32xf32>
    %209 = arith.mulf %192, %200 : vector<4x32xf32>
    %210 = arith.addf %208, %209 : vector<4x32xf32>
    %211 = math.tanh %210 : vector<4x32xf32>
    %212 = arith.mulf %206, %211 : vector<4x32xf32>
    %c0_86 = arith.constant 0 : index
    %c0_87 = arith.constant 0 : index
    %213 = vector.load %arg24[%c0_86, %c0_87] : memref<4x32xf32, #tpu.memory_space<vmem>>, vector<4x32xf32>
    tpu.vector_store %arg24[%c0_86, %c0_87], %212 {strides = array<i32>} : memref<4x32xf32, #tpu.memory_space<vmem>>, vector<4x32xf32>,
    %c0_88 = arith.constant 0 : index
    %c0_89 = arith.constant 0 : index
    %214 = vector.load %arg25[%c0_88, %c0_89] : memref<4x32xf32, #tpu.memory_space<vmem>>, vector<4x32xf32>
    tpu.vector_store %arg25[%c0_88, %c0_89], %210 {strides = array<i32>} : memref<4x32xf32, #tpu.memory_space<vmem>>, vector<4x32xf32>,
    %cst_90 = arith.constant 0.000000e+00 : f32
    %215 = vector.broadcast %cst_90 : f32 to vector<4x32xf32>
    %216 = arith.mulf %164, %215 : vector<4x32xf32>
    %217 = arith.addf %216, %212 : vector<4x32xf32>
    %c0_91 = arith.constant 0 : index
    %c0_92 = arith.constant 0 : index
    %c0_93 = arith.constant 0 : index
    %218 = vector.load %arg21[%c0_91, %c0_92, %c0_93] : memref<1x4x128xf32, #tpu.memory_space<vmem>>, vector<1x4x32xf32>
    %219 = vector.shape_cast %218 : vector<1x4x32xf32> to vector<4x32xf32>
    %220 = vector.shape_cast %217 : vector<4x32xf32> to vector<1x4x32xf32>
    tpu.vector_store %arg21[%c0_91, %c0_92, %c0_93], %220 {strides = array<i32>} : memref<1x4x128xf32, #tpu.memory_space<vmem>>, vector<1x4x32xf32>,
    %221 = vector.broadcast %8 : vector<4x1xf32> to vector<4x16xf32>
    %222 = arith.mulf %52, %221 : vector<4x16xf32>
    %c0_94 = arith.constant 0 : index
    %c0_95 = arith.constant 0 : index
    %c32 = arith.constant 32 : index
    %223 = vector.load %arg21[%c0_94, %c0_95, %c32] : memref<1x4x128xf32, #tpu.memory_space<vmem>>, vector<1x4x16xf32>
    %224 = vector.shape_cast %223 : vector<1x4x16xf32> to vector<4x16xf32>
    %225 = vector.shape_cast %222 : vector<4x16xf32> to vector<1x4x16xf32>
    tpu.vector_store %arg21[%c0_94, %c0_95, %c32], %225 {strides = array<i32>} : memref<1x4x128xf32, #tpu.memory_space<vmem>>, vector<1x4x16xf32>,
    %226 = vector.broadcast %8 : vector<4x1xf32> to vector<4x32xf32>
    %227 = arith.mulf %105, %226 : vector<4x32xf32>
    %c0_96 = arith.constant 0 : index
    %c0_97 = arith.constant 0 : index
    %c48 = arith.constant 48 : index
    %228 = vector.load %arg21[%c0_96, %c0_97, %c48] : memref<1x4x128xf32, #tpu.memory_space<vmem>>, vector<1x4x32xf32>
    %229 = vector.shape_cast %228 : vector<1x4x32xf32> to vector<4x32xf32>
    %230 = vector.shape_cast %227 : vector<4x32xf32> to vector<1x4x32xf32>
    tpu.vector_store %arg21[%c0_96, %c0_97, %c48], %230 {strides = array<i32>} : memref<1x4x128xf32, #tpu.memory_space<vmem>>, vector<1x4x32xf32>,
    %cst_98 = arith.constant 0.000000e+00 : f32
    %231 = vector.broadcast %cst_98 : f32 to vector<4x48xf32>
    %c0_99 = arith.constant 0 : index
    %c0_100 = arith.constant 0 : index
    %c80 = arith.constant 80 : index
    %232 = vector.load %arg21[%c0_99, %c0_100, %c80] : memref<1x4x128xf32, #tpu.memory_space<vmem>>, vector<1x4x48xf32>
    %233 = vector.shape_cast %232 : vector<1x4x48xf32> to vector<4x48xf32>
    %234 = vector.shape_cast %231 : vector<4x48xf32> to vector<1x4x48xf32>
    tpu.vector_store %arg21[%c0_99, %c0_100, %c80], %234 {strides = array<i32>} : memref<1x4x128xf32, #tpu.memory_space<vmem>>, vector<1x4x48xf32>,
    return
  }
  func.func @transform_0(%arg0: i32) -> (i32, i32, i32) {
    %c0_i32 = arith.constant 0 : i32
    %c0_i32_0 = arith.constant 0 : i32
    %c0_i32_1 = arith.constant 0 : i32
    return %arg0, %c0_i32, %c0_i32_0 : i32, i32, i32
  }
  func.func @transform_1(%arg0: i32) -> (i32, i32, i32) {
    %c0_i32 = arith.constant 0 : i32
    %c0_i32_0 = arith.constant 0 : i32
    %c0_i32_1 = arith.constant 0 : i32
    %c0_i32_2 = arith.constant 0 : i32
    return %c0_i32, %c0_i32_0, %c0_i32_1 : i32, i32, i32
  }
  func.func @transform_2(%arg0: i32) -> (i32, i32, i32) {
    %c0_i32 = arith.constant 0 : i32
    %c0_i32_0 = arith.constant 0 : i32
    %c0_i32_1 = arith.constant 0 : i32
    %c0_i32_2 = arith.constant 0 : i32
    return %c0_i32, %c0_i32_0, %c0_i32_1 : i32, i32, i32
  }
  func.func @transform_3(%arg0: i32) -> (i32, i32, i32) {
    %c0_i32 = arith.constant 0 : i32
    %c0_i32_0 = arith.constant 0 : i32
    %c0_i32_1 = arith.constant 0 : i32
    %c0_i32_2 = arith.constant 0 : i32
    return %c0_i32, %c0_i32_0, %c0_i32_1 : i32, i32, i32
  }
  func.func @transform_4(%arg0: i32) -> (i32, i32, i32) {
    %c0_i32 = arith.constant 0 : i32
    %c0_i32_0 = arith.constant 0 : i32
    %c0_i32_1 = arith.constant 0 : i32
    %c0_i32_2 = arith.constant 0 : i32
    return %c0_i32, %c0_i32_0, %c0_i32_1 : i32, i32, i32
  }
  func.func @transform_5(%arg0: i32) -> (i32, i32) {
    %c0_i32 = arith.constant 0 : i32
    %c0_i32_0 = arith.constant 0 : i32
    %c0_i32_1 = arith.constant 0 : i32
    return %c0_i32, %c0_i32_0 : i32, i32
  }
  func.func @transform_6(%arg0: i32) -> (i32, i32) {
    %c0_i32 = arith.constant 0 : i32
    %c0_i32_0 = arith.constant 0 : i32
    %c0_i32_1 = arith.constant 0 : i32
    return %c0_i32, %c0_i32_0 : i32, i32
  }
  func.func @transform_7(%arg0: i32) -> (i32, i32) {
    %c0_i32 = arith.constant 0 : i32
    %c0_i32_0 = arith.constant 0 : i32
    %c0_i32_1 = arith.constant 0 : i32
    return %c0_i32, %c0_i32_0 : i32, i32
  }
  func.func @transform_8(%arg0: i32) -> (i32, i32) {
    %c0_i32 = arith.constant 0 : i32
    %c0_i32_0 = arith.constant 0 : i32
    %c0_i32_1 = arith.constant 0 : i32
    return %c0_i32, %c0_i32_0 : i32, i32
  }
  func.func @transform_9(%arg0: i32) -> (i32, i32) {
    %c0_i32 = arith.constant 0 : i32
    %c0_i32_0 = arith.constant 0 : i32
    %c0_i32_1 = arith.constant 0 : i32
    return %c0_i32, %c0_i32_0 : i32, i32
  }
  func.func @transform_10(%arg0: i32) -> (i32, i32, i32) {
    %c0_i32 = arith.constant 0 : i32
    %c0_i32_0 = arith.constant 0 : i32
    %c0_i32_1 = arith.constant 0 : i32
    %c0_i32_2 = arith.constant 0 : i32
    return %c0_i32, %c0_i32_0, %c0_i32_1 : i32, i32, i32
  }
  func.func @transform_11(%arg0: i32) -> (i32, i32) {
    %c0_i32 = arith.constant 0 : i32
    %c0_i32_0 = arith.constant 0 : i32
    %c0_i32_1 = arith.constant 0 : i32
    return %c0_i32, %c0_i32_0 : i32, i32
  }
  func.func @transform_12(%arg0: i32) -> (i32, i32) {
    %c0_i32 = arith.constant 0 : i32
    %c0_i32_0 = arith.constant 0 : i32
    %c0_i32_1 = arith.constant 0 : i32
    return %c0_i32, %c0_i32_0 : i32, i32
  }
  func.func @transform_13(%arg0: i32) -> (i32, i32) {
    %c0_i32 = arith.constant 0 : i32
    %c0_i32_0 = arith.constant 0 : i32
    %c0_i32_1 = arith.constant 0 : i32
    return %c0_i32, %c0_i32_0 : i32, i32
  }
  func.func @transform_14(%arg0: i32) -> (i32, i32, i32) {
    %c0_i32 = arith.constant 0 : i32
    %c0_i32_0 = arith.constant 0 : i32
    %c0_i32_1 = arith.constant 0 : i32
    %c0_i32_2 = arith.constant 0 : i32
    return %c0_i32, %c0_i32_0, %c0_i32_1 : i32, i32, i32
  }
  func.func @transform_15(%arg0: i32) -> (i32, i32) {
    %c0_i32 = arith.constant 0 : i32
    %c0_i32_0 = arith.constant 0 : i32
    %c0_i32_1 = arith.constant 0 : i32
    return %c0_i32, %c0_i32_0 : i32, i32
  }
  func.func @transform_16(%arg0: i32) -> (i32, i32) {
    %c0_i32 = arith.constant 0 : i32
    %c0_i32_0 = arith.constant 0 : i32
    %c0_i32_1 = arith.constant 0 : i32
    return %c0_i32, %c0_i32_0 : i32, i32
  }
  func.func @transform_17(%arg0: i32) -> (i32, i32) {
    %c0_i32 = arith.constant 0 : i32
    %c0_i32_0 = arith.constant 0 : i32
    %c0_i32_1 = arith.constant 0 : i32
    return %c0_i32, %c0_i32_0 : i32, i32
  }
  func.func @transform_18(%arg0: i32) -> (i32, i32) {
    %c0_i32 = arith.constant 0 : i32
    %c0_i32_0 = arith.constant 0 : i32
    %c0_i32_1 = arith.constant 0 : i32
    return %c0_i32, %c0_i32_0 : i32, i32
  }
  func.func @transform_19(%arg0: i32) -> (i32, i32) {
    %c0_i32 = arith.constant 0 : i32
    %c0_i32_0 = arith.constant 0 : i32
    %c0_i32_1 = arith.constant 0 : i32
    return %c0_i32, %c0_i32_0 : i32, i32
  }
  func.func @transform_20(%arg0: i32) -> (i32, i32, i32) {
    %c0_i32 = arith.constant 0 : i32
    %c0_i32_0 = arith.constant 0 : i32
    %c0_i32_1 = arith.constant 0 : i32
    return %arg0, %c0_i32, %c0_i32_0 : i32, i32, i32
  }
}

</mosaic_0001>

<llo_original>
// kernel: tpu_custom_call.1
$region0: #{tpu_custom_call.1}
  #allocation0 [shape = 'u32[]', space=smem, size = 0x4, offset = 0x4, fixed_abs, tag = 'smem constant byte address 0x4 - core index']
  #allocation1 [shape = 'u32[144,128]{1,0:T(1,128)}', space=vmem, size = 0x12000, scoped, tag = 'internal scratch']
  #allocation2 [shape = 'f32[4,32]{1,0:T(4,128)}', space=vmem, size = 0x800, scoped, tag = 'scratch operand']
  #allocation3 [shape = 'f32[4,32]{1,0:T(4,128)}', space=vmem, size = 0x800, scoped, tag = 'scratch operand']
  #allocation4 [shape = 'f32[4,32]{1,0:T(4,128)}', space=vmem, size = 0x800, scoped, tag = 'scratch operand']
  #allocation5 [shape = 'f32[4,32]{1,0:T(4,128)}', space=vmem, size = 0x800, scoped, tag = 'scratch operand']
  %s0 = inlined_call_operand.hbm [shape: bf16[6,4,128], index: 0, kind: input, shape index: {}]
  %s1 = inlined_call_operand.hbm [shape: bf16[4,16,32], index: 1, kind: input, shape index: {}]
  %s2 = inlined_call_operand.hbm [shape: bf16[4,16,32], index: 2, kind: input, shape index: {}]
  %s3 = inlined_call_operand.hbm [shape: bf16[4,16,32], index: 3, kind: input, shape index: {}]
  %s4 = inlined_call_operand.hbm [shape: bf16[4,16,32], index: 4, kind: input, shape index: {}]
  %s5 = inlined_call_operand.vmem [shape: f32[4,1], index: 5, kind: input, shape index: {}]
  %s6 = inlined_call_operand.hbm [shape: f32[4,32], index: 6, kind: input, shape index: {}]
  %s7 = inlined_call_operand.hbm [shape: f32[4,32], index: 7, kind: input, shape index: {}]
  %s8 = inlined_call_operand.hbm [shape: bf16[32,192], index: 8, kind: input, shape index: {}]
  %s9 = inlined_call_operand.hbm [shape: f32[1,32], index: 9, kind: input, shape index: {}]
  %s10 = inlined_call_operand.hbm [shape: f32[1,1,32], index: 10, kind: input, shape index: {}]
  %s11 = inlined_call_operand.hbm [shape: bf16[32,32], index: 11, kind: input, shape index: {}]
  %s12 = inlined_call_operand.hbm [shape: f32[1,32], index: 12, kind: input, shape index: {}]
  %s13 = inlined_call_operand.hbm [shape: f32[1,32], index: 13, kind: input, shape index: {}]
  %s14 = inlined_call_operand.hbm [shape: f32[1,16,32], index: 14, kind: input, shape index: {}]
  %s15 = inlined_call_operand.vmem [shape: bf16[32,256], index: 15, kind: input, shape index: {}]
  %s16 = inlined_call_operand.hbm [shape: bf16[16,128], index: 16, kind: input, shape index: {}]
  %s17 = inlined_call_operand.hbm [shape: bf16[32,128], index: 17, kind: input, shape index: {}]
  %s18 = inlined_call_operand.hbm [shape: bf16[32,128], index: 18, kind: input, shape index: {}]
  %s19 = inlined_call_operand.vmem [shape: f32[1,128], index: 19, kind: input, shape index: {}]
  %s20 = inlined_call_operand.hbm [shape: f32[6,4,128], index: 20, kind: output, shape index: {}]
  %s21 = sld [smem:[#allocation0]]
  $region185: #{tpu_custom_call.1} parent=0
    _
  %s23 = ssub.s32 1, %s21
  %s24 = scalar_select 0, %s23, %s21
  $region1: #{tpu_custom_call.1} parent=0
    #allocation6 [shape = 'u8[2048]{0}', space=vmem, size = 0x800, scoped, tag = 'input window, operand 0']
    #allocation7 [shape = 's32[2]{0}', space=sflag, size = 0x8, scoped, tag = 'scoped memory for tpu_custom_call.1']
    #allocation8 [shape = 's32[2]{0}', space=sflag, size = 0x8, scoped, tag = 'scoped memory for tpu_custom_call.1']
    #allocation9 [shape = 'u8[16384]{0}', space=vmem, size = 0x4000, scoped, tag = 'input window, operand 1, single buffered']
    #allocation10 [shape = 's32[1]{0}', space=sflag, size = 0x4, scoped, tag = 'scoped memory for tpu_custom_call.1']
    #allocation11 [shape = 'u8[16384]{0}', space=vmem, size = 0x4000, scoped, tag = 'input window, operand 2, single buffered']
    #allocation12 [shape = 'u8[16384]{0}', space=vmem, size = 0x4000, scoped, tag = 'input window, operand 3, single buffered']
    #allocation13 [shape = 's32[1]{0}', space=sflag, size = 0x4, scoped, tag = 'scoped memory for tpu_custom_call.1']
    #allocation14 [shape = 'u8[16384]{0}', space=vmem, size = 0x4000, scoped, tag = 'input window, operand 4, single buffered']
    #allocation15 [shape = 'u8[2048]{0}', space=vmem, size = 0x800, scoped, tag = 'input window, operand 6, single buffered']
    #allocation16 [shape = 's32[1]{0}', space=sflag, size = 0x4, scoped, tag = 'scoped memory for tpu_custom_call.1']
    #allocation17 [shape = 'u8[2048]{0}', space=vmem, size = 0x800, scoped, tag = 'input window, operand 7, single buffered']
    #allocation18 [shape = 'u8[16384]{0}', space=vmem, size = 0x4000, scoped, tag = 'input window, operand 8, single buffered']
    #allocation19 [shape = 's32[1]{0}', space=sflag, size = 0x4, scoped, tag = 'scoped memory for tpu_custom_call.1']
    #allocation20 [shape = 'u8[512]{0}', space=vmem, size = 0x400, scoped, tag = 'input window, operand 9, single buffered']
    #allocation21 [shape = 'u8[512]{0}', space=vmem, size = 0x400, scoped, tag = 'input window, operand 10, single buffered']
    #allocation22 [shape = 's32[1]{0}', space=sflag, size = 0x4, scoped, tag = 'scoped memory for tpu_custom_call.1']
    #allocation23 [shape = 'u8[8192]{0}', space=vmem, size = 0x2000, scoped, tag = 'input window, operand 11, single buffered']
    #allocation24 [shape = 'u8[512]{0}', space=vmem, size = 0x400, scoped, tag = 'input window, operand 12, single buffered']
    #allocation25 [shape = 's32[1]{0}', space=sflag, size = 0x4, scoped, tag = 'scoped memory for tpu_custom_call.1']
    #allocation26 [shape = 'u8[512]{0}', space=vmem, size = 0x400, scoped, tag = 'input window, operand 13, single buffered']
    #allocation27 [shape = 'u8[8192]{0}', space=vmem, size = 0x2000, scoped, tag = 'input window, operand 14, single buffered']
    #allocation28 [shape = 's32[1]{0}', space=sflag, size = 0x4, scoped, tag = 'scoped memory for tpu_custom_call.1']
    #allocation29 [shape = 'u8[4096]{0}', space=vmem, size = 0x1000, scoped, tag = 'input window, operand 16, single buffered']
    #allocation30 [shape = 'u8[8192]{0}', space=vmem, size = 0x2000, scoped, tag = 'input window, operand 17, single buffered']
    #allocation31 [shape = 's32[1]{0}', space=sflag, size = 0x4, scoped, tag = 'scoped memory for tpu_custom_call.1']
    #allocation32 [shape = 'u8[8192]{0}', space=vmem, size = 0x2000, scoped, tag = 'input window, operand 18, single buffered']
    #allocation33 [shape = 'u8[4096]{0}', space=vmem, size = 0x1000, scoped, tag = 'output window, operand 0']
    %25 = vsyncpa [#allocation7], 0
    %s26 = scalar_lea.sflag [#allocation7], 1
    %27 = vsyncpa %s26, 0
    %28 = vsyncpa [#allocation10], 0
    %29 = vsyncpa [#allocation13], 0
    %30 = vsyncpa [#allocation16], 0
    %31 = vsyncpa [#allocation19], 0
    %32 = vsyncpa [#allocation22], 0
    %33 = vsyncpa [#allocation25], 0
    %34 = vsyncpa [#allocation28], 0
    %35 = vsyncpa [#allocation31], 0
    %36 = vsyncpa [#allocation8], 0
    %s37 = scalar_lea.sflag [#allocation8], 1
    %38 = vsyncpa %s37, 0
    loop: start=0, step=1, limit=8
    $region2: #{tpu_custom_call.1} parent=1 // loop_pre_header
      _
    $region3: #{tpu_custom_call.1} parent=1 // loop_header
      %s40 = sphi 0, %s44
      %p41 = scmp.ge.s32.totalorder %s40, 8
      %s50 = sphi 0, %s52
      %s53 = sphi 0, %s50
      %s54 = sphi 0, %s53
      %s70 = sphi 0, %s54
      %s74 = sphi 0, %s74
      %s76 = sphi 0, %s74
      %s77 = sphi 0, %s76
      %s91 = sphi 0, %s77
      %s95 = sphi 0, %s95
      %s97 = sphi 0, %s95
      %s98 = sphi 0, %s97
      %s112 = sphi 0, %s98
      %s116 = sphi 0, %s116
      %s118 = sphi 0, %s116
      %s119 = sphi 0, %s118
      %s133 = sphi 0, %s119
      %s137 = sphi 0, %s137
      %s139 = sphi 0, %s137
      %s140 = sphi 0, %s139
      %s154 = sphi 0, %s140
      %s158 = sphi 0, %s158
      %s160 = sphi 0, %s158
      %s161 = sphi 0, %s160
      %s175 = sphi 0, %s161
      %s179 = sphi 0, %s179
      %s181 = sphi 0, %s179
      %s182 = sphi 0, %s181
      %s196 = sphi 0, %s182
      %s200 = sphi 0, %s200
      %s202 = sphi 0, %s200
      %s203 = sphi 0, %s202
      %s217 = sphi 0, %s203
      %s221 = sphi 0, %s221
      %s223 = sphi 0, %s221
      %s224 = sphi 0, %s223
      %s238 = sphi 0, %s224
      %s242 = sphi 0, %s242
      %s244 = sphi 0, %s242
      %s245 = sphi 0, %s244
      %s259 = sphi 0, %s245
      %s263 = sphi 0, %s263
      %s265 = sphi 0, %s263
      %s266 = sphi 0, %s265
      %s280 = sphi 0, %s266
      %s284 = sphi 0, %s284
      %s286 = sphi 0, %s284
      %s287 = sphi 0, %s286
      %s301 = sphi 0, %s287
      %s305 = sphi 0, %s305
      %s307 = sphi 0, %s305
      %s308 = sphi 0, %s307
      %s322 = sphi 0, %s308
      %s326 = sphi 0, %s326
      %s328 = sphi 0, %s326
      %s329 = sphi 0, %s328
      %s343 = sphi 0, %s329
      %s347 = sphi 0, %s347
      %s349 = sphi 0, %s347
      %s350 = sphi 0, %s349
      %s364 = sphi 0, %s350
      %s368 = sphi 0, %s368
      %s370 = sphi 0, %s368
      %s371 = sphi 0, %s370
      %s385 = sphi 0, %s371
      %s389 = sphi 0, %s389
      %s391 = sphi 0, %s389
      %s392 = sphi 0, %s391
      %s406 = sphi 0, %s392
      %s410 = sphi 0, %s410
      %s412 = sphi 0, %s410
      %s413 = sphi 0, %s412
      %s427 = sphi 0, %s413
      %s431 = sphi 0, %s431
      %s433 = sphi 0, %s431
      %s434 = sphi 0, %s433
      %s448 = sphi 0, %s434
      %s452 = sphi 0, %s452
      %s454 = sphi 0, %s452
      %s455 = sphi 0, %s454
      %s469 = sphi 0, %s455
      %s475 = sphi 0, %s477
      %s478 = sphi 0, %s475
      %s479 = sphi 0, %s478
      %s495 = sphi 0, %s479
    $region4: #{tpu_custom_call.1} parent=1 // loop_header_branch
      %43 = sbr.rel (%p41) target = $region8
    $region5: #{tpu_custom_call.1} parent=1 // loop_body
      %s45 = ssub.s32 %s40, 1
      %s46 = ssub.s32 %s40, 2
      %s47 = sadd.s32 %s40, 1
      %s48 = ssub.s32 %s40, %s47
      %p49 = scmp.eq.s32.totalorder %s48, 0
      %s51 = sadd.s32 %s50, 1
      %s52 = scalar_select %p49, %s50, %s51
      %p55 = pneg %p49
      %p56 = scmp.eq.s32.totalorder %s40, 5
      %p57 = por %p55, %p56
      %p58 = scmp.ne.s32.totalorder %s50, %s53
      %p59 = scmp.eq.s32.totalorder %s40, 0
      %p60 = por %p58, %p59
      %p61 = scmp.ne.s32.totalorder %s50, %s53
      %p62 = scmp.eq.s32.totalorder %s45, 5
      %p63 = por %p61, %p62
      %p64 = scmp.ne.s32.totalorder %s53, %s54
      %p65 = scmp.eq.s32.totalorder %s45, 0
      %p66 = por %p64, %p65
      %p67 = scmp.ne.s32.totalorder %s53, %s54
      %p68 = scmp.eq.s32.totalorder %s46, 5
      %p69 = por %p67, %p68
      %p71 = scmp.ne.s32.totalorder %s54, %s70
      %p72 = scmp.eq.s32.totalorder %s46, 0
      %p73 = por %p71, %p72
      %s75 = sadd.s32 %s74, 1
      %p78 = scmp.eq.s32.totalorder %s40, 5
      %p79 = scmp.ne.s32.totalorder %s74, %s76
      %p80 = scmp.eq.s32.totalorder %s40, 0
      %p81 = por %p79, %p80
      %p82 = scmp.ne.s32.totalorder %s74, %s76
      %p83 = scmp.eq.s32.totalorder %s45, 5
      %p84 = por %p82, %p83
      %p85 = scmp.ne.s32.totalorder %s76, %s77
      %p86 = scmp.eq.s32.totalorder %s45, 0
      %p87 = por %p85, %p86
      %p88 = scmp.ne.s32.totalorder %s76, %s77
      %p89 = scmp.eq.s32.totalorder %s46, 5
      %p90 = por %p88, %p89
      %p92 = scmp.ne.s32.totalorder %s77, %s91
      %p93 = scmp.eq.s32.totalorder %s46, 0
      %p94 = por %p92, %p93
      %s96 = sadd.s32 %s95, 1
      %p99 = scmp.eq.s32.totalorder %s40, 5
      %p100 = scmp.ne.s32.totalorder %s95, %s97
      %p101 = scmp.eq.s32.totalorder %s40, 0
      %p102 = por %p100, %p101
      %p103 = scmp.ne.s32.totalorder %s95, %s97
      %p104 = scmp.eq.s32.totalorder %s45, 5
      %p105 = por %p103, %p104
      %p106 = scmp.ne.s32.totalorder %s97, %s98
      %p107 = scmp.eq.s32.totalorder %s45, 0
      %p108 = por %p106, %p107
      %p109 = scmp.ne.s32.totalorder %s97, %s98
      %p110 = scmp.eq.s32.totalorder %s46, 5
      %p111 = por %p109, %p110
      %p113 = scmp.ne.s32.totalorder %s98, %s112
      %p114 = scmp.eq.s32.totalorder %s46, 0
      %p115 = por %p113, %p114
      %s117 = sadd.s32 %s116, 1
      %p120 = scmp.eq.s32.totalorder %s40, 5
      %p121 = scmp.ne.s32.totalorder %s116, %s118
      %p122 = scmp.eq.s32.totalorder %s40, 0
      %p123 = por %p121, %p122
      %p124 = scmp.ne.s32.totalorder %s116, %s118
      %p125 = scmp.eq.s32.totalorder %s45, 5
      %p126 = por %p124, %p125
      %p127 = scmp.ne.s32.totalorder %s118, %s119
      %p128 = scmp.eq.s32.totalorder %s45, 0
      %p129 = por %p127, %p128
      %p130 = scmp.ne.s32.totalorder %s118, %s119
      %p131 = scmp.eq.s32.totalorder %s46, 5
      %p132 = por %p130, %p131
      %p134 = scmp.ne.s32.totalorder %s119, %s133
      %p135 = scmp.eq.s32.totalorder %s46, 0
      %p136 = por %p134, %p135
      %s138 = sadd.s32 %s137, 1
      %p141 = scmp.eq.s32.totalorder %s40, 5
      %p142 = scmp.ne.s32.totalorder %s137, %s139
      %p143 = scmp.eq.s32.totalorder %s40, 0
      %p144 = por %p142, %p143
      %p145 = scmp.ne.s32.totalorder %s137, %s139
      %p146 = scmp.eq.s32.totalorder %s45, 5
      %p147 = por %p145, %p146
      %p148 = scmp.ne.s32.totalorder %s139, %s140
      %p149 = scmp.eq.s32.totalorder %s45, 0
      %p150 = por %p148, %p149
      %p151 = scmp.ne.s32.totalorder %s139, %s140
      %p152 = scmp.eq.s32.totalorder %s46, 5
      %p153 = por %p151, %p152
      %p155 = scmp.ne.s32.totalorder %s140, %s154
      %p156 = scmp.eq.s32.totalorder %s46, 0
      %p157 = por %p155, %p156
      %s159 = sadd.s32 %s158, 1
      %p162 = scmp.eq.s32.totalorder %s40, 5
      %p163 = scmp.ne.s32.totalorder %s158, %s160
      %p164 = scmp.eq.s32.totalorder %s40, 0
      %p165 = por %p163, %p164
      %p166 = scmp.ne.s32.totalorder %s158, %s160
      %p167 = scmp.eq.s32.totalorder %s45, 5
      %p168 = por %p166, %p167
      %p169 = scmp.ne.s32.totalorder %s160, %s161
      %p170 = scmp.eq.s32.totalorder %s45, 0
      %p171 = por %p169, %p170
      %p172 = scmp.ne.s32.totalorder %s160, %s161
      %p173 = scmp.eq.s32.totalorder %s46, 5
      %p174 = por %p172, %p173
      %p176 = scmp.ne.s32.totalorder %s161, %s175
      %p177 = scmp.eq.s32.totalorder %s46, 0
      %p178 = por %p176, %p177
      %s180 = sadd.s32 %s179, 1
      %p183 = scmp.eq.s32.totalorder %s40, 5
      %p184 = scmp.ne.s32.totalorder %s179, %s181
      %p185 = scmp.eq.s32.totalorder %s40, 0
      %p186 = por %p184, %p185
      %p187 = scmp.ne.s32.totalorder %s179, %s181
      %p188 = scmp.eq.s32.totalorder %s45, 5
      %p189 = por %p187, %p188
      %p190 = scmp.ne.s32.totalorder %s181, %s182
      %p191 = scmp.eq.s32.totalorder %s45, 0
      %p192 = por %p190, %p191
      %p193 = scmp.ne.s32.totalorder %s181, %s182
      %p194 = scmp.eq.s32.totalorder %s46, 5
      %p195 = por %p193, %p194
      %p197 = scmp.ne.s32.totalorder %s182, %s196
      %p198 = scmp.eq.s32.totalorder %s46, 0
      %p199 = por %p197, %p198
      %s201 = sadd.s32 %s200, 1
      %p204 = scmp.eq.s32.totalorder %s40, 5
      %p205 = scmp.ne.s32.totalorder %s200, %s202
      %p206 = scmp.eq.s32.totalorder %s40, 0
      %p207 = por %p205, %p206
      %p208 = scmp.ne.s32.totalorder %s200, %s202
      %p209 = scmp.eq.s32.totalorder %s45, 5
      %p210 = por %p208, %p209
      %p211 = scmp.ne.s32.totalorder %s202, %s203
      %p212 = scmp.eq.s32.totalorder %s45, 0
      %p213 = por %p211, %p212
      %p214 = scmp.ne.s32.totalorder %s202, %s203
      %p215 = scmp.eq.s32.totalorder %s46, 5
      %p216 = por %p214, %p215
      %p218 = scmp.ne.s32.totalorder %s203, %s217
      %p219 = scmp.eq.s32.totalorder %s46, 0
      %p220 = por %p218, %p219
      %s222 = sadd.s32 %s221, 1
      %p225 = scmp.eq.s32.totalorder %s40, 5
      %p226 = scmp.ne.s32.totalorder %s221, %s223
      %p227 = scmp.eq.s32.totalorder %s40, 0
      %p228 = por %p226, %p227
      %p229 = scmp.ne.s32.totalorder %s221, %s223
      %p230 = scmp.eq.s32.totalorder %s45, 5
      %p231 = por %p229, %p230
      %p232 = scmp.ne.s32.totalorder %s223, %s224
      %p233 = scmp.eq.s32.totalorder %s45, 0
      %p234 = por %p232, %p233
      %p235 = scmp.ne.s32.totalorder %s223, %s224
      %p236 = scmp.eq.s32.totalorder %s46, 5
      %p237 = por %p235, %p236
      %p239 = scmp.ne.s32.totalorder %s224, %s238
      %p240 = scmp.eq.s32.totalorder %s46, 0
      %p241 = por %p239, %p240
      %s243 = sadd.s32 %s242, 1
      %p246 = scmp.eq.s32.totalorder %s40, 5
      %p247 = scmp.ne.s32.totalorder %s242, %s244
      %p248 = scmp.eq.s32.totalorder %s40, 0
      %p249 = por %p247, %p248
      %p250 = scmp.ne.s32.totalorder %s242, %s244
      %p251 = scmp.eq.s32.totalorder %s45, 5
      %p252 = por %p250, %p251
      %p253 = scmp.ne.s32.totalorder %s244, %s245
      %p254 = scmp.eq.s32.totalorder %s45, 0
      %p255 = por %p253, %p254
      %p256 = scmp.ne.s32.totalorder %s244, %s245
      %p257 = scmp.eq.s32.totalorder %s46, 5
      %p258 = por %p256, %p257
      %p260 = scmp.ne.s32.totalorder %s245, %s259
      %p261 = scmp.eq.s32.totalorder %s46, 0
      %p262 = por %p260, %p261
      %s264 = sadd.s32 %s263, 1
      %p267 = scmp.eq.s32.totalorder %s40, 5
      %p268 = scmp.ne.s32.totalorder %s263, %s265
      %p269 = scmp.eq.s32.totalorder %s40, 0
      %p270 = por %p268, %p269
      %p271 = scmp.ne.s32.totalorder %s263, %s265
      %p272 = scmp.eq.s32.totalorder %s45, 5
      %p273 = por %p271, %p272
      %p274 = scmp.ne.s32.totalorder %s265, %s266
      %p275 = scmp.eq.s32.totalorder %s45, 0
      %p276 = por %p274, %p275
      %p277 = scmp.ne.s32.totalorder %s265, %s266
      %p278 = scmp.eq.s32.totalorder %s46, 5
      %p279 = por %p277, %p278
      %p281 = scmp.ne.s32.totalorder %s266, %s280
      %p282 = scmp.eq.s32.totalorder %s46, 0
      %p283 = por %p281, %p282
      %s285 = sadd.s32 %s284, 1
      %p288 = scmp.eq.s32.totalorder %s40, 5
      %p289 = scmp.ne.s32.totalorder %s284, %s286
      %p290 = scmp.eq.s32.totalorder %s40, 0
      %p291 = por %p289, %p290
      %p292 = scmp.ne.s32.totalorder %s284, %s286
      %p293 = scmp.eq.s32.totalorder %s45, 5
      %p294 = por %p292, %p293
      %p295 = scmp.ne.s32.totalorder %s286, %s287
      %p296 = scmp.eq.s32.totalorder %s45, 0
      %p297 = por %p295, %p296
      %p298 = scmp.ne.s32.totalorder %s286, %s287
      %p299 = scmp.eq.s32.totalorder %s46, 5
      %p300 = por %p298, %p299
      %p302 = scmp.ne.s32.totalorder %s287, %s301
      %p303 = scmp.eq.s32.totalorder %s46, 0
      %p304 = por %p302, %p303
      %s306 = sadd.s32 %s305, 1
      %p309 = scmp.eq.s32.totalorder %s40, 5
      %p310 = scmp.ne.s32.totalorder %s305, %s307
      %p311 = scmp.eq.s32.totalorder %s40, 0
      %p312 = por %p310, %p311
      %p313 = scmp.ne.s32.totalorder %s305, %s307
      %p314 = scmp.eq.s32.totalorder %s45, 5
      %p315 = por %p313, %p314
      %p316 = scmp.ne.s32.totalorder %s307, %s308
      %p317 = scmp.eq.s32.totalorder %s45, 0
      %p318 = por %p316, %p317
      %p319 = scmp.ne.s32.totalorder %s307, %s308
      %p320 = scmp.eq.s32.totalorder %s46, 5
      %p321 = por %p319, %p320
      %p323 = scmp.ne.s32.totalorder %s308, %s322
      %p324 = scmp.eq.s32.totalorder %s46, 0
      %p325 = por %p323, %p324
      %s327 = sadd.s32 %s326, 1
      %p330 = scmp.eq.s32.totalorder %s40, 5
      %p331 = scmp.ne.s32.totalorder %s326, %s328
      %p332 = scmp.eq.s32.totalorder %s40, 0
      %p333 = por %p331, %p332
      %p334 = scmp.ne.s32.totalorder %s326, %s328
      %p335 = scmp.eq.s32.totalorder %s45, 5
      %p336 = por %p334, %p335
      %p337 = scmp.ne.s32.totalorder %s328, %s329
      %p338 = scmp.eq.s32.totalorder %s45, 0
      %p339 = por %p337, %p338
      %p340 = scmp.ne.s32.totalorder %s328, %s329
      %p341 = scmp.eq.s32.totalorder %s46, 5
      %p342 = por %p340, %p341
      %p344 = scmp.ne.s32.totalorder %s329, %s343
      %p345 = scmp.eq.s32.totalorder %s46, 0
      %p346 = por %p344, %p345
      %s348 = sadd.s32 %s347, 1
      %p351 = scmp.eq.s32.totalorder %s40, 5
      %p352 = scmp.ne.s32.totalorder %s347, %s349
      %p353 = scmp.eq.s32.totalorder %s40, 0
      %p354 = por %p352, %p353
      %p355 = scmp.ne.s32.totalorder %s347, %s349
      %p356 = scmp.eq.s32.totalorder %s45, 5
      %p357 = por %p355, %p356
      %p358 = scmp.ne.s32.totalorder %s349, %s350
      %p359 = scmp.eq.s32.totalorder %s45, 0
      %p360 = por %p358, %p359
      %p361 = scmp.ne.s32.totalorder %s349, %s350
      %p362 = scmp.eq.s32.totalorder %s46, 5
      %p363 = por %p361, %p362
      %p365 = scmp.ne.s32.totalorder %s350, %s364
      %p366 = scmp.eq.s32.totalorder %s46, 0
      %p367 = por %p365, %p366
      %s369 = sadd.s32 %s368, 1
      %p372 = scmp.eq.s32.totalorder %s40, 5
      %p373 = scmp.ne.s32.totalorder %s368, %s370
      %p374 = scmp.eq.s32.totalorder %s40, 0
      %p375 = por %p373, %p374
      %p376 = scmp.ne.s32.totalorder %s368, %s370
      %p377 = scmp.eq.s32.totalorder %s45, 5
      %p378 = por %p376, %p377
      %p379 = scmp.ne.s32.totalorder %s370, %s371
      %p380 = scmp.eq.s32.totalorder %s45, 0
      %p381 = por %p379, %p380
      %p382 = scmp.ne.s32.totalorder %s370, %s371
      %p383 = scmp.eq.s32.totalorder %s46, 5
      %p384 = por %p382, %p383
      %p386 = scmp.ne.s32.totalorder %s371, %s385
      %p387 = scmp.eq.s32.totalorder %s46, 0
      %p388 = por %p386, %p387
      %s390 = sadd.s32 %s389, 1
      %p393 = scmp.eq.s32.totalorder %s40, 5
      %p394 = scmp.ne.s32.totalorder %s389, %s391
      %p395 = scmp.eq.s32.totalorder %s40, 0
      %p396 = por %p394, %p395
      %p397 = scmp.ne.s32.totalorder %s389, %s391
      %p398 = scmp.eq.s32.totalorder %s45, 5
      %p399 = por %p397, %p398
      %p400 = scmp.ne.s32.totalorder %s391, %s392
      %p401 = scmp.eq.s32.totalorder %s45, 0
      %p402 = por %p400, %p401
      %p403 = scmp.ne.s32.totalorder %s391, %s392
      %p404 = scmp.eq.s32.totalorder %s46, 5
      %p405 = por %p403, %p404
      %p407 = scmp.ne.s32.totalorder %s392, %s406
      %p408 = scmp.eq.s32.totalorder %s46, 0
      %p409 = por %p407, %p408
      %s411 = sadd.s32 %s410, 1
      %p414 = scmp.eq.s32.totalorder %s40, 5
      %p415 = scmp.ne.s32.totalorder %s410, %s412
      %p416 = scmp.eq.s32.totalorder %s40, 0
      %p417 = por %p415, %p416
      %p418 = scmp.ne.s32.totalorder %s410, %s412
      %p419 = scmp.eq.s32.totalorder %s45, 5
      %p420 = por %p418, %p419
      %p421 = scmp.ne.s32.totalorder %s412, %s413
      %p422 = scmp.eq.s32.totalorder %s45, 0
      %p423 = por %p421, %p422
      %p424 = scmp.ne.s32.totalorder %s412, %s413
      %p425 = scmp.eq.s32.totalorder %s46, 5
      %p426 = por %p424, %p425
      %p428 = scmp.ne.s32.totalorder %s413, %s427
      %p429 = scmp.eq.s32.totalorder %s46, 0
      %p430 = por %p428, %p429
      %s432 = sadd.s32 %s431, 1
      %p435 = scmp.eq.s32.totalorder %s40, 5
      %p436 = scmp.ne.s32.totalorder %s431, %s433
      %p437 = scmp.eq.s32.totalorder %s40, 0
      %p438 = por %p436, %p437
      %p439 = scmp.ne.s32.totalorder %s431, %s433
      %p440 = scmp.eq.s32.totalorder %s45, 5
      %p441 = por %p439, %p440
      %p442 = scmp.ne.s32.totalorder %s433, %s434
      %p443 = scmp.eq.s32.totalorder %s45, 0
      %p444 = por %p442, %p443
      %p445 = scmp.ne.s32.totalorder %s433, %s434
      %p446 = scmp.eq.s32.totalorder %s46, 5
      %p447 = por %p445, %p446
      %p449 = scmp.ne.s32.totalorder %s434, %s448
      %p450 = scmp.eq.s32.totalorder %s46, 0
      %p451 = por %p449, %p450
      %s453 = sadd.s32 %s452, 1
      %p456 = scmp.eq.s32.totalorder %s40, 5
      %p457 = scmp.ne.s32.totalorder %s452, %s454
      %p458 = scmp.eq.s32.totalorder %s40, 0
      %p459 = por %p457, %p458
      %p460 = scmp.ne.s32.totalorder %s452, %s454
      %p461 = scmp.eq.s32.totalorder %s45, 5
      %p462 = por %p460, %p461
      %p463 = scmp.ne.s32.totalorder %s454, %s455
      %p464 = scmp.eq.s32.totalorder %s45, 0
      %p465 = por %p463, %p464
      %p466 = scmp.ne.s32.totalorder %s454, %s455
      %p467 = scmp.eq.s32.totalorder %s46, 5
      %p468 = por %p466, %p467
      %p470 = scmp.ne.s32.totalorder %s455, %s469
      %p471 = scmp.eq.s32.totalorder %s46, 0
      %p472 = por %p470, %p471
      %s473 = ssub.s32 %s40, %s47
      %p474 = scmp.eq.s32.totalorder %s473, 0
      %s476 = sadd.s32 %s475, 1
      %s477 = scalar_select %p474, %s475, %s476
      %p480 = pneg %p474
      %p481 = scmp.eq.s32.totalorder %s40, 5
      %p482 = por %p480, %p481
      %p483 = scmp.ne.s32.totalorder %s475, %s478
      %p484 = scmp.eq.s32.totalorder %s40, 0
      %p485 = por %p483, %p484
      %p486 = scmp.ne.s32.totalorder %s475, %s478
      %p487 = scmp.eq.s32.totalorder %s45, 5
      %p488 = por %p486, %p487
      %p489 = scmp.ne.s32.totalorder %s478, %s479
      %p490 = scmp.eq.s32.totalorder %s45, 0
      %p491 = por %p489, %p490
      %p492 = scmp.ne.s32.totalorder %s478, %s479
      %p493 = scmp.eq.s32.totalorder %s46, 5
      %p494 = por %p492, %p493
      %p496 = scmp.ne.s32.totalorder %s479, %s495
      %p497 = scmp.eq.s32.totalorder %s46, 0
      %p498 = por %p496, %p497
      %p499 = scmp.le.s32.totalorder 1, %s40
      %p500 = scmp.lt.s32.totalorder %s40, 7
      %p501 = pnand %p499, %p500
      %p502 = pneg %p501
      // Predicated region
      $region9: #{tpu_custom_call.1} parent=5 // pred_check
        _
      $region10: #{tpu_custom_call.1} parent=5 // pred_check_branch
        %504 = sbr.rel (%p501) target = $region12
      $region11: #{tpu_custom_call.1} parent=5 // pred_region
        %s505 = ssub.s32 %s40, 1
        // Predicated region
        $region13: #{tpu_custom_call.1} parent=11 // pred_check
          %p506 = pneg %p87
        $region14: #{tpu_custom_call.1} parent=11 // pred_check_branch
          %508 = sbr.rel (%p506) target = $region16
        $region15: #{tpu_custom_call.1} parent=11 // pred_region
          %s510 = ssub.s32 512, 512
          %511 = vsyncadd [#allocation10], %s510
          %s512 = sshll.u32 [#allocation9], 4
          %s513 = int_to_ptr.vmem [resolvable:$true] %s512
          %518 = dma.hbm_to_vmem [thread:$0]  %s1, 512, %s513, [#allocation10], 64, 64, 4
        $region16: #{tpu_custom_call.1} parent=11 // pred_fallthru
          _
        // Predicated region
        $region17: #{tpu_custom_call.1} parent=11 // pred_check
          %p519 = pneg %p108
        $region18: #{tpu_custom_call.1} parent=11 // pred_check_branch
          %521 = sbr.rel (%p519) target = $region20
        $region19: #{tpu_custom_call.1} parent=11 // pred_region
          %s523 = ssub.s32 512, 512
          %524 = vsyncadd [#allocation10], %s523
          %s525 = sshll.u32 [#allocation11], 4
          %s526 = int_to_ptr.vmem [resolvable:$true] %s525
          %531 = dma.hbm_to_vmem [thread:$0]  %s2, 512, %s526, [#allocation10], 64, 64, 4
        $region20: #{tpu_custom_call.1} parent=11 // pred_fallthru
          _
        // Predicated region
        $region21: #{tpu_custom_call.1} parent=11 // pred_check
          %p532 = pneg %p129
        $region22: #{tpu_custom_call.1} parent=11 // pred_check_branch
          %534 = sbr.rel (%p532) target = $region24
        $region23: #{tpu_custom_call.1} parent=11 // pred_region
          %s536 = ssub.s32 512, 512
          %537 = vsyncadd [#allocation13], %s536
          %s538 = sshll.u32 [#allocation12], 4
          %s539 = int_to_ptr.vmem [resolvable:$true] %s538
          %544 = dma.hbm_to_vmem [thread:$0]  %s3, 512, %s539, [#allocation13], 64, 64, 4
        $region24: #{tpu_custom_call.1} parent=11 // pred_fallthru
          _
        // Predicated region
        $region25: #{tpu_custom_call.1} parent=11 // pred_check
          %p545 = pneg %p150
        $region26: #{tpu_custom_call.1} parent=11 // pred_check_branch
          %547 = sbr.rel (%p545) target = $region28
        $region27: #{tpu_custom_call.1} parent=11 // pred_region
          %s549 = ssub.s32 512, 512
          %550 = vsyncadd [#allocation13], %s549
          %s551 = sshll.u32 [#allocation14], 4
          %s552 = int_to_ptr.vmem [resolvable:$true] %s551
          %557 = dma.hbm_to_vmem [thread:$0]  %s4, 512, %s552, [#allocation13], 64, 64, 4
        $region28: #{tpu_custom_call.1} parent=11 // pred_fallthru
          _
        // Predicated region
        $region29: #{tpu_custom_call.1} parent=11 // pred_check
          %p558 = pneg %p171
        $region30: #{tpu_custom_call.1} parent=11 // pred_check_branch
          %560 = sbr.rel (%p558) target = $region32
        $region31: #{tpu_custom_call.1} parent=11 // pred_region
          _
        $region32: #{tpu_custom_call.1} parent=11 // pred_fallthru
          _
        // Predicated region
        $region33: #{tpu_custom_call.1} parent=11 // pred_check
          %p561 = pneg %p192
        $region34: #{tpu_custom_call.1} parent=11 // pred_check_branch
          %563 = sbr.rel (%p561) target = $region36
        $region35: #{tpu_custom_call.1} parent=11 // pred_region
          %s565 = ssub.s32 64, 64
          %566 = vsyncadd [#allocation16], %s565
          %s568 = sshll.u32 [#allocation15], 4
          %s569 = int_to_ptr.vmem [resolvable:$true] %s568
          %571 = dma.hbm_to_vmem [thread:$0]  %s6, 64, %s569, [#allocation16]
        $region36: #{tpu_custom_call.1} parent=11 // pred_fallthru
          _
        // Predicated region
        $region37: #{tpu_custom_call.1} parent=11 // pred_check
          %p572 = pneg %p213
        $region38: #{tpu_custom_call.1} parent=11 // pred_check_branch
          %574 = sbr.rel (%p572) target = $region40
        $region39: #{tpu_custom_call.1} parent=11 // pred_region
          %s576 = ssub.s32 64, 64
          %577 = vsyncadd [#allocation16], %s576
          %s579 = sshll.u32 [#allocation17], 4
          %s580 = int_to_ptr.vmem [resolvable:$true] %s579
          %582 = dma.hbm_to_vmem [thread:$0]  %s7, 64, %s580, [#allocation16]
        $region40: #{tpu_custom_call.1} parent=11 // pred_fallthru
          _
        // Predicated region
        $region41: #{tpu_custom_call.1} parent=11 // pred_check
          %p583 = pneg %p234
        $region42: #{tpu_custom_call.1} parent=11 // pred_check_branch
          %585 = sbr.rel (%p583) target = $region44
        $region43: #{tpu_custom_call.1} parent=11 // pred_region
          %s587 = ssub.s32 512, 512
          %588 = vsyncadd [#allocation19], %s587
          %s589 = sshll.u32 [#allocation18], 4
          %s590 = int_to_ptr.vmem [resolvable:$true] %s589
          %595 = dma.hbm_to_vmem [thread:$0]  %s8, 512, %s590, [#allocation19], 128, 128, 8
        $region44: #{tpu_custom_call.1} parent=11 // pred_fallthru
          _
        // Predicated region
        $region45: #{tpu_custom_call.1} parent=11 // pred_check
          %p596 = pneg %p255
        $region46: #{tpu_custom_call.1} parent=11 // pred_check_branch
          %598 = sbr.rel (%p596) target = $region48
        $region47: #{tpu_custom_call.1} parent=11 // pred_region
          %s600 = ssub.s32 16, 16
          %601 = vsyncadd [#allocation19], %s600
          %s603 = sshll.u32 [#allocation20], 4
          %s604 = int_to_ptr.vmem [resolvable:$true] %s603
          %606 = dma.hbm_to_vmem [thread:$0]  %s9, 16, %s604, [#allocation19]
        $region48: #{tpu_custom_call.1} parent=11 // pred_fallthru
          _
        // Predicated region
        $region49: #{tpu_custom_call.1} parent=11 // pred_check
          %p607 = pneg %p276
        $region50: #{tpu_custom_call.1} parent=11 // pred_check_branch
          %609 = sbr.rel (%p607) target = $region52
        $region51: #{tpu_custom_call.1} parent=11 // pred_region
          %s611 = ssub.s32 16, 16
          %612 = vsyncadd [#allocation22], %s611
          %s614 = sshll.u32 [#allocation21], 4
          %s615 = int_to_ptr.vmem [resolvable:$true] %s614
          %617 = dma.hbm_to_vmem [thread:$0]  %s10, 16, %s615, [#allocation22]
        $region52: #{tpu_custom_call.1} parent=11 // pred_fallthru
          _
        // Predicated region
        $region53: #{tpu_custom_call.1} parent=11 // pred_check
          %p618 = pneg %p297
        $region54: #{tpu_custom_call.1} parent=11 // pred_check_branch
          %620 = sbr.rel (%p618) target = $region56
        $region55: #{tpu_custom_call.1} parent=11 // pred_region
          %s622 = ssub.s32 256, 256
          %623 = vsyncadd [#allocation22], %s622
          %s624 = sshll.u32 [#allocation23], 4
          %s625 = int_to_ptr.vmem [resolvable:$true] %s624
          %630 = dma.hbm_to_vmem [thread:$0]  %s11, 256, %s625, [#allocation22], 64, 64, 4
        $region56: #{tpu_custom_call.1} parent=11 // pred_fallthru
          _
        // Predicated region
        $region57: #{tpu_custom_call.1} parent=11 // pred_check
          %p631 = pneg %p318
        $region58: #{tpu_custom_call.1} parent=11 // pred_check_branch
          %633 = sbr.rel (%p631) target = $region60
        $region59: #{tpu_custom_call.1} parent=11 // pred_region
          %s635 = ssub.s32 16, 16
          %636 = vsyncadd [#allocation25], %s635
          %s638 = sshll.u32 [#allocation24], 4
          %s639 = int_to_ptr.vmem [resolvable:$true] %s638
          %641 = dma.hbm_to_vmem [thread:$0]  %s12, 16, %s639, [#allocation25]
        $region60: #{tpu_custom_call.1} parent=11 // pred_fallthru
          _
        // Predicated region
        $region61: #{tpu_custom_call.1} parent=11 // pred_check
          %p642 = pneg %p339
        $region62: #{tpu_custom_call.1} parent=11 // pred_check_branch
          %644 = sbr.rel (%p642) target = $region64
        $region63: #{tpu_custom_call.1} parent=11 // pred_region
          %s646 = ssub.s32 16, 16
          %647 = vsyncadd [#allocation25], %s646
          %s649 = sshll.u32 [#allocation26], 4
          %s650 = int_to_ptr.vmem [resolvable:$true] %s649
          %652 = dma.hbm_to_vmem [thread:$0]  %s13, 16, %s650, [#allocation25]
        $region64: #{tpu_custom_call.1} parent=11 // pred_fallthru
          _
        // Predicated region
        $region65: #{tpu_custom_call.1} parent=11 // pred_check
          %p653 = pneg %p360
        $region66: #{tpu_custom_call.1} parent=11 // pred_check_branch
          %655 = sbr.rel (%p653) target = $region68
        $region67: #{tpu_custom_call.1} parent=11 // pred_region
          %s657 = ssub.s32 256, 256
          %658 = vsyncadd [#allocation28], %s657
          %s659 = sshll.u32 [#allocation27], 4
          %s660 = int_to_ptr.vmem [resolvable:$true] %s659
          %665 = dma.hbm_to_vmem [thread:$0]  %s14, 256, %s660, [#allocation28], 128, 128, 8
        $region68: #{tpu_custom_call.1} parent=11 // pred_fallthru
          _
        // Predicated region
        $region69: #{tpu_custom_call.1} parent=11 // pred_check
          %p666 = pneg %p381
        $region70: #{tpu_custom_call.1} parent=11 // pred_check_branch
          %668 = sbr.rel (%p666) target = $region72
        $region71: #{tpu_custom_call.1} parent=11 // pred_region
          _
        $region72: #{tpu_custom_call.1} parent=11 // pred_fallthru
          _
        // Predicated region
        $region73: #{tpu_custom_call.1} parent=11 // pred_check
          %p669 = pneg %p402
        $region74: #{tpu_custom_call.1} parent=11 // pred_check_branch
          %671 = sbr.rel (%p669) target = $region76
        $region75: #{tpu_custom_call.1} parent=11 // pred_region
          %s673 = ssub.s32 128, 128
          %674 = vsyncadd [#allocation28], %s673
          %s675 = sshll.u32 [#allocation29], 4
          %s676 = int_to_ptr.vmem [resolvable:$true] %s675
          %681 = dma.hbm_to_vmem [thread:$0]  %s16, 128, %s676, [#allocation28], 64, 64, 4
        $region76: #{tpu_custom_call.1} parent=11 // pred_fallthru
          _
        // Predicated region
        $region77: #{tpu_custom_call.1} parent=11 // pred_check
          %p682 = pneg %p423
        $region78: #{tpu_custom_call.1} parent=11 // pred_check_branch
          %684 = sbr.rel (%p682) target = $region80
        $region79: #{tpu_custom_call.1} parent=11 // pred_region
          %s686 = ssub.s32 256, 256
          %687 = vsyncadd [#allocation31], %s686
          %s688 = sshll.u32 [#allocation30], 4
          %s689 = int_to_ptr.vmem [resolvable:$true] %s688
          %694 = dma.hbm_to_vmem [thread:$0]  %s17, 256, %s689, [#allocation31], 64, 64, 4
        $region80: #{tpu_custom_call.1} parent=11 // pred_fallthru
          _
        // Predicated region
        $region81: #{tpu_custom_call.1} parent=11 // pred_check
          %p695 = pneg %p444
        $region82: #{tpu_custom_call.1} parent=11 // pred_check_branch
          %697 = sbr.rel (%p695) target = $region84
        $region83: #{tpu_custom_call.1} parent=11 // pred_region
          %s699 = ssub.s32 256, 256
          %700 = vsyncadd [#allocation31], %s699
          %s701 = sshll.u32 [#allocation32], 4
          %s702 = int_to_ptr.vmem [resolvable:$true] %s701
          %707 = dma.hbm_to_vmem [thread:$0]  %s18, 256, %s702, [#allocation31], 64, 64, 4
        $region84: #{tpu_custom_call.1} parent=11 // pred_fallthru
          _
        // Predicated region
        $region85: #{tpu_custom_call.1} parent=11 // pred_check
          %p708 = pneg %p465
        $region86: #{tpu_custom_call.1} parent=11 // pred_check_branch
          %710 = sbr.rel (%p708) target = $region88
        $region87: #{tpu_custom_call.1} parent=11 // pred_region
          _
        $region88: #{tpu_custom_call.1} parent=11 // pred_fallthru
          _
      $region12: #{tpu_custom_call.1} parent=5 // pred_fallthru
        _
      %p711 = scmp.lt.s32.totalorder %s40, 6
      // Predicated region
      $region89: #{tpu_custom_call.1} parent=5 // pred_check
        %p712 = pneg %p711
      $region90: #{tpu_custom_call.1} parent=5 // pred_check_branch
        %714 = sbr.rel (%p712) target = $region92
      $region91: #{tpu_custom_call.1} parent=5 // pred_region
        // Predicated region
        $region93: #{tpu_custom_call.1} parent=91 // pred_check
          %p715 = pneg %p60
        $region94: #{tpu_custom_call.1} parent=91 // pred_check_branch
          %717 = sbr.rel (%p715) target = $region96
        $region95: #{tpu_custom_call.1} parent=91 // pred_region
          %s718 = sand.u32 %s50, 1
          %s719 = scalar_lea.sflag [#allocation7], %s718
          %s720 = sand.u32 %s50, 1
          %s721 = smul.addr %s720, 2
          %s722 = scalar_lea.vmem [#allocation6], %s721
          %s724 = ssub.s32 32, 32
          %725 = vsyncadd %s719, %s724
          %s726 = smul.addr %s40, 32
          %s727 = scalar_lea.hbm %s0, %s726
          %s729 = sshll.u32 %s722, 4
          %s730 = int_to_ptr.vmem [resolvable:$true] %s729
          %732 = dma.hbm_to_vmem [thread:$0]  %s727, 32, %s730, %s719
        $region96: #{tpu_custom_call.1} parent=91 // pred_fallthru
          _
      $region92: #{tpu_custom_call.1} parent=5 // pred_fallthru
        _
      %p733 = scmp.le.s32.totalorder 1, %s40
      %p734 = scmp.lt.s32.totalorder %s40, 7
      %p735 = pnand %p733, %p734
      %p736 = pneg %p735
      // Predicated region
      $region97: #{tpu_custom_call.1} parent=5 // pred_check
        _
      $region98: #{tpu_custom_call.1} parent=5 // pred_check_branch
        %738 = sbr.rel (%p735) target = $region100
      $region99: #{tpu_custom_call.1} parent=5 // pred_region
        %s739 = ssub.s32 %s40, 1
        %s740 = sand.u32 %s53, 1
        %s741 = scalar_lea.sflag [#allocation7], %s740
        %s742 = sand.u32 %s53, 1
        %s743 = smul.addr %s742, 2
        %s744 = scalar_lea.vmem [#allocation6], %s743
        // Predicated region
        $region101: #{tpu_custom_call.1} parent=99 // pred_check
          %p745 = pneg %p66
        $region102: #{tpu_custom_call.1} parent=99 // pred_check_branch
          %747 = sbr.rel (%p745) target = $region104
        $region103: #{tpu_custom_call.1} parent=99 // pred_region
          %748 = dma.done %s741, 32
        $region104: #{tpu_custom_call.1} parent=99 // pred_fallthru
          _
        // Predicated region
        $region105: #{tpu_custom_call.1} parent=99 // pred_check
          %p749 = pneg %p87
        $region106: #{tpu_custom_call.1} parent=99 // pred_check_branch
          %751 = sbr.rel (%p749) target = $region108
        $region107: #{tpu_custom_call.1} parent=99 // pred_region
          %752 = dma.done [#allocation10], 512
        $region108: #{tpu_custom_call.1} parent=99 // pred_fallthru
          _
        // Predicated region
        $region109: #{tpu_custom_call.1} parent=99 // pred_check
          %p753 = pneg %p108
        $region110: #{tpu_custom_call.1} parent=99 // pred_check_branch
          %755 = sbr.rel (%p753) target = $region112
        $region111: #{tpu_custom_call.1} parent=99 // pred_region
          %756 = dma.done [#allocation10], 512
        $region112: #{tpu_custom_call.1} parent=99 // pred_fallthru
          _
        // Predicated region
        $region113: #{tpu_custom_call.1} parent=99 // pred_check
          %p757 = pneg %p129
        $region114: #{tpu_custom_call.1} parent=99 // pred_check_branch
          %759 = sbr.rel (%p757) target = $region116
        $region115: #{tpu_custom_call.1} parent=99 // pred_region
          %760 = dma.done [#allocation13], 512
        $region116: #{tpu_custom_call.1} parent=99 // pred_fallthru
          _
        // Predicated region
        $region117: #{tpu_custom_call.1} parent=99 // pred_check
          %p761 = pneg %p150
        $region118: #{tpu_custom_call.1} parent=99 // pred_check_branch
          %763 = sbr.rel (%p761) target = $region120
        $region119: #{tpu_custom_call.1} parent=99 // pred_region
          %764 = dma.done [#allocation13], 512
        $region120: #{tpu_custom_call.1} parent=99 // pred_fallthru
          _
        // Predicated region
        $region121: #{tpu_custom_call.1} parent=99 // pred_check
          %p765 = pneg %p192
        $region122: #{tpu_custom_call.1} parent=99 // pred_check_branch
          %767 = sbr.rel (%p765) target = $region124
        $region123: #{tpu_custom_call.1} parent=99 // pred_region
          %768 = dma.done [#allocation16], 64
        $region124: #{tpu_custom_call.1} parent=99 // pred_fallthru
          _
        // Predicated region
        $region125: #{tpu_custom_call.1} parent=99 // pred_check
          %p769 = pneg %p213
        $region126: #{tpu_custom_call.1} parent=99 // pred_check_branch
          %771 = sbr.rel (%p769) target = $region128
        $region127: #{tpu_custom_call.1} parent=99 // pred_region
          %772 = dma.done [#allocation16], 64
        $region128: #{tpu_custom_call.1} parent=99 // pred_fallthru
          _
        // Predicated region
        $region129: #{tpu_custom_call.1} parent=99 // pred_check
          %p773 = pneg %p234
        $region130: #{tpu_custom_call.1} parent=99 // pred_check_branch
          %775 = sbr.rel (%p773) target = $region132
        $region131: #{tpu_custom_call.1} parent=99 // pred_region
          %776 = dma.done [#allocation19], 512
        $region132: #{tpu_custom_call.1} parent=99 // pred_fallthru
          _
        // Predicated region
        $region133: #{tpu_custom_call.1} parent=99 // pred_check
          %p777 = pneg %p255
        $region134: #{tpu_custom_call.1} parent=99 // pred_check_branch
          %779 = sbr.rel (%p777) target = $region136
        $region135: #{tpu_custom_call.1} parent=99 // pred_region
          %780 = dma.done [#allocation19], 16
        $region136: #{tpu_custom_call.1} parent=99 // pred_fallthru
          _
        // Predicated region
        $region137: #{tpu_custom_call.1} parent=99 // pred_check
          %p781 = pneg %p276
        $region138: #{tpu_custom_call.1} parent=99 // pred_check_branch
          %783 = sbr.rel (%p781) target = $region140
        $region139: #{tpu_custom_call.1} parent=99 // pred_region
          %784 = dma.done [#allocation22], 16
        $region140: #{tpu_custom_call.1} parent=99 // pred_fallthru
          _
        // Predicated region
        $region141: #{tpu_custom_call.1} parent=99 // pred_check
          %p785 = pneg %p297
        $region142: #{tpu_custom_call.1} parent=99 // pred_check_branch
          %787 = sbr.rel (%p785) target = $region144
        $region143: #{tpu_custom_call.1} parent=99 // pred_region
          %788 = dma.done [#allocation22], 256
        $region144: #{tpu_custom_call.1} parent=99 // pred_fallthru
          _
        // Predicated region
        $region145: #{tpu_custom_call.1} parent=99 // pred_check
          %p789 = pneg %p318
        $region146: #{tpu_custom_call.1} parent=99 // pred_check_branch
          %791 = sbr.rel (%p789) target = $region148
        $region147: #{tpu_custom_call.1} parent=99 // pred_region
          %792 = dma.done [#allocation25], 16
        $region148: #{tpu_custom_call.1} parent=99 // pred_fallthru
          _
        // Predicated region
        $region149: #{tpu_custom_call.1} parent=99 // pred_check
          %p793 = pneg %p339
        $region150: #{tpu_custom_call.1} parent=99 // pred_check_branch
          %795 = sbr.rel (%p793) target = $region152
        $region151: #{tpu_custom_call.1} parent=99 // pred_region
          %796 = dma.done [#allocation25], 16
        $region152: #{tpu_custom_call.1} parent=99 // pred_fallthru
          _
        // Predicated region
        $region153: #{tpu_custom_call.1} parent=99 // pred_check
          %p797 = pneg %p360
        $region154: #{tpu_custom_call.1} parent=99 // pred_check_branch
          %799 = sbr.rel (%p797) target = $region156
        $region155: #{tpu_custom_call.1} parent=99 // pred_region
          %800 = dma.done [#allocation28], 256
        $region156: #{tpu_custom_call.1} parent=99 // pred_fallthru
          _
        // Predicated region
        $region157: #{tpu_custom_call.1} parent=99 // pred_check
          %p801 = pneg %p402
        $region158: #{tpu_custom_call.1} parent=99 // pred_check_branch
          %803 = sbr.rel (%p801) target = $region160
        $region159: #{tpu_custom_call.1} parent=99 // pred_region
          %804 = dma.done [#allocation28], 128
        $region160: #{tpu_custom_call.1} parent=99 // pred_fallthru
          _
        // Predicated region
        $region161: #{tpu_custom_call.1} parent=99 // pred_check
          %p805 = pneg %p423
        $region162: #{tpu_custom_call.1} parent=99 // pred_check_branch
          %807 = sbr.rel (%p805) target = $region164
        $region163: #{tpu_custom_call.1} parent=99 // pred_region
          %808 = dma.done [#allocation31], 256
        $region164: #{tpu_custom_call.1} parent=99 // pred_fallthru
          _
        // Predicated region
        $region165: #{tpu_custom_call.1} parent=99 // pred_check
          %p809 = pneg %p444
        $region166: #{tpu_custom_call.1} parent=99 // pred_check_branch
          %811 = sbr.rel (%p809) target = $region168
        $region167: #{tpu_custom_call.1} parent=99 // pred_region
          %812 = dma.done [#allocation31], 256
        $region168: #{tpu_custom_call.1} parent=99 // pred_fallthru
          _
        %s813 = sand.u32 %s53, 1
        %s814 = scalar_lea.sflag [#allocation7], %s813
        %s815 = sand.u32 %s53, 1
        %s816 = smul.addr %s815, 2
        %s817 = scalar_lea.vmem [#allocation6], %s816
        %p818 = pneg %p66
        %p819 = pneg %p63
        %p820 = pneg %p87
        %p821 = pneg %p84
        %p822 = pneg %p108
        %p823 = pneg %p105
        %p824 = pneg %p129
        %p825 = pneg %p126
        %p826 = pneg %p150
        %p827 = pneg %p147
        %p828 = pneg %p171
        %p829 = pneg %p168
        %p830 = pneg %p192
        %p831 = pneg %p189
        %p832 = pneg %p213
        %p833 = pneg %p210
        %p834 = pneg %p234
        %p835 = pneg %p231
        %p836 = pneg %p255
        %p837 = pneg %p252
        %p838 = pneg %p276
        %p839 = pneg %p273
        %p840 = pneg %p297
        %p841 = pneg %p294
        %p842 = pneg %p318
        %p843 = pneg %p315
        %p844 = pneg %p339
        %p845 = pneg %p336
        %p846 = pneg %p360
        %p847 = pneg %p357
        %p848 = pneg %p381
        %p849 = pneg %p378
        %p850 = pneg %p402
        %p851 = pneg %p399
        %p852 = pneg %p423
        %p853 = pneg %p420
        %p854 = pneg %p444
        %p855 = pneg %p441
        %p856 = pneg %p465
        %p857 = pneg %p462
        %p858 = pneg %p491
        %p859 = pneg %p488
        %s860 = sand.u32 %s478, 1
        %s861 = scalar_lea.sflag [#allocation8], %s860
        %s862 = sand.u32 %s478, 1
        %s863 = smul.addr %s862, 4
        %s864 = scalar_lea.vmem [#allocation33], %s863
        %p866 = scmp.eq.s32.totalorder %s45, 0
        // Predicated region
        $region169: #{tpu_custom_call.1} parent=99 // pred_check
          %p867 = pneg %p866
        $region170: #{tpu_custom_call.1} parent=99 // pred_check_branch
          %869 = sbr.rel (%p867) target = $region172
        $region171: #{tpu_custom_call.1} parent=99 // pred_region
          %v870 = vld [vmem:[#allocation15] sm:$0xf]
          %vm871 = vcmask 257024
          %872 = vst.msk [vmem:[#allocation2] sm:$0xf] %vm871, %v870
          %v873 = vld [vmem:[#allocation17] sm:$0xf]
          %874 = vst.msk [vmem:[#allocation3] sm:$0xf] %vm871, %v873
          %v875 = vld [vmem:[#allocation15] sm:$0xf]
          %876 = vst.msk [vmem:[#allocation4] sm:$0xf] %vm871, %v875
          %v877 = vld [vmem:[#allocation17] sm:$0xf]
          %878 = vst.msk [vmem:[#allocation5] sm:$0xf] %vm871, %v877
        $region172: #{tpu_custom_call.1} parent=99 // pred_fallthru
          _
        %s879 = scvt.s32.f32 %s45
        %v880 = vld [vmem:[%s5] sm:$0xf]
        %v881 = vstv %s879
        %vm882 = vcmp.gt.f32.partialorder %v880, %v881
        %v883 = vsel %vm882, 1, 0
        %v884 = vcvt.s32.f32 %v883
        %vm885 = vcmask 3072
        %v886 = vsel %vm885, %v884, 0.0
        %887 = vadd.xlane.f32.xlu0 %v886
        %v888 = vpop.xlane.xlu0 %887
        %v889 = vrot.slane %v888, 4
        %v890 = vadd.f32 %v888, %v889
        %v891 = vrot.slane %v890, 2
        %v892 = vadd.f32 %v890, %v891
        %v893 = vrot.slane %v892, 1
        %v894 = vadd.f32 %v892, %v893
        %s895 = vtos %v894
        %v896 = vld [vmem:[#allocation2] sm:$0xf]
        %v897 = vld [vmem:[#allocation4] sm:$0xf]
        %v898 = vpack.c.bf16 %v896, %v896
        %v899 = vpack.c.bf16 %v897, %v897
        %v900 = vld [vmem:[#allocation18] sm:$0xff]
        %v901 = vld [vmem:[#allocation18 + $0x8] sm:$0xff]
        %v902 = vld [vmem:[#allocation18 + $0x10] sm:$0xff]
        %v903 = vld [vmem:[#allocation18 + $0x18] sm:$0xff]
        %v908 = vunpack.c.l.b16 %v900
        %v909 = vunpack.c.h.b16 %v900
        %v910 = vunpack.c.l.b16 %v901
        %v911 = vunpack.c.h.b16 %v901
        %v912 = vunpack.c.l.b16 %v902
        %v913 = vunpack.c.h.b16 %v902
        %v914 = vunpack.c.l.b16 %v903
        %v915 = vunpack.c.h.b16 %v903
        %v916 = vpack.c.b16 %v910, %v908
        %v917 = vpack.c.b16 %v911, %v909
        %v918 = vpack.c.b16 %v914, %v912
        %v919 = vpack.c.b16 %v915, %v913
        %vm924 = vcmask 261120
        %v926 = vsel %vm924, %v898, 0
        %928 = vmatprep.subr.bf16.mxu0 0
        %929 = vmatpush1.bf16.msra.mxu0 0
        %930 = vmatprep.subr.bf16.mxu0 0
        %931 = vmatpush1.bf16.msra.mxu0 0
        %932 = vmatprep.subr.bf16.mxu0 0
        %933 = vmatpush1.bf16.msra.mxu0 0
        %934 = vmatprep.subr.bf16.mxu0 0
        %935 = vmatpush1.bf16.msra.mxu0 0
        %936 = vmatprep.subr.bf16.mxu0 0
        %937 = vmatpush1.bf16.msra.mxu0 0
        %938 = vmatprep.subr.bf16.mxu0 0
        %939 = vmatpush1.bf16.msra.mxu0 0
        %940 = vmatprep.subr.bf16.mxu0 %v919
        %941 = vmatpush1.bf16.msra.mxu0 %v918
        %942 = vmatprep.subr.bf16.mxu0 %v917
        %943 = vmatpush1.bf16.msra.mxu0 %v916
        %944 = vmatprep.subr.bf16.mxu0 0
        %945 = vmatpush2.bf16.msra.mxu0 0
        %946 = vmatprep.subr.bf16.mxu0 0
        %947 = vmatpush2.bf16.msra.mxu0 0
        %948 = vmatprep.subr.bf16.mxu0 0
        %949 = vmatpush2.bf16.msra.mxu0 0
        %950 = vmatprep.subr.bf16.mxu0 0
        %951 = vmatpush2.bf16.msra.mxu0 0
        %952 = vmatprep.subr.bf16.mxu0 0
        %953 = vmatpush2.bf16.msra.mxu0 0
        %954 = vmatprep.subr.bf16.mxu0 0
        %955 = vmatpush2.bf16.msra.mxu0 0
        %956 = vmatprep.subr.bf16.mxu0 0
        %957 = vmatpush2.bf16.msra.mxu0 0
        %958 = vmatprep.subr.bf16.mxu0 0
        %959 = vmatpush2.bf16.msra.mxu0 0
        %960 = vmatprep.mubr.bf16.mxu0 0
        %961 = vmatmul.mubr.bf16.gmra.mxu0 %v926
        %v962 = vpop.f32.mrf.mxu0
        %v963 = vadd.f32 0.0, %v962
        %v964 = vpop.f32.mrf.mxu0
        %v965 = vadd.f32 0.0, %v964
        %v966 = vpop.f32.mrf.mxu0
        %v967 = vpop.f32.mrf.mxu0
        %968 = vdwg.mxu0
        %v969 = vld [vmem:[%s15] sm:$0xff]
        %v970 = vld [vmem:[%s15 + $0x8] sm:$0xff]
        %v971 = vld [vmem:[%s15 + $0x10] sm:$0xff]
        %v972 = vld [vmem:[%s15 + $0x18] sm:$0xff]
        %v977 = vunpack.c.l.b16 %v969
        %v978 = vunpack.c.h.b16 %v969
        %v979 = vunpack.c.l.b16 %v970
        %v980 = vunpack.c.h.b16 %v970
        %v981 = vunpack.c.l.b16 %v971
        %v982 = vunpack.c.h.b16 %v971
        %v983 = vunpack.c.l.b16 %v972
        %v984 = vunpack.c.h.b16 %v972
        %v985 = vpack.c.b16 %v979, %v977
        %v986 = vpack.c.b16 %v980, %v978
        %v987 = vpack.c.b16 %v983, %v981
        %v988 = vpack.c.b16 %v984, %v982
        %v994 = vsel %vm924, %v899, 0
        %996 = vmatprep.subr.bf16.mxu0 0
        %997 = vmatpush1.bf16.msra.mxu0 0
        %998 = vmatprep.subr.bf16.mxu0 0
        %999 = vmatpush1.bf16.msra.mxu0 0
        %1000 = vmatprep.subr.bf16.mxu0 0
        %1001 = vmatpush1.bf16.msra.mxu0 0
        %1002 = vmatprep.subr.bf16.mxu0 0
        %1003 = vmatpush1.bf16.msra.mxu0 0
        %1004 = vmatprep.subr.bf16.mxu0 0
        %1005 = vmatpush1.bf16.msra.mxu0 0
        %1006 = vmatprep.subr.bf16.mxu0 0
        %1007 = vmatpush1.bf16.msra.mxu0 0
        %1008 = vmatprep.subr.bf16.mxu0 %v988
        %1009 = vmatpush1.bf16.msra.mxu0 %v987
        %1010 = vmatprep.subr.bf16.mxu0 %v986
        %1011 = vmatpush1.bf16.msra.mxu0 %v985
        %1012 = vmatprep.subr.bf16.mxu0 0
        %1013 = vmatpush2.bf16.msra.mxu0 0
        %1014 = vmatprep.subr.bf16.mxu0 0
        %1015 = vmatpush2.bf16.msra.mxu0 0
        %1016 = vmatprep.subr.bf16.mxu0 0
        %1017 = vmatpush2.bf16.msra.mxu0 0
        %1018 = vmatprep.subr.bf16.mxu0 0
        %1019 = vmatpush2.bf16.msra.mxu0 0
        %1020 = vmatprep.subr.bf16.mxu0 0
        %1021 = vmatpush2.bf16.msra.mxu0 0
        %1022 = vmatprep.subr.bf16.mxu0 0
        %1023 = vmatpush2.bf16.msra.mxu0 0
        %1024 = vmatprep.subr.bf16.mxu0 0
        %1025 = vmatpush2.bf16.msra.mxu0 0
        %1026 = vmatprep.subr.bf16.mxu0 0
        %1027 = vmatpush2.bf16.msra.mxu0 0
        %1028 = vmatprep.mubr.bf16.mxu0 0
        %1029 = vmatmul.mubr.bf16.gmra.mxu0 %v994
        %v1030 = vpop.f32.mrf.mxu0
        %v1031 = vadd.f32 0.0, %v1030
        %v1032 = vpop.f32.mrf.mxu0
        %v1033 = vadd.f32 0.0, %v1032
        %v1034 = vpop.f32.mrf.mxu0
        %v1035 = vpop.f32.mrf.mxu0
        %1036 = vdwg.mxu0
        %v1037 = vld [vmem:[#allocation20] sm:$0x1]
        %v1039 = vlaneseq
        %v1040 = vshrl.u32 %v1039, 7
        %v1041 = vsub.s32 0, %v1040
        %v1042 = vrot.slane %v1037, %v1041
        %v1044 = vadd.f32 %v963, %v1042
        %v1045 = vld [vmem:[#allocation26] sm:$0x1]
        %v1047 = vlaneseq
        %v1048 = vshrl.u32 %v1047, 7
        %v1049 = vsub.s32 0, %v1048
        %v1050 = vrot.slane %v1045, %v1049
        %1051 = vrot.lane.b32.xlu0 %v1050, 32
        %v1052 = vpop.permute.xlu0 %1051
        %v1054 = vadd.f32 %v963, %v1052
        %v1055 = vld [vmem:[#allocation11] sm:$0xf]
        %v1056 = vld [vmem:[#allocation11 + $0x4] sm:$0xf]
        %v1057 = vld [vmem:[#allocation11 + $0x8] sm:$0xf]
        %v1058 = vld [vmem:[#allocation11 + $0xc] sm:$0xf]
        %v1059 = vld [vmem:[#allocation11 + $0x10] sm:$0xf]
        %v1060 = vld [vmem:[#allocation11 + $0x14] sm:$0xf]
        %v1061 = vld [vmem:[#allocation11 + $0x18] sm:$0xf]
        %v1062 = vld [vmem:[#allocation11 + $0x1c] sm:$0xf]
        %v1065 = vunpack.c.l.s4 1966171168
        %v1066 = vunpack.c.0.s8 %v1065
        %v1067 = vlaneseq
        %v1068 = vshrl.u32 %v1067, 7
        %v1069 = vsub.s32 %v1066, %v1068
        %v1070 = vrot.slane %v1044, %v1069
        %v1071 = vcombine.high %v1070, %v1070
        %v1073 = vunpack.c.l.s4 1966171168
        %v1074 = vunpack.c.0.s8 %v1073
        %v1075 = vlaneseq
        %v1076 = vshrl.u32 %v1075, 7
        %v1077 = vsub.s32 %v1074, %v1076
        %v1078 = vrot.slane %v1070, %v1077
        %v1080 = vunpack.c.l.s4 1966171168
        %v1081 = vunpack.c.0.s8 %v1080
        %v1082 = vlaneseq
        %v1083 = vshrl.u32 %v1082, 7
        %v1084 = vsub.s32 %v1081, %v1083
        %v1085 = vrot.slane %v1071, %v1084
        %v1086 = vcombine.high %v1078, %v1078
        %v1087 = vcombine.high %v1085, %v1085
        %v1088 = vunpack.c.l.bf16 %v1055
        %v1089 = vunpack.c.l.bf16 %v1056
        %v1090 = vunpack.c.l.bf16 %v1057
        %v1091 = vunpack.c.l.bf16 %v1058
        %v1092 = vunpack.c.l.bf16 %v1059
        %v1093 = vunpack.c.l.bf16 %v1060
        %v1094 = vunpack.c.l.bf16 %v1061
        %v1095 = vunpack.c.l.bf16 %v1062
        %v1096 = vlaneseq
        %v1097 = vshrl.u32 %v1096, 7
        %v1098 = vsub.s32 0, %v1097
        %v1099 = vrot.slane %v1078, %v1098
        %v1100 = vlaneseq
        %v1101 = vshrl.u32 %v1100, 7
        %v1102 = vsub.s32 0, %v1101
        %v1103 = vrot.slane %v1085, %v1102
        %v1104 = vlaneseq
        %v1105 = vshrl.u32 %v1104, 7
        %v1106 = vsub.s32 0, %v1105
        %v1107 = vrot.slane %v1086, %v1106
        %v1108 = vlaneseq
        %v1109 = vshrl.u32 %v1108, 7
        %v1110 = vsub.s32 0, %v1109
        %v1111 = vrot.slane %v1087, %v1110
        %v1116 = vadd.f32 %v1088, %v1099
        %v1117 = vadd.f32 %v1089, %v1099
        %v1118 = vadd.f32 %v1090, %v1103
        %v1119 = vadd.f32 %v1091, %v1103
        %v1120 = vadd.f32 %v1092, %v1107
        %v1121 = vadd.f32 %v1093, %v1107
        %v1122 = vadd.f32 %v1094, %v1111
        %v1123 = vadd.f32 %v1095, %v1111
        %v1124 = vmax.f32 %v1116, 0.0
        %v1125 = vmax.f32 %v1117, 0.0
        %v1126 = vmax.f32 %v1118, 0.0
        %v1127 = vmax.f32 %v1119, 0.0
        %v1128 = vmax.f32 %v1120, 0.0
        %v1129 = vmax.f32 %v1121, 0.0
        %v1130 = vmax.f32 %v1122, 0.0
        %v1131 = vmax.f32 %v1123, 0.0
        %v1132 = vld [vmem:[#allocation21] sm:$0x1]
        %v1134 = vlaneseq
        %v1135 = vshrl.u32 %v1134, 7
        %v1136 = vsub.s32 0, %v1135
        %v1137 = vrot.slane %v1132, %v1136
        %v1139 = vmul.f32 %v1124, %v1137
        %v1140 = vmul.f32 %v1125, %v1137
        %v1141 = vmul.f32 %v1126, %v1137
        %v1142 = vmul.f32 %v1127, %v1137
        %v1143 = vmul.f32 %v1128, %v1137
        %v1144 = vmul.f32 %v1129, %v1137
        %v1145 = vmul.f32 %v1130, %v1137
        %v1146 = vmul.f32 %v1131, %v1137
        %v1147 = vsel %vm924, %v1139, 0.0
        %1148 = vadd.xlane.f32.xlu0 %v1147
        %v1149 = vpop.xlane.xlu0 %1148
        %v1150 = vsel %vm924, %v1140, 0.0
        %1151 = vadd.xlane.f32.xlu0 %v1150
        %v1152 = vpop.xlane.xlu0 %1151
        %v1153 = vsel %vm924, %v1141, 0.0
        %1154 = vadd.xlane.f32.xlu0 %v1153
        %v1155 = vpop.xlane.xlu0 %1154
        %v1156 = vsel %vm924, %v1142, 0.0
        %1157 = vadd.xlane.f32.xlu0 %v1156
        %v1158 = vpop.xlane.xlu0 %1157
        %v1159 = vsel %vm924, %v1143, 0.0
        %1160 = vadd.xlane.f32.xlu0 %v1159
        %v1161 = vpop.xlane.xlu0 %1160
        %v1162 = vsel %vm924, %v1144, 0.0
        %1163 = vadd.xlane.f32.xlu0 %v1162
        %v1164 = vpop.xlane.xlu0 %1163
        %v1165 = vsel %vm924, %v1145, 0.0
        %1166 = vadd.xlane.f32.xlu0 %v1165
        %v1167 = vpop.xlane.xlu0 %1166
        %v1168 = vsel %vm924, %v1146, 0.0
        %1169 = vadd.xlane.f32.xlu0 %v1168
        %v1170 = vpop.xlane.xlu0 %1169
        %v1179 = vlaneseq
        %v1180 = vand.u32 %v1179, 127
        %v1181 = vlaneseq
        %v1182 = vshrl.u32 %v1181, 7
        %v1183 = vsub.s32 %v1180, %v1182
        %v1184 = vrot.slane %v1149, %v1183
        %v1185 = vadd.s32 %v1180, 4294967288
        %v1186 = vlaneseq
        %v1187 = vshrl.u32 %v1186, 7
        %v1188 = vsub.s32 %v1185, %v1187
        %v1189 = vrot.slane %v1152, %v1188
        %vm1190 = vcmask 130112
        %v1191 = vsel %vm1190, %v1189, %v1184
        %v1192 = vlaneseq
        %v1193 = vshrl.u32 %v1192, 7
        %v1194 = vsub.s32 %v1180, %v1193
        %v1195 = vrot.slane %v1155, %v1194
        %v1196 = vlaneseq
        %v1197 = vshrl.u32 %v1196, 7
        %v1198 = vsub.s32 %v1185, %v1197
        %v1199 = vrot.slane %v1158, %v1198
        %v1200 = vsel %vm1190, %v1199, %v1195
        %v1201 = vlaneseq
        %v1202 = vshrl.u32 %v1201, 7
        %v1203 = vsub.s32 %v1180, %v1202
        %v1204 = vrot.slane %v1161, %v1203
        %v1205 = vlaneseq
        %v1206 = vshrl.u32 %v1205, 7
        %v1207 = vsub.s32 %v1185, %v1206
        %v1208 = vrot.slane %v1164, %v1207
        %v1209 = vsel %vm1190, %v1208, %v1204
        %v1210 = vlaneseq
        %v1211 = vshrl.u32 %v1210, 7
        %v1212 = vsub.s32 %v1180, %v1211
        %v1213 = vrot.slane %v1167, %v1212
        %v1214 = vlaneseq
        %v1215 = vshrl.u32 %v1214, 7
        %v1216 = vsub.s32 %v1185, %v1215
        %v1217 = vrot.slane %v1170, %v1216
        %v1218 = vsel %vm1190, %v1217, %v1213
        %vm1219 = vcmask 1041409
        %v1220 = vsel %vm1219, %v1200, %v1191
        %vm1221 = vcmask 1042434
        %v1222 = vsel %vm1221, %v1209, %v1220
        %vm1223 = vcmask 1043459
        %v1224 = vsel %vm1223, %v1218, %v1222
        %vm1226 = vcmask 125952
        %v1227 = vsel %vm1226, %v1224, -inf
        %1228 = vmax.xlane.f32.xlu0 %v1227
        %v1229 = vpop.xlane.xlu0 %1228
        %v1231 = vlaneseq
        %v1232 = vshrl.u32 %v1231, 7
        %v1233 = vsub.s32 0, %v1232
        %v1234 = vrot.slane %v1229, %v1233
        %v1235 = vlaneseq
        %v1236 = vshrl.u32 %v1235, 7
        %v1237 = vsub.s32 1, %v1236
        %v1238 = vrot.slane %v1229, %v1237
        %v1239 = vlaneseq
        %v1240 = vshrl.u32 %v1239, 7
        %v1241 = vsub.s32 2, %v1240
        %v1242 = vrot.slane %v1229, %v1241
        %v1243 = vlaneseq
        %v1244 = vshrl.u32 %v1243, 7
        %v1245 = vsub.s32 3, %v1244
        %v1246 = vrot.slane %v1229, %v1245
        %v1251 = vsub.f32 %v1149, %v1234
        %v1252 = vsub.f32 %v1152, %v1234
        %v1253 = vsub.f32 %v1155, %v1238
        %v1254 = vsub.f32 %v1158, %v1238
        %v1255 = vsub.f32 %v1161, %v1242
        %v1256 = vsub.f32 %v1164, %v1242
        %v1257 = vsub.f32 %v1167, %v1246
        %v1258 = vsub.f32 %v1170, %v1246
        %v1259 = vmul.f32 %v1251, 1.442695
        %v1260 = vpow.pop %v1259
        %v1261 = vmul.f32 %v1252, 1.442695
        %v1262 = vpow.pop %v1261
        %v1263 = vmul.f32 %v1253, 1.442695
        %v1264 = vpow.pop %v1263
        %v1265 = vmul.f32 %v1254, 1.442695
        %v1266 = vpow.pop %v1265
        %v1267 = vmul.f32 %v1255, 1.442695
        %v1268 = vpow.pop %v1267
        %v1269 = vmul.f32 %v1256, 1.442695
        %v1270 = vpow.pop %v1269
        %v1271 = vmul.f32 %v1257, 1.442695
        %v1272 = vpow.pop %v1271
        %v1273 = vmul.f32 %v1258, 1.442695
        %v1274 = vpow.pop %v1273
        %1283 = vset.pattern.permute.xlu0 0
        %1284 = vperm.xlu0 %1283, %v1260
        %v1285 = vpop.permute.xlu0 %1284
        %1286 = vset.pattern.permute.xlu0 0
        %1287 = vperm.xlu0 %1286, %v1262
        %v1288 = vpop.permute.xlu0 %1287
        %1289 = vset.pattern.permute.xlu0 0
        %1290 = vperm.xlu0 %1289, %v1264
        %v1291 = vpop.permute.xlu0 %1290
        %1292 = vset.pattern.permute.xlu0 0
        %1293 = vperm.xlu0 %1292, %v1266
        %v1294 = vpop.permute.xlu0 %1293
        %1295 = vset.pattern.permute.xlu0 0
        %1296 = vperm.xlu0 %1295, %v1268
        %v1297 = vpop.permute.xlu0 %1296
        %1298 = vset.pattern.permute.xlu0 0
        %1299 = vperm.xlu0 %1298, %v1270
        %v1300 = vpop.permute.xlu0 %1299
        %1301 = vset.pattern.permute.xlu0 0
        %1302 = vperm.xlu0 %1301, %v1272
        %v1303 = vpop.permute.xlu0 %1302
        %1304 = vset.pattern.permute.xlu0 0
        %1305 = vperm.xlu0 %1304, %v1274
        %v1306 = vpop.permute.xlu0 %1305
        %v1307 = vlaneseq
        %v1308 = vshrl.u32 %v1307, 7
        %v1309 = vsub.s32 %v1180, %v1308
        %v1310 = vrot.slane %v1285, %v1309
        %v1311 = vlaneseq
        %v1312 = vshrl.u32 %v1311, 7
        %v1313 = vsub.s32 %v1185, %v1312
        %v1314 = vrot.slane %v1288, %v1313
        %v1315 = vsel %vm1190, %v1314, %v1310
        %v1316 = vlaneseq
        %v1317 = vshrl.u32 %v1316, 7
        %v1318 = vsub.s32 %v1180, %v1317
        %v1319 = vrot.slane %v1291, %v1318
        %v1320 = vlaneseq
        %v1321 = vshrl.u32 %v1320, 7
        %v1322 = vsub.s32 %v1185, %v1321
        %v1323 = vrot.slane %v1294, %v1322
        %v1324 = vsel %vm1190, %v1323, %v1319
        %v1325 = vlaneseq
        %v1326 = vshrl.u32 %v1325, 7
        %v1327 = vsub.s32 %v1180, %v1326
        %v1328 = vrot.slane %v1297, %v1327
        %v1329 = vlaneseq
        %v1330 = vshrl.u32 %v1329, 7
        %v1331 = vsub.s32 %v1185, %v1330
        %v1332 = vrot.slane %v1300, %v1331
        %v1333 = vsel %vm1190, %v1332, %v1328
        %v1334 = vlaneseq
        %v1335 = vshrl.u32 %v1334, 7
        %v1336 = vsub.s32 %v1180, %v1335
        %v1337 = vrot.slane %v1303, %v1336
        %v1338 = vlaneseq
        %v1339 = vshrl.u32 %v1338, 7
        %v1340 = vsub.s32 %v1185, %v1339
        %v1341 = vrot.slane %v1306, %v1340
        %v1342 = vsel %vm1190, %v1341, %v1337
        %v1343 = vsel %vm1219, %v1324, %v1315
        %v1344 = vsel %vm1221, %v1333, %v1343
        %v1345 = vsel %vm1223, %v1342, %v1344
        %v1347 = vsel %vm1226, %v1345, 0.0
        %1348 = vadd.xlane.f32.xlu0 %v1347
        %v1349 = vpop.xlane.xlu0 %1348
        %v1350 = vrcp.pop %v1349
        %v1352 = vlaneseq
        %v1353 = vshrl.u32 %v1352, 7
        %v1354 = vsub.s32 0, %v1353
        %v1355 = vrot.slane %v1350, %v1354
        %v1356 = vlaneseq
        %v1357 = vshrl.u32 %v1356, 7
        %v1358 = vsub.s32 1, %v1357
        %v1359 = vrot.slane %v1350, %v1358
        %v1360 = vlaneseq
        %v1361 = vshrl.u32 %v1360, 7
        %v1362 = vsub.s32 2, %v1361
        %v1363 = vrot.slane %v1350, %v1362
        %v1364 = vlaneseq
        %v1365 = vshrl.u32 %v1364, 7
        %v1366 = vsub.s32 3, %v1365
        %v1367 = vrot.slane %v1350, %v1366
        %v1372 = vmul.f32 %v1260, %v1355
        %v1373 = vmul.f32 %v1262, %v1355
        %v1374 = vmul.f32 %v1264, %v1359
        %v1375 = vmul.f32 %v1266, %v1359
        %v1376 = vmul.f32 %v1268, %v1363
        %v1377 = vmul.f32 %v1270, %v1363
        %v1378 = vmul.f32 %v1272, %v1367
        %v1379 = vmul.f32 %v1274, %v1367
        %v1380 = vld [vmem:[#allocation9] sm:$0xf]
        %v1381 = vld [vmem:[#allocation9 + $0x4] sm:$0xf]
        %v1382 = vld [vmem:[#allocation9 + $0x8] sm:$0xf]
        %v1383 = vld [vmem:[#allocation9 + $0xc] sm:$0xf]
        %v1384 = vld [vmem:[#allocation9 + $0x10] sm:$0xf]
        %v1385 = vld [vmem:[#allocation9 + $0x14] sm:$0xf]
        %v1386 = vld [vmem:[#allocation9 + $0x18] sm:$0xf]
        %v1387 = vld [vmem:[#allocation9 + $0x1c] sm:$0xf]
        %v1388 = vunpack.c.l.bf16 %v1380
        %v1389 = vunpack.c.l.bf16 %v1381
        %v1390 = vunpack.c.l.bf16 %v1382
        %v1391 = vunpack.c.l.bf16 %v1383
        %v1392 = vunpack.c.l.bf16 %v1384
        %v1393 = vunpack.c.l.bf16 %v1385
        %v1394 = vunpack.c.l.bf16 %v1386
        %v1395 = vunpack.c.l.bf16 %v1387
        %1397 = vset.pattern.permute.xlu0 0
        %1398 = vperm.xlu0 %1397, %v1372
        %v1399 = vpop.permute.xlu0 %1398
        %1402 = vset.pattern.permute.xlu0 0
        %1403 = vperm.xlu0 %1402, %v1373
        %v1404 = vpop.permute.xlu0 %1403
        %1407 = vset.pattern.permute.xlu0 0
        %1408 = vperm.xlu0 %1407, %v1374
        %v1409 = vpop.permute.xlu0 %1408
        %1412 = vset.pattern.permute.xlu0 0
        %1413 = vperm.xlu0 %1412, %v1375
        %v1414 = vpop.permute.xlu0 %1413
        %1417 = vset.pattern.permute.xlu0 0
        %1418 = vperm.xlu0 %1417, %v1376
        %v1419 = vpop.permute.xlu0 %1418
        %1422 = vset.pattern.permute.xlu0 0
        %1423 = vperm.xlu0 %1422, %v1377
        %v1424 = vpop.permute.xlu0 %1423
        %1427 = vset.pattern.permute.xlu0 0
        %1428 = vperm.xlu0 %1427, %v1378
        %v1429 = vpop.permute.xlu0 %1428
        %1432 = vset.pattern.permute.xlu0 0
        %1433 = vperm.xlu0 %1432, %v1379
        %v1434 = vpop.permute.xlu0 %1433
        %v1436 = vmul.f32 %v1388, %v1399
        %v1437 = vmul.f32 %v1389, %v1404
        %v1438 = vmul.f32 %v1390, %v1409
        %v1439 = vmul.f32 %v1391, %v1414
        %v1440 = vmul.f32 %v1392, %v1419
        %v1441 = vmul.f32 %v1393, %v1424
        %v1442 = vmul.f32 %v1394, %v1429
        %v1443 = vmul.f32 %v1395, %v1434
        %v1444 = vsel %vm924, %v1436, 0.0
        %v1445 = vsel %vm924, %v1437, 0.0
        %v1446 = vadd.f32 %v1444, %v1445
        %v1447 = vrot.slane %v1446, 4
        %v1448 = vadd.f32 %v1446, %v1447
        %v1449 = vrot.slane %v1448, 2
        %v1450 = vadd.f32 %v1448, %v1449
        %v1451 = vrot.slane %v1450, 1
        %v1452 = vadd.f32 %v1450, %v1451
        %v1453 = vsel %vm924, %v1438, 0.0
        %v1454 = vsel %vm924, %v1439, 0.0
        %v1455 = vadd.f32 %v1453, %v1454
        %v1456 = vrot.slane %v1455, 4
        %v1457 = vadd.f32 %v1455, %v1456
        %v1458 = vrot.slane %v1457, 2
        %v1459 = vadd.f32 %v1457, %v1458
        %v1460 = vrot.slane %v1459, 1
        %v1461 = vadd.f32 %v1459, %v1460
        %v1462 = vsel %vm924, %v1440, 0.0
        %v1463 = vsel %vm924, %v1441, 0.0
        %v1464 = vadd.f32 %v1462, %v1463
        %v1465 = vrot.slane %v1464, 4
        %v1466 = vadd.f32 %v1464, %v1465
        %v1467 = vrot.slane %v1466, 2
        %v1468 = vadd.f32 %v1466, %v1467
        %v1469 = vrot.slane %v1468, 1
        %v1470 = vadd.f32 %v1468, %v1469
        %v1471 = vsel %vm924, %v1442, 0.0
        %v1472 = vsel %vm924, %v1443, 0.0
        %v1473 = vadd.f32 %v1471, %v1472
        %v1474 = vrot.slane %v1473, 4
        %v1475 = vadd.f32 %v1473, %v1474
        %v1476 = vrot.slane %v1475, 2
        %v1477 = vadd.f32 %v1475, %v1476
        %v1478 = vrot.slane %v1477, 1
        %v1479 = vadd.f32 %v1477, %v1478
        %v1480 = vpack.c.bf16 %v1452, %v1452
        %v1481 = vpack.c.bf16 %v1461, %v1461
        %v1482 = vpack.c.bf16 %v1470, %v1470
        %v1483 = vpack.c.bf16 %v1479, %v1479
        %v1484 = vld [vmem:[#allocation23] sm:$0xf]
        %v1485 = vld [vmem:[#allocation23 + $0x4] sm:$0xf]
        %v1486 = vld [vmem:[#allocation23 + $0x8] sm:$0xf]
        %v1487 = vld [vmem:[#allocation23 + $0xc] sm:$0xf]
        %v1488 = vld [vmem:[#allocation24] sm:$0x1]
        %v1490 = vlaneseq
        %v1491 = vshrl.u32 %v1490, 7
        %v1492 = vsub.s32 0, %v1491
        %v1493 = vrot.slane %v1488, %v1492
        %v1499 = vunpack.c.l.b16 %v1480
        %v1500 = vunpack.c.l.b16 %v1481
        %v1501 = vunpack.c.l.b16 %v1482
        %v1502 = vunpack.c.l.b16 %v1483
        %v1503 = vsel %vm1219, %v1500, %v1499
        %v1504 = vsel %vm1221, %v1501, %v1503
        %v1505 = vsel %vm1223, %v1502, %v1504
        %v1506 = vpack.c.b16 %v1505, %v1505
        %v1511 = vunpack.c.l.b16 %v1484
        %v1512 = vunpack.c.l.b16 %v1485
        %v1513 = vunpack.c.l.b16 %v1486
        %v1514 = vunpack.c.l.b16 %v1487
        %v1515 = vpack.c.b16 %v1512, %v1511
        %v1516 = vpack.c.b16 %v1514, %v1513
        %v1520 = vsel %vm924, %v1506, 0
        %1522 = vmatprep.subr.bf16.mxu0 0
        %1523 = vmatpush1.bf16.msra.mxu0 0
        %1524 = vmatprep.subr.bf16.mxu0 0
        %1525 = vmatpush1.bf16.msra.mxu0 0
        %1526 = vmatprep.subr.bf16.mxu0 0
        %1527 = vmatpush1.bf16.msra.mxu0 0
        %1528 = vmatprep.subr.bf16.mxu0 0
        %1529 = vmatpush1.bf16.msra.mxu0 0
        %1530 = vmatprep.subr.bf16.mxu0 0
        %1531 = vmatpush1.bf16.msra.mxu0 0
        %1532 = vmatprep.subr.bf16.mxu0 0
        %1533 = vmatpush1.bf16.msra.mxu0 0
        %1534 = vmatprep.subr.bf16.mxu0 0
        %1535 = vmatpush1.bf16.msra.mxu0 %v1516
        %1536 = vmatprep.subr.bf16.mxu0 0
        %1537 = vmatpush1.bf16.msra.mxu0 %v1515
        %1538 = vmatprep.subr.bf16.mxu0 0
        %1539 = vmatpush2.bf16.msra.mxu0 0
        %1540 = vmatprep.subr.bf16.mxu0 0
        %1541 = vmatpush2.bf16.msra.mxu0 0
        %1542 = vmatprep.subr.bf16.mxu0 0
        %1543 = vmatpush2.bf16.msra.mxu0 0
        %1544 = vmatprep.subr.bf16.mxu0 0
        %1545 = vmatpush2.bf16.msra.mxu0 0
        %1546 = vmatprep.subr.bf16.mxu0 0
        %1547 = vmatpush2.bf16.msra.mxu0 0
        %1548 = vmatprep.subr.bf16.mxu0 0
        %1549 = vmatpush2.bf16.msra.mxu0 0
        %1550 = vmatprep.subr.bf16.mxu0 0
        %1551 = vmatpush2.bf16.msra.mxu0 0
        %1552 = vmatprep.subr.bf16.mxu0 0
        %1553 = vmatpush2.bf16.msra.mxu0 0
        %1554 = vmatprep.mubr.bf16.mxu0 0
        %1555 = vmatmul.mubr.bf16.gmra.mxu0 %v1520
        %v1556 = vpop.f32.mrf.mxu0
        %v1557 = vadd.f32 %v1493, %v1556
        %v1558 = vpop.f32.mrf.mxu0
        %v1559 = vpop.f32.mrf.mxu0
        %v1560 = vpop.f32.mrf.mxu0
        %1561 = vdwg.mxu0
        %s1562 = smul.f32 %s895, 32.0
        %1564 = vset.pattern.permute.xlu0 0
        %1565 = vperm.xlu0 %1564, %v884
        %v1566 = vpop.permute.xlu0 %1565
        %v1568 = vmul.f32 %v1557, %v1566
        %vm1569 = vcmask 257024
        %v1570 = vsel %vm1569, %v1568, 0.0
        %1571 = vadd.xlane.f32.xlu0 %v1570
        %v1572 = vpop.xlane.xlu0 %1571
        %v1573 = vrot.slane %v1572, 4
        %v1574 = vadd.f32 %v1572, %v1573
        %v1575 = vrot.slane %v1574, 2
        %v1576 = vadd.f32 %v1574, %v1575
        %v1577 = vrot.slane %v1576, 1
        %v1578 = vadd.f32 %v1576, %v1577
        %s1579 = vtos %v1578
        %v1580 = vstv %s1562
        %v1581 = vrcp.pop %v1580
        %s1582 = vtos %v1581
        %s1583 = smul.f32 %s1579, %s1582
        %v1584 = vstv %s1583
        %v1585 = vsub.f32 %v1557, %v1584
        %v1586 = vmul.f32 %v1585, %v1585
        %v1587 = vmul.f32 %v1566, %v1586
        %v1588 = vsel %vm1569, %v1587, 0.0
        %1589 = vadd.xlane.f32.xlu0 %v1588
        %v1590 = vpop.xlane.xlu0 %1589
        %v1591 = vrot.slane %v1590, 4
        %v1592 = vadd.f32 %v1590, %v1591
        %v1593 = vrot.slane %v1592, 2
        %v1594 = vadd.f32 %v1592, %v1593
        %v1595 = vrot.slane %v1594, 1
        %v1596 = vadd.f32 %v1594, %v1595
        %s1597 = vtos %v1596
        %s1598 = ssub.f32 %s1562, 1.0
        %v1599 = vstv %s1598
        %v1600 = vrcp.pop %v1599
        %s1601 = vtos %v1600
        %s1602 = smul.f32 %s1597, %s1601
        %v1603 = vstv %s1602
        %v1604 = vrsqrt.pop %v1603
        %v1605 = vmul.f32 %v1603, %v1604
        %vm1606 = vcmp.eq.f32.partialorder %v1603, inf
        %v1607 = vsel %vm1606, %v1603, %v1605
        %vm1608 = vcmp.eq.f32.partialorder %v1603, 0.0
        %v1609 = vand.u32 %v1603, 2147483648
        %v1610 = vsel %vm1608, %v1609, %v1607
        %s1611 = vtos %v1610
        %v1612 = vld [vmem:[#allocation12] sm:$0xf]
        %v1613 = vld [vmem:[#allocation12 + $0x4] sm:$0xf]
        %v1614 = vld [vmem:[#allocation12 + $0x8] sm:$0xf]
        %v1615 = vld [vmem:[#allocation12 + $0xc] sm:$0xf]
        %v1616 = vld [vmem:[#allocation12 + $0x10] sm:$0xf]
        %v1617 = vld [vmem:[#allocation12 + $0x14] sm:$0xf]
        %v1618 = vld [vmem:[#allocation12 + $0x18] sm:$0xf]
        %v1619 = vld [vmem:[#allocation12 + $0x1c] sm:$0xf]
        %v1622 = vunpack.c.l.s4 1966171168
        %v1623 = vunpack.c.0.s8 %v1622
        %v1624 = vlaneseq
        %v1625 = vshrl.u32 %v1624, 7
        %v1626 = vsub.s32 %v1623, %v1625
        %v1627 = vrot.slane %v1054, %v1626
        %v1628 = vcombine.high %v1627, %v1627
        %v1630 = vunpack.c.l.s4 1966171168
        %v1631 = vunpack.c.0.s8 %v1630
        %v1632 = vlaneseq
        %v1633 = vshrl.u32 %v1632, 7
        %v1634 = vsub.s32 %v1631, %v1633
        %v1635 = vrot.slane %v1627, %v1634
        %v1637 = vunpack.c.l.s4 1966171168
        %v1638 = vunpack.c.0.s8 %v1637
        %v1639 = vlaneseq
        %v1640 = vshrl.u32 %v1639, 7
        %v1641 = vsub.s32 %v1638, %v1640
        %v1642 = vrot.slane %v1628, %v1641
        %v1643 = vcombine.high %v1635, %v1635
        %v1644 = vcombine.high %v1642, %v1642
        %v1645 = vunpack.c.l.bf16 %v1612
        %v1646 = vunpack.c.l.bf16 %v1613
        %v1647 = vunpack.c.l.bf16 %v1614
        %v1648 = vunpack.c.l.bf16 %v1615
        %v1649 = vunpack.c.l.bf16 %v1616
        %v1650 = vunpack.c.l.bf16 %v1617
        %v1651 = vunpack.c.l.bf16 %v1618
        %v1652 = vunpack.c.l.bf16 %v1619
        %v1653 = vlaneseq
        %v1654 = vshrl.u32 %v1653, 7
        %v1655 = vsub.s32 0, %v1654
        %v1656 = vrot.slane %v1635, %v1655
        %v1657 = vlaneseq
        %v1658 = vshrl.u32 %v1657, 7
        %v1659 = vsub.s32 0, %v1658
        %v1660 = vrot.slane %v1642, %v1659
        %v1661 = vlaneseq
        %v1662 = vshrl.u32 %v1661, 7
        %v1663 = vsub.s32 0, %v1662
        %v1664 = vrot.slane %v1643, %v1663
        %v1665 = vlaneseq
        %v1666 = vshrl.u32 %v1665, 7
        %v1667 = vsub.s32 0, %v1666
        %v1668 = vrot.slane %v1644, %v1667
        %1669 = vrot.lane.b32.xlu0 %v1656, 96
        %v1670 = vpop.permute.xlu0 %1669
        %1671 = vrot.lane.b32.xlu0 %v1660, 96
        %v1672 = vpop.permute.xlu0 %1671
        %1673 = vrot.lane.b32.xlu0 %v1664, 96
        %v1674 = vpop.permute.xlu0 %1673
        %1675 = vrot.lane.b32.xlu0 %v1668, 96
        %v1676 = vpop.permute.xlu0 %1675
        %v1681 = vadd.f32 %v1645, %v1670
        %v1682 = vadd.f32 %v1646, %v1670
        %v1683 = vadd.f32 %v1647, %v1672
        %v1684 = vadd.f32 %v1648, %v1672
        %v1685 = vadd.f32 %v1649, %v1674
        %v1686 = vadd.f32 %v1650, %v1674
        %v1687 = vadd.f32 %v1651, %v1676
        %v1688 = vadd.f32 %v1652, %v1676
        %v1689 = vmax.f32 %v1681, 0.0
        %v1690 = vmax.f32 %v1682, 0.0
        %v1691 = vmax.f32 %v1683, 0.0
        %v1692 = vmax.f32 %v1684, 0.0
        %v1693 = vmax.f32 %v1685, 0.0
        %v1694 = vmax.f32 %v1686, 0.0
        %v1695 = vmax.f32 %v1687, 0.0
        %v1696 = vmax.f32 %v1688, 0.0
        %v1697 = vld [vmem:[#allocation27] sm:$0xff]
        %v1698 = vld [vmem:[#allocation27 + $0x8] sm:$0xff]
        %v1699 = vmul.f32 %v1689, %v1697
        %v1700 = vmul.f32 %v1690, %v1698
        %v1701 = vmul.f32 %v1691, %v1697
        %v1702 = vmul.f32 %v1692, %v1698
        %v1703 = vmul.f32 %v1693, %v1697
        %v1704 = vmul.f32 %v1694, %v1698
        %v1705 = vmul.f32 %v1695, %v1697
        %v1706 = vmul.f32 %v1696, %v1698
        %v1707 = vsel %vm924, %v1699, 0.0
        %v1708 = vsel %vm924, %v1700, 0.0
        %v1709 = vadd.f32 %v1707, %v1708
        %v1710 = vrot.slane %v1709, 4
        %v1711 = vadd.f32 %v1709, %v1710
        %v1712 = vrot.slane %v1711, 2
        %v1713 = vadd.f32 %v1711, %v1712
        %v1714 = vrot.slane %v1713, 1
        %v1715 = vadd.f32 %v1713, %v1714
        %v1716 = vsel %vm924, %v1701, 0.0
        %v1717 = vsel %vm924, %v1702, 0.0
        %v1718 = vadd.f32 %v1716, %v1717
        %v1719 = vrot.slane %v1718, 4
        %v1720 = vadd.f32 %v1718, %v1719
        %v1721 = vrot.slane %v1720, 2
        %v1722 = vadd.f32 %v1720, %v1721
        %v1723 = vrot.slane %v1722, 1
        %v1724 = vadd.f32 %v1722, %v1723
        %v1725 = vsel %vm924, %v1703, 0.0
        %v1726 = vsel %vm924, %v1704, 0.0
        %v1727 = vadd.f32 %v1725, %v1726
        %v1728 = vrot.slane %v1727, 4
        %v1729 = vadd.f32 %v1727, %v1728
        %v1730 = vrot.slane %v1729, 2
        %v1731 = vadd.f32 %v1729, %v1730
        %v1732 = vrot.slane %v1731, 1
        %v1733 = vadd.f32 %v1731, %v1732
        %v1734 = vsel %vm924, %v1705, 0.0
        %v1735 = vsel %vm924, %v1706, 0.0
        %v1736 = vadd.f32 %v1734, %v1735
        %v1737 = vrot.slane %v1736, 4
        %v1738 = vadd.f32 %v1736, %v1737
        %v1739 = vrot.slane %v1738, 2
        %v1740 = vadd.f32 %v1738, %v1739
        %v1741 = vrot.slane %v1740, 1
        %v1742 = vadd.f32 %v1740, %v1741
        %v1747 = vsel %vm1219, %v1724, %v1715
        %v1748 = vsel %vm1221, %v1733, %v1747
        %v1749 = vsel %vm1223, %v1742, %v1748
        %v1751 = vsel %vm1569, %v1749, -inf
        %1752 = vmax.xlane.f32.xlu0 %v1751
        %v1753 = vpop.xlane.xlu0 %1752
        %v1755 = vrot.slane %v1753, 1
        %v1756 = vrot.slane %v1753, 2
        %v1757 = vrot.slane %v1753, 3
        %v1762 = vsub.f32 %v1715, %v1753
        %v1763 = vsub.f32 %v1724, %v1755
        %v1764 = vsub.f32 %v1733, %v1756
        %v1765 = vsub.f32 %v1742, %v1757
        %v1766 = vmul.f32 %v1762, 1.442695
        %v1767 = vpow.pop %v1766
        %v1768 = vmul.f32 %v1763, 1.442695
        %v1769 = vpow.pop %v1768
        %v1770 = vmul.f32 %v1764, 1.442695
        %v1771 = vpow.pop %v1770
        %v1772 = vmul.f32 %v1765, 1.442695
        %v1773 = vpow.pop %v1772
        %v1778 = vrot.slane %v1769, 7
        %v1779 = vsel %vm1219, %v1778, %v1767
        %v1780 = vrot.slane %v1771, 6
        %v1781 = vsel %vm1221, %v1780, %v1779
        %v1782 = vrot.slane %v1773, 5
        %v1783 = vsel %vm1223, %v1782, %v1781
        %v1785 = vsel %vm1569, %v1783, 0.0
        %1786 = vadd.xlane.f32.xlu0 %v1785
        %v1787 = vpop.xlane.xlu0 %1786
        %v1788 = vrcp.pop %v1787
        %v1790 = vrot.slane %v1788, 1
        %v1791 = vrot.slane %v1788, 2
        %v1792 = vrot.slane %v1788, 3
        %v1797 = vmul.f32 %v1767, %v1788
        %v1798 = vmul.f32 %v1769, %v1790
        %v1799 = vmul.f32 %v1771, %v1791
        %v1800 = vmul.f32 %v1773, %v1792
        %v1801 = vld [vmem:[#allocation14] sm:$0xf]
        %v1802 = vld [vmem:[#allocation14 + $0x4] sm:$0xf]
        %v1803 = vld [vmem:[#allocation14 + $0x8] sm:$0xf]
        %v1804 = vld [vmem:[#allocation14 + $0xc] sm:$0xf]
        %v1805 = vld [vmem:[#allocation14 + $0x10] sm:$0xf]
        %v1806 = vld [vmem:[#allocation14 + $0x14] sm:$0xf]
        %v1807 = vld [vmem:[#allocation14 + $0x18] sm:$0xf]
        %v1808 = vld [vmem:[#allocation14 + $0x1c] sm:$0xf]
        %v1809 = vunpack.c.l.bf16 %v1801
        %v1810 = vunpack.c.l.bf16 %v1802
        %v1811 = vunpack.c.l.bf16 %v1803
        %v1812 = vunpack.c.l.bf16 %v1804
        %v1813 = vunpack.c.l.bf16 %v1805
        %v1814 = vunpack.c.l.bf16 %v1806
        %v1815 = vunpack.c.l.bf16 %v1807
        %v1816 = vunpack.c.l.bf16 %v1808
        %v1817 = vlaneseq
        %v1818 = vshrl.u32 %v1817, 7
        %v1819 = vsub.s32 0, %v1818
        %v1820 = vrot.slane %v1797, %v1819
        %v1821 = vlaneseq
        %v1822 = vshrl.u32 %v1821, 7
        %v1823 = vsub.s32 0, %v1822
        %v1824 = vrot.slane %v1798, %v1823
        %v1825 = vlaneseq
        %v1826 = vshrl.u32 %v1825, 7
        %v1827 = vsub.s32 0, %v1826
        %v1828 = vrot.slane %v1799, %v1827
        %v1829 = vlaneseq
        %v1830 = vshrl.u32 %v1829, 7
        %v1831 = vsub.s32 0, %v1830
        %v1832 = vrot.slane %v1800, %v1831
        %v1833 = vmul.f32 %v1809, %v1820
        %v1834 = vmul.f32 %v1810, %v1820
        %v1835 = vmul.f32 %v1811, %v1824
        %v1836 = vmul.f32 %v1812, %v1824
        %v1837 = vmul.f32 %v1813, %v1828
        %v1838 = vmul.f32 %v1814, %v1828
        %v1839 = vmul.f32 %v1815, %v1832
        %v1840 = vmul.f32 %v1816, %v1832
        %v1841 = vsel %vm924, %v1833, 0.0
        %1842 = vadd.xlane.f32.xlu0 %v1841
        %v1843 = vpop.xlane.xlu0 %1842
        %v1844 = vsel %vm924, %v1834, 0.0
        %1845 = vadd.xlane.f32.xlu0 %v1844
        %v1846 = vpop.xlane.xlu0 %1845
        %v1847 = vsel %vm924, %v1835, 0.0
        %1848 = vadd.xlane.f32.xlu0 %v1847
        %v1849 = vpop.xlane.xlu0 %1848
        %v1850 = vsel %vm924, %v1836, 0.0
        %1851 = vadd.xlane.f32.xlu0 %v1850
        %v1852 = vpop.xlane.xlu0 %1851
        %v1853 = vsel %vm924, %v1837, 0.0
        %1854 = vadd.xlane.f32.xlu0 %v1853
        %v1855 = vpop.xlane.xlu0 %1854
        %v1856 = vsel %vm924, %v1838, 0.0
        %1857 = vadd.xlane.f32.xlu0 %v1856
        %v1858 = vpop.xlane.xlu0 %1857
        %v1859 = vsel %vm924, %v1839, 0.0
        %1860 = vadd.xlane.f32.xlu0 %v1859
        %v1861 = vpop.xlane.xlu0 %1860
        %v1862 = vsel %vm924, %v1840, 0.0
        %1863 = vadd.xlane.f32.xlu0 %v1862
        %v1864 = vpop.xlane.xlu0 %1863
        %s1865 = smul.f32 %s895, 16.0
        %v1866 = vlaneseq
        %v1867 = vshrl.u32 %v1866, 7
        %v1868 = vsub.s32 0, %v1867
        %v1869 = vrot.slane %v1566, %v1868
        %v1870 = vlaneseq
        %v1871 = vshrl.u32 %v1870, 7
        %v1872 = vsub.s32 1, %v1871
        %v1873 = vrot.slane %v1566, %v1872
        %v1874 = vlaneseq
        %v1875 = vshrl.u32 %v1874, 7
        %v1876 = vsub.s32 2, %v1875
        %v1877 = vrot.slane %v1566, %v1876
        %v1878 = vlaneseq
        %v1879 = vshrl.u32 %v1878, 7
        %v1880 = vsub.s32 3, %v1879
        %v1881 = vrot.slane %v1566, %v1880
        %v1886 = vmul.f32 %v1843, %v1869
        %v1887 = vmul.f32 %v1846, %v1869
        %v1888 = vmul.f32 %v1849, %v1873
        %v1889 = vmul.f32 %v1852, %v1873
        %v1890 = vmul.f32 %v1855, %v1877
        %v1891 = vmul.f32 %v1858, %v1877
        %v1892 = vmul.f32 %v1861, %v1881
        %v1893 = vmul.f32 %v1864, %v1881
        %1902 = vset.pattern.permute.xlu0 0
        %1903 = vperm.xlu0 %1902, %v1886
        %v1904 = vpop.permute.xlu0 %1903
        %1905 = vset.pattern.permute.xlu0 0
        %1906 = vperm.xlu0 %1905, %v1887
        %v1907 = vpop.permute.xlu0 %1906
        %1908 = vset.pattern.permute.xlu0 0
        %1909 = vperm.xlu0 %1908, %v1888
        %v1910 = vpop.permute.xlu0 %1909
        %1911 = vset.pattern.permute.xlu0 0
        %1912 = vperm.xlu0 %1911, %v1889
        %v1913 = vpop.permute.xlu0 %1912
        %1914 = vset.pattern.permute.xlu0 0
        %1915 = vperm.xlu0 %1914, %v1890
        %v1916 = vpop.permute.xlu0 %1915
        %1917 = vset.pattern.permute.xlu0 0
        %1918 = vperm.xlu0 %1917, %v1891
        %v1919 = vpop.permute.xlu0 %1918
        %1920 = vset.pattern.permute.xlu0 0
        %1921 = vperm.xlu0 %1920, %v1892
        %v1922 = vpop.permute.xlu0 %1921
        %1923 = vset.pattern.permute.xlu0 0
        %1924 = vperm.xlu0 %1923, %v1893
        %v1925 = vpop.permute.xlu0 %1924
        %v1926 = vlaneseq
        %v1927 = vshrl.u32 %v1926, 7
        %v1928 = vsub.s32 %v1180, %v1927
        %v1929 = vrot.slane %v1904, %v1928
        %v1930 = vlaneseq
        %v1931 = vshrl.u32 %v1930, 7
        %v1932 = vsub.s32 %v1185, %v1931
        %v1933 = vrot.slane %v1907, %v1932
        %v1934 = vsel %vm1190, %v1933, %v1929
        %v1935 = vlaneseq
        %v1936 = vshrl.u32 %v1935, 7
        %v1937 = vsub.s32 %v1180, %v1936
        %v1938 = vrot.slane %v1910, %v1937
        %v1939 = vlaneseq
        %v1940 = vshrl.u32 %v1939, 7
        %v1941 = vsub.s32 %v1185, %v1940
        %v1942 = vrot.slane %v1913, %v1941
        %v1943 = vsel %vm1190, %v1942, %v1938
        %v1944 = vlaneseq
        %v1945 = vshrl.u32 %v1944, 7
        %v1946 = vsub.s32 %v1180, %v1945
        %v1947 = vrot.slane %v1916, %v1946
        %v1948 = vlaneseq
        %v1949 = vshrl.u32 %v1948, 7
        %v1950 = vsub.s32 %v1185, %v1949
        %v1951 = vrot.slane %v1919, %v1950
        %v1952 = vsel %vm1190, %v1951, %v1947
        %v1953 = vlaneseq
        %v1954 = vshrl.u32 %v1953, 7
        %v1955 = vsub.s32 %v1180, %v1954
        %v1956 = vrot.slane %v1922, %v1955
        %v1957 = vlaneseq
        %v1958 = vshrl.u32 %v1957, 7
        %v1959 = vsub.s32 %v1185, %v1958
        %v1960 = vrot.slane %v1925, %v1959
        %v1961 = vsel %vm1190, %v1960, %v1956
        %v1962 = vsel %vm1219, %v1943, %v1934
        %v1963 = vsel %vm1221, %v1952, %v1962
        %v1964 = vsel %vm1223, %v1961, %v1963
        %v1966 = vsel %vm1226, %v1964, 0.0
        %1967 = vadd.xlane.f32.xlu0 %v1966
        %v1968 = vpop.xlane.xlu0 %1967
        %v1969 = vrot.slane %v1968, 4
        %v1970 = vadd.f32 %v1968, %v1969
        %v1971 = vrot.slane %v1970, 2
        %v1972 = vadd.f32 %v1970, %v1971
        %v1973 = vrot.slane %v1972, 1
        %v1974 = vadd.f32 %v1972, %v1973
        %s1975 = vtos %v1974
        %v1976 = vstv %s1865
        %v1977 = vrcp.pop %v1976
        %s1978 = vtos %v1977
        %s1979 = smul.f32 %s1975, %s1978
        %v1980 = vstv %s1979
        %v1981 = vsub.f32 %v1843, %v1980
        %v1982 = vsub.f32 %v1846, %v1980
        %v1983 = vsub.f32 %v1849, %v1980
        %v1984 = vsub.f32 %v1852, %v1980
        %v1985 = vsub.f32 %v1855, %v1980
        %v1986 = vsub.f32 %v1858, %v1980
        %v1987 = vsub.f32 %v1861, %v1980
        %v1988 = vsub.f32 %v1864, %v1980
        %v1989 = vmul.f32 %v1981, %v1981
        %v1990 = vmul.f32 %v1982, %v1982
        %v1991 = vmul.f32 %v1983, %v1983
        %v1992 = vmul.f32 %v1984, %v1984
        %v1993 = vmul.f32 %v1985, %v1985
        %v1994 = vmul.f32 %v1986, %v1986
        %v1995 = vmul.f32 %v1987, %v1987
        %v1996 = vmul.f32 %v1988, %v1988
        %v2005 = vlaneseq
        %v2006 = vshrl.u32 %v2005, 7
        %v2007 = vsub.s32 %v1180, %v2006
        %v2008 = vrot.slane %v1989, %v2007
        %v2009 = vlaneseq
        %v2010 = vshrl.u32 %v2009, 7
        %v2011 = vsub.s32 %v1185, %v2010
        %v2012 = vrot.slane %v1990, %v2011
        %v2013 = vsel %vm1190, %v2012, %v2008
        %v2014 = vlaneseq
        %v2015 = vshrl.u32 %v2014, 7
        %v2016 = vsub.s32 %v1180, %v2015
        %v2017 = vrot.slane %v1991, %v2016
        %v2018 = vlaneseq
        %v2019 = vshrl.u32 %v2018, 7
        %v2020 = vsub.s32 %v1185, %v2019
        %v2021 = vrot.slane %v1992, %v2020
        %v2022 = vsel %vm1190, %v2021, %v2017
        %v2023 = vlaneseq
        %v2024 = vshrl.u32 %v2023, 7
        %v2025 = vsub.s32 %v1180, %v2024
        %v2026 = vrot.slane %v1993, %v2025
        %v2027 = vlaneseq
        %v2028 = vshrl.u32 %v2027, 7
        %v2029 = vsub.s32 %v1185, %v2028
        %v2030 = vrot.slane %v1994, %v2029
        %v2031 = vsel %vm1190, %v2030, %v2026
        %v2032 = vlaneseq
        %v2033 = vshrl.u32 %v2032, 7
        %v2034 = vsub.s32 %v1180, %v2033
        %v2035 = vrot.slane %v1995, %v2034
        %v2036 = vlaneseq
        %v2037 = vshrl.u32 %v2036, 7
        %v2038 = vsub.s32 %v1185, %v2037
        %v2039 = vrot.slane %v1996, %v2038
        %v2040 = vsel %vm1190, %v2039, %v2035
        %v2041 = vsel %vm1219, %v2022, %v2013
        %v2042 = vsel %vm1221, %v2031, %v2041
        %v2043 = vsel %vm1223, %v2040, %v2042
        %v2045 = vmul.f32 %v1566, %v2043
        %v2046 = vsel %vm1226, %v2045, 0.0
        %2047 = vadd.xlane.f32.xlu0 %v2046
        %v2048 = vpop.xlane.xlu0 %2047
        %v2049 = vrot.slane %v2048, 4
        %v2050 = vadd.f32 %v2048, %v2049
        %v2051 = vrot.slane %v2050, 2
        %v2052 = vadd.f32 %v2050, %v2051
        %v2053 = vrot.slane %v2052, 1
        %v2054 = vadd.f32 %v2052, %v2053
        %s2055 = vtos %v2054
        %s2056 = ssub.f32 %s1865, 1.0
        %v2057 = vstv %s2056
        %v2058 = vrcp.pop %v2057
        %s2059 = vtos %v2058
        %s2060 = smul.f32 %s2055, %s2059
        %v2061 = vstv %s2060
        %v2062 = vrsqrt.pop %v2061
        %v2063 = vmul.f32 %v2061, %v2062
        %vm2064 = vcmp.eq.f32.partialorder %v2061, inf
        %v2065 = vsel %vm2064, %v2061, %v2063
        %vm2066 = vcmp.eq.f32.partialorder %v2061, 0.0
        %v2067 = vand.u32 %v2061, 2147483648
        %v2068 = vsel %vm2066, %v2067, %v2065
        %s2069 = vtos %v2068
        %s2070 = sadd.f32 %s1611, %s2069
        %v2071 = vstv %s2070
        %v2072 = vrcp.pop %v2071
        %s2073 = vtos %v2072
        %s2074 = smul.f32 %s1611, %s2073
        %v2075 = vld [vmem:[%s744] sm:$0x3]
        %v2076 = vunpack.c.l.bf16 %v2075
        %v2077 = vadd.f32 %v2076, %v1031
        %v2080 = vcombine.low %v963, %v965
        %2081 = vrot.lane.b32.xlu0 %v2080, 64
        %v2082 = vpop.permute.xlu0 %2081
        %v2083 = vrot.slane %v2082, 4
        %vm2084 = vcmask 523264
        %v2085 = vsel %vm2084, %v2082, %v2083
        %v2087 = vadd.f32 %v2077, %v2085
        %v2088 = vxor.u32 %v2087, 2147483648
        %v2089 = vmul.f32 %v2088, 1.442695
        %v2090 = vpow.pop %v2089
        %v2091 = vadd.f32 %v2090, 1.0
        %v2092 = vrcp.pop %v2091
        %v2093 = vmul.f32 1.0, %v2092
        %v2094 = vtanh.pop %v2087
        %v2095 = vld [vmem:[#allocation3] sm:$0xf]
        %2097 = vrot.lane.b32.xlu0 %v2095, 32
        %v2098 = vpop.permute.xlu0 %2097
        %v2100 = vmul.f32 %v2093, %v2098
        %2102 = vrot.lane.b32.xlu0 %v2094, 64
        %v2103 = vpop.permute.xlu0 %2102
        %v2105 = vmul.f32 %v2093, %v2103
        %2107 = vrot.lane.b32.xlu0 %v2105, 32
        %v2108 = vpop.permute.xlu0 %2107
        %v2110 = vadd.f32 %v2100, %v2108
        %v2111 = vtanh.pop %v2110
        %2113 = vrot.lane.b32.xlu0 %v2111, 64
        %v2114 = vpop.permute.xlu0 %2113
        %v2116 = vmul.f32 %v2093, %v2114
        %2118 = vrot.lane.b32.xlu0 %v2116, 32
        %v2119 = vpop.permute.xlu0 %2118
        %2121 = vst.msk [vmem:[#allocation2] sm:$0xf] %vm1569, %v2119
        %2123 = vrot.lane.b32.xlu0 %v2110, 96
        %v2124 = vpop.permute.xlu0 %2123
        %2126 = vst.msk [vmem:[#allocation3] sm:$0xf] %vm1569, %v2124
        %s2127 = ssub.f32 1.0, %s2074
        %v2128 = vstv %s2127
        %v2129 = vmul.f32 %v2128, %v1843
        %v2130 = vmul.f32 %v2128, %v1846
        %v2131 = vmul.f32 %v2128, %v1849
        %v2132 = vmul.f32 %v2128, %v1852
        %v2133 = vmul.f32 %v2128, %v1855
        %v2134 = vmul.f32 %v2128, %v1858
        %v2135 = vmul.f32 %v2128, %v1861
        %v2136 = vmul.f32 %v2128, %v1864
        %v2137 = vpack.c.bf16 %v2130, %v2129
        %v2138 = vpack.c.bf16 %v2132, %v2131
        %v2139 = vpack.c.bf16 %v2134, %v2133
        %v2140 = vpack.c.bf16 %v2136, %v2135
        %v2141 = vstv %s2074
        %v2142 = vmul.f32 %v2141, %v1557
        %v2143 = vpack.c.bf16 %v2142, %v2142
        %v2144 = vld [vmem:[#allocation29] sm:$0xf]
        %v2145 = vld [vmem:[#allocation29 + $0x4] sm:$0xf]
        %v2146 = vld [vmem:[#allocation30] sm:$0xf]
        %v2147 = vld [vmem:[#allocation30 + $0x4] sm:$0xf]
        %v2148 = vld [vmem:[#allocation30 + $0x8] sm:$0xf]
        %v2149 = vld [vmem:[#allocation30 + $0xc] sm:$0xf]
        %v2154 = vunpack.c.l.b16 %v2146
        %v2155 = vunpack.c.l.b16 %v2147
        %v2156 = vunpack.c.l.b16 %v2148
        %v2157 = vunpack.c.l.b16 %v2149
        %v2158 = vpack.c.b16 %v2155, %v2154
        %v2159 = vpack.c.b16 %v2157, %v2156
        %v2163 = vsel %vm924, %v2143, 0
        %2165 = vmatprep.subr.bf16.mxu0 0
        %2166 = vmatpush1.bf16.msra.mxu0 0
        %2167 = vmatprep.subr.bf16.mxu0 0
        %2168 = vmatpush1.bf16.msra.mxu0 0
        %2169 = vmatprep.subr.bf16.mxu0 0
        %2170 = vmatpush1.bf16.msra.mxu0 0
        %2171 = vmatprep.subr.bf16.mxu0 0
        %2172 = vmatpush1.bf16.msra.mxu0 0
        %2173 = vmatprep.subr.bf16.mxu0 0
        %2174 = vmatpush1.bf16.msra.mxu0 0
        %2175 = vmatprep.subr.bf16.mxu0 0
        %2176 = vmatpush1.bf16.msra.mxu0 0
        %2177 = vmatprep.subr.bf16.mxu0 0
        %2178 = vmatpush1.bf16.msra.mxu0 %v2159
        %2179 = vmatprep.subr.bf16.mxu0 0
        %2180 = vmatpush1.bf16.msra.mxu0 %v2158
        %2181 = vmatprep.subr.bf16.mxu0 0
        %2182 = vmatpush2.bf16.msra.mxu0 0
        %2183 = vmatprep.subr.bf16.mxu0 0
        %2184 = vmatpush2.bf16.msra.mxu0 0
        %2185 = vmatprep.subr.bf16.mxu0 0
        %2186 = vmatpush2.bf16.msra.mxu0 0
        %2187 = vmatprep.subr.bf16.mxu0 0
        %2188 = vmatpush2.bf16.msra.mxu0 0
        %2189 = vmatprep.subr.bf16.mxu0 0
        %2190 = vmatpush2.bf16.msra.mxu0 0
        %2191 = vmatprep.subr.bf16.mxu0 0
        %2192 = vmatpush2.bf16.msra.mxu0 0
        %2193 = vmatprep.subr.bf16.mxu0 0
        %2194 = vmatpush2.bf16.msra.mxu0 0
        %2195 = vmatprep.subr.bf16.mxu0 0
        %2196 = vmatpush2.bf16.msra.mxu0 0
        %2197 = vmatprep.mubr.bf16.mxu0 0
        %2198 = vmatmul.mubr.bf16.gmra.mxu0 %v2163
        %v2199 = vpop.f32.mrf.mxu0
        %v2200 = vadd.f32 0.0, %v2199
        %v2201 = vpop.f32.mrf.mxu0
        %v2202 = vpop.f32.mrf.mxu0
        %v2203 = vpop.f32.mrf.mxu0
        %2204 = vdwg.mxu0
        %v2209 = vunpack.c.l.b16 %v2137
        %v2210 = vunpack.c.h.b16 %v2137
        %v2211 = vunpack.c.l.b16 %v2138
        %v2212 = vunpack.c.h.b16 %v2138
        %v2213 = vunpack.c.l.b16 %v2139
        %v2214 = vunpack.c.h.b16 %v2139
        %v2215 = vunpack.c.l.b16 %v2140
        %v2216 = vunpack.c.h.b16 %v2140
        %v2217 = vlaneseq
        %v2218 = vshrl.u32 %v2217, 7
        %v2219 = vsub.s32 %v1180, %v2218
        %v2220 = vrot.slane %v2209, %v2219
        %v2221 = vlaneseq
        %v2222 = vshrl.u32 %v2221, 7
        %v2223 = vsub.s32 %v1185, %v2222
        %v2224 = vrot.slane %v2210, %v2223
        %v2225 = vsel %vm1190, %v2224, %v2220
        %v2226 = vlaneseq
        %v2227 = vshrl.u32 %v2226, 7
        %v2228 = vsub.s32 %v1180, %v2227
        %v2229 = vrot.slane %v2211, %v2228
        %v2230 = vlaneseq
        %v2231 = vshrl.u32 %v2230, 7
        %v2232 = vsub.s32 %v1185, %v2231
        %v2233 = vrot.slane %v2212, %v2232
        %v2234 = vsel %vm1190, %v2233, %v2229
        %v2235 = vlaneseq
        %v2236 = vshrl.u32 %v2235, 7
        %v2237 = vsub.s32 %v1180, %v2236
        %v2238 = vrot.slane %v2213, %v2237
        %v2239 = vlaneseq
        %v2240 = vshrl.u32 %v2239, 7
        %v2241 = vsub.s32 %v1185, %v2240
        %v2242 = vrot.slane %v2214, %v2241
        %v2243 = vsel %vm1190, %v2242, %v2238
        %v2244 = vlaneseq
        %v2245 = vshrl.u32 %v2244, 7
        %v2246 = vsub.s32 %v1180, %v2245
        %v2247 = vrot.slane %v2215, %v2246
        %v2248 = vlaneseq
        %v2249 = vshrl.u32 %v2248, 7
        %v2250 = vsub.s32 %v1185, %v2249
        %v2251 = vrot.slane %v2216, %v2250
        %v2252 = vsel %vm1190, %v2251, %v2247
        %v2253 = vsel %vm1219, %v2234, %v2225
        %v2254 = vsel %vm1221, %v2243, %v2253
        %v2255 = vsel %vm1223, %v2252, %v2254
        %v2256 = vpack.c.b16 %v2255, %v2255
        %v2259 = vunpack.c.l.b16 %v2144
        %v2260 = vunpack.c.l.b16 %v2145
        %v2261 = vpack.c.b16 %v2260, %v2259
        %vm2263 = vcmask 130048
        %v2265 = vsel %vm2263, %v2256, 0
        %2267 = vmatprep.subr.bf16.mxu0 0
        %2268 = vmatpush1.bf16.msra.mxu0 0
        %2269 = vmatprep.subr.bf16.mxu0 0
        %2270 = vmatpush1.bf16.msra.mxu0 0
        %2271 = vmatprep.subr.bf16.mxu0 0
        %2272 = vmatpush1.bf16.msra.mxu0 0
        %2273 = vmatprep.subr.bf16.mxu0 0
        %2274 = vmatpush1.bf16.msra.mxu0 0
        %2275 = vmatprep.subr.bf16.mxu0 0
        %2276 = vmatpush1.bf16.msra.mxu0 0
        %2277 = vmatprep.subr.bf16.mxu0 0
        %2278 = vmatpush1.bf16.msra.mxu0 0
        %2279 = vmatprep.subr.bf16.mxu0 0
        %2280 = vmatpush1.bf16.msra.mxu0 0
        %2281 = vmatprep.subr.bf16.mxu0 0
        %2282 = vmatpush1.bf16.msra.mxu0 %v2261
        %2283 = vmatprep.subr.bf16.mxu0 0
        %2284 = vmatpush2.bf16.msra.mxu0 0
        %2285 = vmatprep.subr.bf16.mxu0 0
        %2286 = vmatpush2.bf16.msra.mxu0 0
        %2287 = vmatprep.subr.bf16.mxu0 0
        %2288 = vmatpush2.bf16.msra.mxu0 0
        %2289 = vmatprep.subr.bf16.mxu0 0
        %2290 = vmatpush2.bf16.msra.mxu0 0
        %2291 = vmatprep.subr.bf16.mxu0 0
        %2292 = vmatpush2.bf16.msra.mxu0 0
        %2293 = vmatprep.subr.bf16.mxu0 0
        %2294 = vmatpush2.bf16.msra.mxu0 0
        %2295 = vmatprep.subr.bf16.mxu0 0
        %2296 = vmatpush2.bf16.msra.mxu0 0
        %2297 = vmatprep.subr.bf16.mxu0 0
        %2298 = vmatpush2.bf16.msra.mxu0 0
        %2299 = vmatprep.mubr.bf16.mxu0 0
        %2300 = vmatmul.mubr.bf16.gmra.mxu0 %v2265
        %v2301 = vpop.f32.mrf.mxu0
        %v2302 = vadd.f32 %v2200, %v2301
        %v2303 = vpop.f32.mrf.mxu0
        %v2304 = vpop.f32.mrf.mxu0
        %v2305 = vpop.f32.mrf.mxu0
        %2306 = vdwg.mxu0
        %v2307 = vpack.c.bf16 %v2116, %v2116
        %v2308 = vld [vmem:[#allocation32] sm:$0xf]
        %v2309 = vld [vmem:[#allocation32 + $0x4] sm:$0xf]
        %v2310 = vld [vmem:[#allocation32 + $0x8] sm:$0xf]
        %v2311 = vld [vmem:[#allocation32 + $0xc] sm:$0xf]
        %2313 = vrot.lane.b32.xlu0 %v2307, 32
        %v2314 = vpop.permute.xlu0 %2313
        %v2319 = vunpack.c.l.b16 %v2308
        %v2320 = vunpack.c.l.b16 %v2309
        %v2321 = vunpack.c.l.b16 %v2310
        %v2322 = vunpack.c.l.b16 %v2311
        %v2323 = vpack.c.b16 %v2320, %v2319
        %v2324 = vpack.c.b16 %v2322, %v2321
        %v2328 = vsel %vm924, %v2314, 0
        %2330 = vmatprep.subr.bf16.mxu0 0
        %2331 = vmatpush1.bf16.msra.mxu0 0
        %2332 = vmatprep.subr.bf16.mxu0 0
        %2333 = vmatpush1.bf16.msra.mxu0 0
        %2334 = vmatprep.subr.bf16.mxu0 0
        %2335 = vmatpush1.bf16.msra.mxu0 0
        %2336 = vmatprep.subr.bf16.mxu0 0
        %2337 = vmatpush1.bf16.msra.mxu0 0
        %2338 = vmatprep.subr.bf16.mxu0 0
        %2339 = vmatpush1.bf16.msra.mxu0 0
        %2340 = vmatprep.subr.bf16.mxu0 0
        %2341 = vmatpush1.bf16.msra.mxu0 0
        %2342 = vmatprep.subr.bf16.mxu0 0
        %2343 = vmatpush1.bf16.msra.mxu0 %v2324
        %2344 = vmatprep.subr.bf16.mxu0 0
        %2345 = vmatpush1.bf16.msra.mxu0 %v2323
        %2346 = vmatprep.subr.bf16.mxu0 0
        %2347 = vmatpush2.bf16.msra.mxu0 0
        %2348 = vmatprep.subr.bf16.mxu0 0
        %2349 = vmatpush2.bf16.msra.mxu0 0
        %2350 = vmatprep.subr.bf16.mxu0 0
        %2351 = vmatpush2.bf16.msra.mxu0 0
        %2352 = vmatprep.subr.bf16.mxu0 0
        %2353 = vmatpush2.bf16.msra.mxu0 0
        %2354 = vmatprep.subr.bf16.mxu0 0
        %2355 = vmatpush2.bf16.msra.mxu0 0
        %2356 = vmatprep.subr.bf16.mxu0 0
        %2357 = vmatpush2.bf16.msra.mxu0 0
        %2358 = vmatprep.subr.bf16.mxu0 0
        %2359 = vmatpush2.bf16.msra.mxu0 0
        %2360 = vmatprep.subr.bf16.mxu0 0
        %2361 = vmatpush2.bf16.msra.mxu0 0
        %2362 = vmatprep.mubr.bf16.mxu0 0
        %2363 = vmatmul.mubr.bf16.gmra.mxu0 %v2328
        %v2364 = vpop.f32.mrf.mxu0
        %v2365 = vadd.f32 0.0, %v2364
        %v2366 = vpop.f32.mrf.mxu0
        %v2367 = vpop.f32.mrf.mxu0
        %v2368 = vpop.f32.mrf.mxu0
        %2369 = vdwg.mxu0
        %v2370 = vadd.f32 %v2302, %v2365
        %v2371 = vadd.f32 %v2370, %v1033
        %v2372 = vld [vmem:[%s19] sm:$0x1]
        %v2374 = vlaneseq
        %v2375 = vshrl.u32 %v2374, 7
        %v2376 = vsub.s32 0, %v2375
        %v2377 = vrot.slane %v2372, %v2376
        %v2379 = vadd.f32 %v2371, %v2377
        %v2380 = vxor.u32 %v2379, 2147483648
        %v2381 = vmul.f32 %v2380, 1.442695
        %v2382 = vpow.pop %v2381
        %v2383 = vadd.f32 %v2382, 1.0
        %v2384 = vrcp.pop %v2383
        %v2385 = vmul.f32 1.0, %v2384
        %v2386 = vtanh.pop %v2379
        %v2387 = vld [vmem:[#allocation5] sm:$0xf]
        %2389 = vrot.lane.b32.xlu0 %v2387, 32
        %v2390 = vpop.permute.xlu0 %2389
        %v2392 = vmul.f32 %v2385, %v2390
        %2394 = vrot.lane.b32.xlu0 %v2386, 64
        %v2395 = vpop.permute.xlu0 %2394
        %v2397 = vmul.f32 %v2385, %v2395
        %2399 = vrot.lane.b32.xlu0 %v2397, 32
        %v2400 = vpop.permute.xlu0 %2399
        %v2402 = vadd.f32 %v2392, %v2400
        %v2403 = vtanh.pop %v2402
        %2405 = vrot.lane.b32.xlu0 %v2403, 64
        %v2406 = vpop.permute.xlu0 %2405
        %v2408 = vmul.f32 %v2385, %v2406
        %2410 = vrot.lane.b32.xlu0 %v2408, 32
        %v2411 = vpop.permute.xlu0 %2410
        %2413 = vst.msk [vmem:[#allocation4] sm:$0xf] %vm1569, %v2411
        %2415 = vrot.lane.b32.xlu0 %v2402, 96
        %v2416 = vpop.permute.xlu0 %2415
        %2418 = vst.msk [vmem:[#allocation5] sm:$0xf] %vm1569, %v2416
        %v2419 = vmul.f32 %v2116, 0.0
        %v2420 = vadd.f32 %v2419, %v2408
        %2422 = vrot.lane.b32.xlu0 %v2420, 32
        %v2423 = vpop.permute.xlu0 %2422
        %2425 = vst.msk [vmem:[%s864] sm:$0xf] %vm1569, %v2423
        %v2426 = vmul.f32 %v1372, %v1869
        %v2427 = vmul.f32 %v1373, %v1869
        %v2428 = vmul.f32 %v1374, %v1873
        %v2429 = vmul.f32 %v1375, %v1873
        %v2430 = vmul.f32 %v1376, %v1877
        %v2431 = vmul.f32 %v1377, %v1877
        %v2432 = vmul.f32 %v1378, %v1881
        %v2433 = vmul.f32 %v1379, %v1881
        %2442 = vset.pattern.permute.xlu0 0
        %2443 = vperm.xlu0 %2442, %v2426
        %v2444 = vpop.permute.xlu0 %2443
        %2445 = vset.pattern.permute.xlu0 0
        %2446 = vperm.xlu0 %2445, %v2427
        %v2447 = vpop.permute.xlu0 %2446
        %2448 = vset.pattern.permute.xlu0 0
        %2449 = vperm.xlu0 %2448, %v2428
        %v2450 = vpop.permute.xlu0 %2449
        %2451 = vset.pattern.permute.xlu0 0
        %2452 = vperm.xlu0 %2451, %v2429
        %v2453 = vpop.permute.xlu0 %2452
        %2454 = vset.pattern.permute.xlu0 0
        %2455 = vperm.xlu0 %2454, %v2430
        %v2456 = vpop.permute.xlu0 %2455
        %2457 = vset.pattern.permute.xlu0 0
        %2458 = vperm.xlu0 %2457, %v2431
        %v2459 = vpop.permute.xlu0 %2458
        %2460 = vset.pattern.permute.xlu0 0
        %2461 = vperm.xlu0 %2460, %v2432
        %v2462 = vpop.permute.xlu0 %2461
        %2463 = vset.pattern.permute.xlu0 0
        %2464 = vperm.xlu0 %2463, %v2433
        %v2465 = vpop.permute.xlu0 %2464
        %v2466 = vadd.s32 %v1180, 4294967264
        %v2467 = vlaneseq
        %v2468 = vshrl.u32 %v2467, 7
        %v2469 = vsub.s32 %v2466, %v2468
        %v2470 = vrot.slane %v2444, %v2469
        %v2471 = vadd.s32 %v1180, 4294967256
        %v2472 = vlaneseq
        %v2473 = vshrl.u32 %v2472, 7
        %v2474 = vsub.s32 %v2471, %v2473
        %v2475 = vrot.slane %v2447, %v2474
        %vm2476 = vcmask 392512
        %v2477 = vsel %vm2476, %v2475, %v2470
        %v2478 = vlaneseq
        %v2479 = vshrl.u32 %v2478, 7
        %v2480 = vsub.s32 %v2466, %v2479
        %v2481 = vrot.slane %v2450, %v2480
        %v2482 = vlaneseq
        %v2483 = vshrl.u32 %v2482, 7
        %v2484 = vsub.s32 %v2471, %v2483
        %v2485 = vrot.slane %v2453, %v2484
        %v2486 = vsel %vm2476, %v2485, %v2481
        %v2487 = vlaneseq
        %v2488 = vshrl.u32 %v2487, 7
        %v2489 = vsub.s32 %v2466, %v2488
        %v2490 = vrot.slane %v2456, %v2489
        %v2491 = vlaneseq
        %v2492 = vshrl.u32 %v2491, 7
        %v2493 = vsub.s32 %v2471, %v2492
        %v2494 = vrot.slane %v2459, %v2493
        %v2495 = vsel %vm2476, %v2494, %v2490
        %v2496 = vlaneseq
        %v2497 = vshrl.u32 %v2496, 7
        %v2498 = vsub.s32 %v2466, %v2497
        %v2499 = vrot.slane %v2462, %v2498
        %v2500 = vlaneseq
        %v2501 = vshrl.u32 %v2500, 7
        %v2502 = vsub.s32 %v2471, %v2501
        %v2503 = vrot.slane %v2465, %v2502
        %v2504 = vsel %vm2476, %v2503, %v2499
        %v2505 = vsel %vm1219, %v2486, %v2477
        %v2506 = vsel %vm1221, %v2495, %v2505
        %v2507 = vsel %vm1223, %v2504, %v2506
        %vm2509 = vcmask 388352
        %2510 = vst.msk [vmem:[%s864] sm:$0xf] %vm2509, %v2507
        %v2511 = vrot.slane %v1566, 1
        %v2512 = vrot.slane %v1566, 2
        %v2513 = vrot.slane %v1566, 3
        %v2517 = vmul.f32 %v1797, %v1566
        %v2518 = vmul.f32 %v1798, %v2511
        %v2519 = vmul.f32 %v1799, %v2512
        %v2520 = vmul.f32 %v1800, %v2513
        %v2525 = vrot.slane %v2518, 7
        %v2526 = vsel %vm1219, %v2525, %v2517
        %v2527 = vrot.slane %v2519, 6
        %v2528 = vsel %vm1221, %v2527, %v2526
        %v2529 = vrot.slane %v2520, 5
        %v2530 = vsel %vm1223, %v2529, %v2528
        %2531 = vrot.lane.b32.xlu0 %v2530, 48
        %v2532 = vpop.permute.xlu0 %2531
        %vm2534 = vcmask 650624
        %2535 = vst.msk [vmem:[%s864] sm:$0xf] %vm2534, %v2532
        %vm2536 = vcmask 1044096
        %2537 = vst.msk [vmem:[%s864] sm:$0xf] %vm2536, 0.0
        %s2538 = sand.u32 %s478, 1
        %s2539 = scalar_lea.sflag [#allocation8], %s2538
        %s2540 = sand.u32 %s478, 1
        %s2541 = smul.addr %s2540, 4
        %s2542 = scalar_lea.vmem [#allocation33], %s2541
        // Predicated region
        $region173: #{tpu_custom_call.1} parent=99 // pred_check
          %p2543 = pneg %p488
        $region174: #{tpu_custom_call.1} parent=99 // pred_check_branch
          %2545 = sbr.rel (%p2543) target = $region176
        $region175: #{tpu_custom_call.1} parent=99 // pred_region
          %s2547 = ssub.s32 64, 64
          %2548 = vsyncadd %s2539, %s2547
          %s2549 = smul.addr %s45, 64
          %s2550 = scalar_lea.hbm %s20, %s2549
          %s2552 = sshll.u32 %s2542, 4
          %s2553 = int_to_ptr.vmem [resolvable:$true] %s2552
          %2555 = dma.vmem_to_hbm [thread:$0]  %s2553, 64, %s2550, %s2539
        $region176: #{tpu_custom_call.1} parent=99 // pred_fallthru
          _
      $region100: #{tpu_custom_call.1} parent=5 // pred_fallthru
        _
      %p2556 = scmp.le.s32.totalorder 2, %s40
      // Predicated region
      $region177: #{tpu_custom_call.1} parent=5 // pred_check
        %p2557 = pneg %p2556
      $region178: #{tpu_custom_call.1} parent=5 // pred_check_branch
        %2559 = sbr.rel (%p2557) target = $region180
      $region179: #{tpu_custom_call.1} parent=5 // pred_region
        %s2560 = ssub.s32 %s40, 2
        // Predicated region
        $region181: #{tpu_custom_call.1} parent=179 // pred_check
          %p2561 = pneg %p494
        $region182: #{tpu_custom_call.1} parent=179 // pred_check_branch
          %2563 = sbr.rel (%p2561) target = $region184
        $region183: #{tpu_custom_call.1} parent=179 // pred_region
          %s2564 = sand.u32 %s479, 1
          %s2565 = scalar_lea.sflag [#allocation8], %s2564
          %s2566 = sand.u32 %s479, 1
          %s2567 = smul.addr %s2566, 4
          %s2568 = scalar_lea.vmem [#allocation33], %s2567
          %2569 = dma.done %s2565, 64
        $region184: #{tpu_custom_call.1} parent=179 // pred_fallthru
          _
      $region180: #{tpu_custom_call.1} parent=5 // pred_fallthru
        _
    $region6: #{tpu_custom_call.1} parent=1 // loop_footer
      %s44 = sadd.s32 1, %s40
    $region7: #{tpu_custom_call.1} parent=1 // loop_footer_branch
      %39 = sbr.rel target = $region3
    $region8: #{tpu_custom_call.1} parent=1 // loop_exit
      _
    %2570 = vsyncpa [#allocation7], 1
    %s2571 = scalar_lea.sflag [#allocation7], 1
    %2572 = vsyncpa %s2571, 1
    %2573 = vsyncpa [#allocation10], 1
    %2574 = vsyncpa [#allocation13], 1
    %2575 = vsyncpa [#allocation16], 1
    %2576 = vsyncpa [#allocation19], 1
    %2577 = vsyncpa [#allocation22], 1
    %2578 = vsyncpa [#allocation25], 1
    %2579 = vsyncpa [#allocation28], 1
    %2580 = vsyncpa [#allocation31], 1
    %2581 = vsyncpa [#allocation8], 1
    %s2582 = scalar_lea.sflag [#allocation8], 1
    %2583 = vsyncpa %s2582, 1

</llo_original>
